<compile_context>
chip_gen: v5e
topology: v5e:2x2
jax: 0.10.0
libtpu: 0.0.40
codegen_flags: <defaults>
</compile_context>

<pallas_src>
import functools

import jax
import jax.numpy as jnp
from jax.experimental import pallas as pl
from jax.experimental.pallas import tpu as pltpu

EPS = 1e-5
LANE = 128


# ---------------------------------------------------------------------------
# helpers
# ---------------------------------------------------------------------------
def _round_up(x, m):
    return (x + m - 1) // m * m


def _pick_flat_tile(total, cap=1024):
    """Largest multiple-of-8 divisor of `total`, capped (sublane-aligned)."""
    t = min(cap, total)
    t -= t % 8
    while t >= 8:
        if total % t == 0:
            return t
        t -= 8
    raise ValueError(f"no multiple-of-8 tile divides {total}")


def _pick_lane_tile(total, cap=1024):
    """Largest multiple-of-128 divisor (lane-dense stores); falls back to the
    full extent, which is always a legal block, instead of mis-tiling."""
    t = min(cap, total)
    t -= t % 128
    while t >= 128:
        if total % t == 0:
            return t
        t -= 128
    return total


def _pick_rows(h, w, cpad, budget_elems=128 * 1024):
    """conv2 output rows per grid step: largest divisor R of h whose
    (R, w, cpad) f32 tile stays within ~0.5 MiB, so spills stay bounded while
    the MXU gets an M of R*w (>= 256 for realistic shapes)."""
    best = 1
    for r in range(1, h + 1):
        if h % r == 0 and r * w * cpad <= budget_elems:
            best = r
    return best


def _cparams(semantics):
    # 32 MiB: above the v5e 16 MiB scoped default, safely under v7x's 64 MiB
    # physical VMEM; every per-step working set here is well below it.
    return pltpu.CompilerParams(
        dimension_semantics=semantics,
        vmem_limit_bytes=32 * 1024 * 1024,
    )


def _bn_scale_shift(stats, count, gamma, beta):
    # stats: (num_tiles, 2, Cp) partial (sum, sum_sq) over the N*H*W axis.
    # Single-pass E[x^2]-mean^2 in f32 (adequate at these magnitudes; the
    # two-pass form is more robust if activations grow large).  Padded
    # channels stay benign only because gamma/beta are zero-padded there
    # (scale == shift == 0 on padding).
    total = stats.sum(axis=0)
    mean = total[0] / count
    var = jnp.maximum(total[1] / count - mean * mean, 0.0)
    rstd = jax.lax.rsqrt(var + EPS)
    scale = gamma * rstd
    shift = beta - mean * scale
    return scale.reshape(1, -1), shift.reshape(1, -1)


def _stacked_stats(y):
    # One (2, C) store instead of two 1-sublane partial stores.
    return jnp.concatenate(
        [jnp.sum(y, axis=0, keepdims=True),
         jnp.sum(y * y, axis=0, keepdims=True)], axis=0)


# ---------------------------------------------------------------------------
# Pallas kernels
# ---------------------------------------------------------------------------
def _conv1x1_stats_kernel(x_ref, w_ref, y_ref, s_ref):
    """1x1 conv (channel-last, MXU-native) + partial BN statistics."""
    y = jnp.dot(x_ref[...], w_ref[...], preferred_element_type=jnp.float32)
    y_ref[...] = y
    s_ref[0] = _stacked_stats(y)


def _bn_relu_conv1x1_stats_kernel(x_ref, sc_ref, sh_ref, w_ref, y_ref, s_ref):
    """BN(prev)+ReLU fused on the input tile, then 1x1 conv + partial stats."""
    x = jnp.maximum(x_ref[...] * sc_ref[...] + sh_ref[...], 0.0)
    y = jnp.dot(x, w_ref[...], preferred_element_type=jnp.float32)
    y_ref[...] = y
    s_ref[0] = _stacked_stats(y)


def _conv3x3_stats_kernel(top_ref, mid_ref, bot_ref, sc_ref, sh_ref, w_ref,
                          y_ref, s_ref, *, rows, width, h_blocks):
    """R output rows of a 3x3 / pad=1 / stride=1 conv.

    BN1+ReLU is applied to the loaded rows in-kernel.  top_ref/bot_ref are the
    single halo rows above/below the R-row block (clamped index maps), zeroed
    at the image top/bottom.  The 9 taps are unrolled as (R*w, C) x (C, C)
    MXU matmuls; the kw=0/2 column shift is applied to the matmul results
    (the shift commutes with the channel contraction) with a mask on the
    image's border column.
    """
    f32 = jnp.float32
    j = pl.program_id(1)
    sc = sc_ref[...]
    sh = sh_ref[...]
    cpad = sc.shape[-1]

    def bn_relu(v):
        return jnp.maximum(v * sc + sh, 0.0)

    # Halo rows are literal zeros in conv2's (post BN1+ReLU) input space.
    top = bn_relu(top_ref[...]) * (j > 0).astype(f32)
    bot = bn_relu(bot_ref[...]) * (j < h_blocks - 1).astype(f32)
    mid = bn_relu(mid_ref[...])

    slab = jnp.concatenate([top, mid, bot], axis=0)        # (R+2, w, C)
    slab = slab.reshape((rows + 2) * width, cpad)          # width % 8 == 0

    rw = rows * width
    col = jax.lax.broadcasted_iota(jnp.int32, (rw, 1), 0) % width

    def taps(kw):
        q = jnp.zeros((rw, cpad), f32)
        for kh in range(3):
            a = slab[kh * width: kh * width + rw, :]       # aligned static slice
            q += jnp.dot(a, w_ref[kh, kw], preferred_element_type=f32)
        return q

    acc = taps(1)                                          # kw = 1: no shift
    q0 = taps(0)                                           # out[x] += q0[x-1]
    q0 = jnp.concatenate([jnp.zeros((1, cpad), f32), q0[:-1, :]], axis=0)
    acc += jnp.where(col != 0, q0, 0.0)
    q2 = taps(2)                                           # out[x] += q2[x+1]
    q2 = jnp.concatenate([q2[1:, :], jnp.zeros((1, cpad), f32)], axis=0)
    acc += jnp.where(col != width - 1, q2, 0.0)

    y_ref[...] = acc.reshape(rows, width, cpad)
    s_ref[0] = _stacked_stats(acc)


def _bn_add_relu_nchw_kernel(y_ref, sc_ref, sh_ref, r_ref, o_ref, *, c_out):
    """BN3 + identity residual + ReLU; transposes the tile to emit NCHW."""
    z = y_ref[...] * sc_ref[...] + sh_ref[...]             # (tm, Cp)
    z = z[:, :c_out] + r_ref[...]                          # (tm, C)
    o_ref[0] = jnp.maximum(jnp.transpose(z), 0.0)          # (C, tm) -> NCHW


# ---------------------------------------------------------------------------
# BottleNeck forward (downsample=None, stride=1 => identity residual)
# ---------------------------------------------------------------------------
def bottleneck_forward(x_nchw, params, stride=1):
    assert stride == 1, "identity residual requires stride == 1"
    # TODO(synk): stride>1 / downsample branch not implemented (the module is
    #             constructed with downsample=None).
    n, cin, h, w = x_nchw.shape
    hw = h * w
    m = n * hw
    c1 = params["w1"].shape[1]
    c3 = params["w3"].shape[1]
    assert cin == c3, "identity residual requires in_channels == 4*out_channels"
    assert w % 8 == 0 and m % 8 == 0

    c1p = _round_up(c1, LANE)
    c3p = _round_up(c3, LANE)
    f32 = jnp.float32

    # One up-front relayout to channel-last so every matmul contracts on the
    # last dim of both operands (MXU-native, no per-tile transposes); the
    # residual add reuses this channel-last copy and the last kernel
    # transposes back to NCHW in-kernel.
    x_cl = (x_nchw.astype(f32).reshape(n, cin, hw)
            .transpose(0, 2, 1).reshape(m, cin))

    # Lane-dense (zero-padded) weights / affine params, all f32.
    # gamma/beta MUST be zero-padded so padded channels get scale=shift=0.
    w1p = jnp.pad(params["w1"].astype(f32), ((0, 0), (0, c1p - c1)))
    w2p = jnp.pad(params["w2"].astype(f32),
                  ((0, 0), (0, 0), (0, c1p - c1), (0, c1p - c1)))
    w3p = jnp.pad(params["w3"].astype(f32), ((0, c1p - c1), (0, c3p - c3)))
    g1 = jnp.pad(params["g1"].astype(f32), (0, c1p - c1))
    b1 = jnp.pad(params["b1"].astype(f32), (0, c1p - c1))
    g2 = jnp.pad(params["g2"].astype(f32), (0, c1p - c1))
    b2 = jnp.pad(params["b2"].astype(f32), (0, c1p - c1))
    g3 = jnp.pad(params["g3"].astype(f32), (0, c3p - c3))
    b3 = jnp.pad(params["b3"].astype(f32), (0, c3p - c3))

    tm_m = _pick_flat_tile(m)        # flat-M tile for the 1x1 conv kernels
    g_m = m // tm_m
    tm_sp = _pick_lane_tile(hw)      # spatial tile (lane dim of NCHW output)
    g_sp = hw // tm_sp
    rows = _pick_rows(h, w, c1p)     # conv2 output rows per grid step
    hb = h // rows

    # ---------------- conv1 (1x1): raw output + BN1 partial stats -----------
    y1, st1 = pl.pallas_call(
        _conv1x1_stats_kernel,
        grid=(g_m,),
        in_specs=[
            pl.BlockSpec((tm_m, cin), lambda i: (i, 0)),
            pl.BlockSpec((cin, c1p), lambda i: (0, 0)),
        ],
        out_specs=(
            pl.BlockSpec((tm_m, c1p), lambda i: (i, 0)),
            pl.BlockSpec((1, 2, c1p), lambda i: (i, 0, 0)),
        ),
        out_shape=(
            jax.ShapeDtypeStruct((m, c1p), f32),
            jax.ShapeDtypeStruct((g_m, 2, c1p), f32),
        ),
        compiler_params=_cparams(("parallel",)),
    )(x_cl, w1p)
    sc1, sh1 = _bn_scale_shift(st1, m, g1, b1)

    # ---------------- conv2 (3x3, pad=1) with fused BN1+ReLU -----------------
    y1r = y1.reshape(n * h, w, c1p)              # free (contiguous) reshape
    conv2_kernel = functools.partial(
        _conv3x3_stats_kernel, rows=rows, width=w, h_blocks=hb)
    # TODO(synk): the constant (3,3,c1p,c1p) weight block is double-buffered by
    #             default; pl.Buffered(1) on that spec would save one copy.
    y2, st2 = pl.pallas_call(
        conv2_kernel,
        grid=(n, hb),
        in_specs=[
            # top halo row (clamped inside the image; zeroed in-kernel at j==0)
            pl.BlockSpec(
                (1, w, c1p),
                lambda i, j: (i * h + jnp.maximum(j * rows - 1, 0), 0, 0)),
            # main R-row block
            pl.BlockSpec((rows, w, c1p), lambda i, j: (i * hb + j, 0, 0)),
            # bottom halo row (clamped; zeroed in-kernel at j==hb-1)
            pl.BlockSpec(
                (1, w, c1p),
                lambda i, j: (i * h + jnp.minimum((j + 1) * rows, h - 1), 0, 0)),
            pl.BlockSpec((1, c1p), lambda i, j: (0, 0)),
            pl.BlockSpec((1, c1p), lambda i, j: (0, 0)),
            pl.BlockSpec((3, 3, c1p, c1p), lambda i, j: (0, 0, 0, 0)),
        ],
        out_specs=(
            pl.BlockSpec((rows, w, c1p), lambda i, j: (i * hb + j, 0, 0)),
            pl.BlockSpec((1, 2, c1p), lambda i, j: (i * hb + j, 0, 0)),
        ),
        out_shape=(
            jax.ShapeDtypeStruct((n * h, w, c1p), f32),
            jax.ShapeDtypeStruct((n * hb, 2, c1p), f32),
        ),
        compiler_params=_cparams(("parallel", "parallel")),
    )(y1r, y1r, y1r, sc1, sh1, w2p)
    sc2, sh2 = _bn_scale_shift(st2, m, g2, b2)

    # ---------------- conv3 (1x1) with fused BN2+ReLU ------------------------
    y2f = y2.reshape(m, c1p)
    y3, st3 = pl.pallas_call(
        _bn_relu_conv1x1_stats_kernel,
        grid=(g_m,),
        in_specs=[
            pl.BlockSpec((tm_m, c1p), lambda i: (i, 0)),
            pl.BlockSpec((1, c1p), lambda i: (0, 0)),
            pl.BlockSpec((1, c1p), lambda i: (0, 0)),
            pl.BlockSpec((c1p, c3p), lambda i: (0, 0)),
        ],
        out_specs=(
            pl.BlockSpec((tm_m, c3p), lambda i: (i, 0)),
            pl.BlockSpec((1, 2, c3p), lambda i: (i, 0, 0)),
        ),
        out_shape=(
            jax.ShapeDtypeStruct((m, c3p), f32),
            jax.ShapeDtypeStruct((g_m, 2, c3p), f32),
        ),
        compiler_params=_cparams(("parallel",)),
    )(y2f, sc2, sh2, w3p)
    sc3, sh3 = _bn_scale_shift(st3, m, g3, b3)

    # ---------------- BN3 + residual + ReLU, NCHW output ---------------------
    final_kernel = functools.partial(_bn_add_relu_nchw_kernel, c_out=c3)
    out3 = pl.pallas_call(
        final_kernel,
        grid=(n, g_sp),
        in_specs=[
            pl.BlockSpec((tm_sp, c3p), lambda i, j: (i * g_sp + j, 0)),
            pl.BlockSpec((1, c3p), lambda i, j: (0, 0)),
            pl.BlockSpec((1, c3p), lambda i, j: (0, 0)),
            pl.BlockSpec((tm_sp, cin), lambda i, j: (i * g_sp + j, 0)),
        ],
        out_specs=pl.BlockSpec((1, c3, tm_sp), lambda i, j: (i, 0, j)),
        out_shape=jax.ShapeDtypeStruct((n, c3, hw), f32),
        compiler_params=_cparams(("parallel", "parallel")),
    )(y3, sc3, sh3, x_cl)

    return out3.reshape(n, c3, h, w)


# ---------------------------------------------------------------------------
# Pure-JAX NCHW reference (f32 end to end, training-mode BatchNorm)
# ---------------------------------------------------------------------------
def _reference(x_nchw, params):
    def bn(y, g, b):
        mean = y.mean(axis=(0, 2, 3), keepdims=True)
        var = ((y - mean) ** 2).mean(axis=(0, 2, 3), keepdims=True)
        yh = (y - mean) * jax.lax.rsqrt(var + EPS)
        return yh * g.reshape(1, -1, 1, 1) + b.reshape(1, -1, 1, 1)

    x = x_nchw.astype(jnp.float32)
    y = jnp.einsum("nchw,cd->ndhw", x, params["w1"])
    y = jnp.maximum(bn(y, params["g1"], params["b1"]), 0.0)
    y = jax.lax.conv_general_dilated(
        y, params["w2"], (1, 1), ((1, 1), (1, 1)),
        dimension_numbers=("NCHW", "HWIO", "NCHW"))
    y = jnp.maximum(bn(y, params["g2"], params["b2"]), 0.0)
    y = jnp.einsum("nchw,cd->ndhw", y, params["w3"])
    y = bn(y, params["g3"], params["b3"]) + x
    return jnp.maximum(y, 0.0)


# ---------------------------------------------------------------------------
def make_params(key, in_channels, out_channels):
    c1 = out_channels
    c3 = out_channels * 4  # expansion = 4
    ks = jax.random.split(key, 9)
    return {
        "w1": 0.1 * jax.random.normal(ks[0], (in_channels, c1), jnp.float32),
        "w2": 0.1 * jax.random.normal(ks[1], (3, 3, c1, c1), jnp.float32),
        "w3": 0.1 * jax.random.normal(ks[2], (c1, c3), jnp.float32),
        "g1": 1.0 + 0.1 * jax.random.normal(ks[3], (c1,), jnp.float32),
        "b1": 0.1 * jax.random.normal(ks[4], (c1,), jnp.float32),
        "g2": 1.0 + 0.1 * jax.random.normal(ks[5], (c1,), jnp.float32),
        "b2": 0.1 * jax.random.normal(ks[6], (c1,), jnp.float32),
        "g3": 1.0 + 0.1 * jax.random.normal(ks[7], (c3,), jnp.float32),
        "b3": 0.1 * jax.random.normal(ks[8], (c3,), jnp.float32),
    }


if __name__ == "__main__":
    key = jax.random.PRNGKey(0)
    k_x, k_p = jax.random.split(key)

    # expansion=4, downsample=None => in_channels == 4*out_channels, stride=1.
    N, OUT_CH, H, W = 2, 4, 16, 16
    IN_CH = OUT_CH * 4  # 16

    x = jax.random.normal(k_x, (N, IN_CH, H, W), jnp.float32)
    params = make_params(k_p, IN_CH, OUT_CH)

    out = jax.jit(bottleneck_forward)(x, params)
    out = jax.block_until_ready(out)
    assert out.shape == (N, IN_CH, H, W), out.shape

    ref = _reference(x, params)
    max_err = float(jnp.max(jnp.abs(out - ref)))
    assert jnp.allclose(out, ref, atol=2e-3, rtol=2e-3), max_err

    print("KERNEL_OK")
</pallas_src>

<mosaic_0001>
module attributes {stable_mosaic.version = 11 : i64} {
  func.func @_conv1x1_stats_kernel(%arg0: i32, %arg1: memref<512x16xf32, #tpu.memory_space<vmem>>, %arg2: memref<16x128xf32, #tpu.memory_space<vmem>>, %arg3: memref<512x128xf32, #tpu.memory_space<vmem>>, %arg4: memref<1x2x128xf32, #tpu.memory_space<vmem>>) attributes {dimension_semantics = [#tpu.dimension_semantics<parallel>], iteration_bounds = array<i64: 1>, scalar_prefetch = 0 : i64, scratch_operands = 0 : i64, tpu.core_type = #tpu.core_type<tc>, window_params = [{transform_indices = @transform_0, window_bounds = array<i64: 512, 16>}, {pipeline_mode = #tpu.pipeline_mode<synchronous>, transform_indices = @transform_1, window_bounds = array<i64: 16, 128>}, {transform_indices = @transform_2, window_bounds = array<i64: 512, 128>}, {transform_indices = @transform_3, window_bounds = array<i64: 1, 2, 128>}]} {
    %c0 = arith.constant 0 : index
    %c0_0 = arith.constant 0 : index
    %0 = vector.load %arg1[%c0, %c0_0] : memref<512x16xf32, #tpu.memory_space<vmem>>, vector<512x16xf32>
    %c0_1 = arith.constant 0 : index
    %c0_2 = arith.constant 0 : index
    %1 = vector.load %arg2[%c0_1, %c0_2] : memref<16x128xf32, #tpu.memory_space<vmem>>, vector<16x128xf32>
    %cst = arith.constant dense<0.000000e+00> : vector<512x128xf32>
    %2 = tpu.matmul %0, %1, %cst {dimension_numbers = #tpu.dot_dimension_numbers<[1], [0], [0], [1], [0, 0, 1, 1], [], []>} : vector<512x16xf32>, vector<16x128xf32>, vector<512x128xf32> -> vector<512x128xf32>
    %c0_3 = arith.constant 0 : index
    %c0_4 = arith.constant 0 : index
    %3 = vector.load %arg3[%c0_3, %c0_4] : memref<512x128xf32, #tpu.memory_space<vmem>>, vector<512x128xf32>
    tpu.vector_store %arg3[%c0_3, %c0_4], %2 {strides = array<i32>} : memref<512x128xf32, #tpu.memory_space<vmem>>, vector<512x128xf32>,
    %cst_5 = arith.constant dense<0.000000e+00> : vector<128xf32>
    %4 = vector.multi_reduction <add>, %2, %cst_5 [0] : vector<512x128xf32> to vector<128xf32>
    %5 = vector.shape_cast %4 : vector<128xf32> to vector<1x128xf32>
    %6 = arith.mulf %2, %2 : vector<512x128xf32>
    %cst_6 = arith.constant dense<0.000000e+00> : vector<128xf32>
    %7 = vector.multi_reduction <add>, %6, %cst_6 [0] : vector<512x128xf32> to vector<128xf32>
    %8 = vector.shape_cast %7 : vector<128xf32> to vector<1x128xf32>
    %9 = tpu.concatenate %5, %8 in 0 : vector<1x128xf32>, vector<1x128xf32> -> vector<2x128xf32>
    %c0_7 = arith.constant 0 : index
    %c0_8 = arith.constant 0 : index
    %c0_9 = arith.constant 0 : index
    %10 = vector.load %arg4[%c0_7, %c0_8, %c0_9] : memref<1x2x128xf32, #tpu.memory_space<vmem>>, vector<1x2x128xf32>
    %11 = vector.shape_cast %10 : vector<1x2x128xf32> to vector<2x128xf32>
    %12 = vector.shape_cast %9 : vector<2x128xf32> to vector<1x2x128xf32>
    tpu.vector_store %arg4[%c0_7, %c0_8, %c0_9], %12 {strides = array<i32>} : memref<1x2x128xf32, #tpu.memory_space<vmem>>, vector<1x2x128xf32>,
    return
  }
  func.func @transform_0(%arg0: i32) -> (i32, i32) {
    %c0_i32 = arith.constant 0 : i32
    %c0_i32_0 = arith.constant 0 : i32
    return %arg0, %c0_i32 : i32, i32
  }
  func.func @transform_1(%arg0: i32) -> (i32, i32) {
    %c0_i32 = arith.constant 0 : i32
    %c0_i32_0 = arith.constant 0 : i32
    %c0_i32_1 = arith.constant 0 : i32
    return %c0_i32, %c0_i32_0 : i32, i32
  }
  func.func @transform_2(%arg0: i32) -> (i32, i32) {
    %c0_i32 = arith.constant 0 : i32
    %c0_i32_0 = arith.constant 0 : i32
    return %arg0, %c0_i32 : i32, i32
  }
  func.func @transform_3(%arg0: i32) -> (i32, i32, i32) {
    %c0_i32 = arith.constant 0 : i32
    %c0_i32_0 = arith.constant 0 : i32
    %c0_i32_1 = arith.constant 0 : i32
    return %arg0, %c0_i32, %c0_i32_0 : i32, i32, i32
  }
}

module attributes {stable_mosaic.version = 11 : i64} {
  func.func @_conv3x3_stats_kernel(%arg0: i32, %arg1: i32, %arg2: memref<1x16x128xf32, #tpu.memory_space<vmem>>, %arg3: memref<16x16x128xf32, #tpu.memory_space<vmem>>, %arg4: memref<1x16x128xf32, #tpu.memory_space<vmem>>, %arg5: memref<1x128xf32, #tpu.memory_space<vmem>>, %arg6: memref<1x128xf32, #tpu.memory_space<vmem>>, %arg7: memref<3x3x128x128xf32, #tpu.memory_space<vmem>>, %arg8: memref<16x16x128xf32, #tpu.memory_space<vmem>>, %arg9: memref<1x2x128xf32, #tpu.memory_space<vmem>>) attributes {dimension_semantics = [#tpu.dimension_semantics<parallel>, #tpu.dimension_semantics<parallel>], iteration_bounds = array<i64: 2, 1>, scalar_prefetch = 0 : i64, scratch_operands = 0 : i64, tpu.core_type = #tpu.core_type<tc>, window_params = [{transform_indices = @transform_0, window_bounds = array<i64: 1, 16, 128>}, {transform_indices = @transform_1, window_bounds = array<i64: 16, 16, 128>}, {transform_indices = @transform_2, window_bounds = array<i64: 1, 16, 128>}, {pipeline_mode = #tpu.pipeline_mode<synchronous>, transform_indices = @transform_3, window_bounds = array<i64: 1, 128>}, {pipeline_mode = #tpu.pipeline_mode<synchronous>, transform_indices = @transform_4, window_bounds = array<i64: 1, 128>}, {pipeline_mode = #tpu.pipeline_mode<synchronous>, transform_indices = @transform_5, window_bounds = array<i64: 3, 3, 128, 128>}, {transform_indices = @transform_6, window_bounds = array<i64: 16, 16, 128>}, {transform_indices = @transform_7, window_bounds = array<i64: 1, 2, 128>}]} {
    %c0 = arith.constant 0 : index
    %c0_0 = arith.constant 0 : index
    %0 = vector.load %arg5[%c0, %c0_0] : memref<1x128xf32, #tpu.memory_space<vmem>>, vector<1x128xf32>
    %c0_1 = arith.constant 0 : index
    %c0_2 = arith.constant 0 : index
    %1 = vector.load %arg6[%c0_1, %c0_2] : memref<1x128xf32, #tpu.memory_space<vmem>>, vector<1x128xf32>
    %c0_3 = arith.constant 0 : index
    %c0_4 = arith.constant 0 : index
    %c0_5 = arith.constant 0 : index
    %2 = vector.load %arg2[%c0_3, %c0_4, %c0_5] : memref<1x16x128xf32, #tpu.memory_space<vmem>>, vector<1x16x128xf32>
    %3 = vector.shape_cast %0 : vector<1x128xf32> to vector<1x1x128xf32>
    %4 = vector.broadcast %3 : vector<1x1x128xf32> to vector<1x16x128xf32>
    %5 = arith.mulf %2, %4 : vector<1x16x128xf32>
    %6 = vector.shape_cast %1 : vector<1x128xf32> to vector<1x1x128xf32>
    %7 = vector.broadcast %6 : vector<1x1x128xf32> to vector<1x16x128xf32>
    %8 = arith.addf %5, %7 : vector<1x16x128xf32>
    %cst = arith.constant 0.000000e+00 : f32
    %9 = vector.broadcast %cst : f32 to vector<1x16x128xf32>
    %10 = arith.maximumf %8, %9 : vector<1x16x128xf32>
    %c0_i32 = arith.constant 0 : i32
    %11 = arith.cmpi sgt, %arg1, %c0_i32 : i32
    %12 = arith.extui %11 : i1 to i32
    %13 = arith.sitofp %12 : i32 to f32
    %14 = vector.broadcast %13 : f32 to vector<1x16x128xf32>
    %15 = arith.mulf %10, %14 : vector<1x16x128xf32>
    %c0_6 = arith.constant 0 : index
    %c0_7 = arith.constant 0 : index
    %c0_8 = arith.constant 0 : index
    %16 = vector.load %arg4[%c0_6, %c0_7, %c0_8] : memref<1x16x128xf32, #tpu.memory_space<vmem>>, vector<1x16x128xf32>
    %17 = vector.shape_cast %0 : vector<1x128xf32> to vector<1x1x128xf32>
    %18 = vector.broadcast %17 : vector<1x1x128xf32> to vector<1x16x128xf32>
    %19 = arith.mulf %16, %18 : vector<1x16x128xf32>
    %20 = vector.shape_cast %1 : vector<1x128xf32> to vector<1x1x128xf32>
    %21 = vector.broadcast %20 : vector<1x1x128xf32> to vector<1x16x128xf32>
    %22 = arith.addf %19, %21 : vector<1x16x128xf32>
    %cst_9 = arith.constant 0.000000e+00 : f32
    %23 = vector.broadcast %cst_9 : f32 to vector<1x16x128xf32>
    %24 = arith.maximumf %22, %23 : vector<1x16x128xf32>
    %c0_i32_10 = arith.constant 0 : i32
    %25 = arith.cmpi slt, %arg1, %c0_i32_10 : i32
    %26 = arith.extui %25 : i1 to i32
    %27 = arith.sitofp %26 : i32 to f32
    %28 = vector.broadcast %27 : f32 to vector<1x16x128xf32>
    %29 = arith.mulf %24, %28 : vector<1x16x128xf32>
    %c0_11 = arith.constant 0 : index
    %c0_12 = arith.constant 0 : index
    %c0_13 = arith.constant 0 : index
    %30 = vector.load %arg3[%c0_11, %c0_12, %c0_13] : memref<16x16x128xf32, #tpu.memory_space<vmem>>, vector<16x16x128xf32>
    %31 = vector.shape_cast %0 : vector<1x128xf32> to vector<1x1x128xf32>
    %32 = vector.broadcast %31 : vector<1x1x128xf32> to vector<16x16x128xf32>
    %33 = arith.mulf %30, %32 : vector<16x16x128xf32>
    %34 = vector.shape_cast %1 : vector<1x128xf32> to vector<1x1x128xf32>
    %35 = vector.broadcast %34 : vector<1x1x128xf32> to vector<16x16x128xf32>
    %36 = arith.addf %33, %35 : vector<16x16x128xf32>
    %cst_14 = arith.constant 0.000000e+00 : f32
    %37 = vector.broadcast %cst_14 : f32 to vector<16x16x128xf32>
    %38 = arith.maximumf %36, %37 : vector<16x16x128xf32>
    %39 = tpu.concatenate %15, %38, %29 in 0 : vector<1x16x128xf32>, vector<16x16x128xf32>, vector<1x16x128xf32> -> vector<18x16x128xf32>
    %40 = vector.shape_cast %39 : vector<18x16x128xf32> to vector<288x128xf32>
    %41 = tpu.iota {dimensions = array<i32: 0>} : vector<256x1xi32>
    %c16_i32 = arith.constant 16 : i32
    %c0_i32_15 = arith.constant 0 : i32
    %42 = arith.cmpi eq, %c16_i32, %c0_i32_15 : i32
    %c1_i32 = arith.constant 1 : i32
    %43 = arith.select %42, %c1_i32, %c16_i32 : i32
    %44 = vector.broadcast %43 : i32 to vector<256x1xi32>
    %45 = arith.remsi %41, %44 : vector<256x1xi32>
    %c0_i32_16 = arith.constant 0 : i32
    %46 = vector.broadcast %c0_i32_16 : i32 to vector<256x1xi32>
    %47 = arith.cmpi ne, %45, %46 : vector<256x1xi32>
    %c0_i32_17 = arith.constant 0 : i32
    %48 = vector.broadcast %c0_i32_17 : i32 to vector<256x1xi32>
    %49 = arith.cmpi slt, %45, %48 : vector<256x1xi32>
    %c0_i32_18 = arith.constant 0 : i32
    %50 = arith.cmpi slt, %43, %c0_i32_18 : i32
    %51 = vector.broadcast %50 : i1 to vector<256x1xi1>
    %52 = vector.broadcast %51 : vector<256x1xi1> to vector<256x1xi1>
    %53 = arith.xori %49, %52 : vector<256x1xi1>
    %54 = arith.andi %53, %47 : vector<256x1xi1>
    %55 = vector.broadcast %43 : i32 to vector<256x1xi32>
    %56 = arith.addi %45, %55 : vector<256x1xi32>
    %57 = arith.select %54, %56, %45 : vector<256x1xi1>, vector<256x1xi32>
    %cst_19 = arith.constant 0.000000e+00 : f32
    %58 = vector.broadcast %cst_19 : f32 to vector<256x128xf32>
    %59 = vector.extract_strided_slice %40 {offsets = [0, 0], sizes = [256, 128], strides = [1, 1]} : vector<288x128xf32> to vector<256x128xf32>
    %c0_20 = arith.constant 0 : index
    %c1 = arith.constant 1 : index
    %c0_21 = arith.constant 0 : index
    %c0_22 = arith.constant 0 : index
    %60 = vector.load %arg7[%c0_20, %c1, %c0_21, %c0_22] : memref<3x3x128x128xf32, #tpu.memory_space<vmem>>, vector<1x1x128x128xf32>
    %61 = vector.shape_cast %60 : vector<1x1x128x128xf32> to vector<128x128xf32>
    %cst_23 = arith.constant dense<0.000000e+00> : vector<256x128xf32>
    %62 = tpu.matmul %59, %61, %cst_23 {dimension_numbers = #tpu.dot_dimension_numbers<[1], [0], [0], [1], [0, 0, 1, 1], [], []>} : vector<256x128xf32>, vector<128x128xf32>, vector<256x128xf32> -> vector<256x128xf32>
    %63 = arith.addf %58, %62 : vector<256x128xf32>
    %64 = vector.extract_strided_slice %40 {offsets = [16, 0], sizes = [256, 128], strides = [1, 1]} : vector<288x128xf32> to vector<256x128xf32>
    %c1_24 = arith.constant 1 : index
    %c1_25 = arith.constant 1 : index
    %c0_26 = arith.constant 0 : index
    %c0_27 = arith.constant 0 : index
    %65 = vector.load %arg7[%c1_24, %c1_25, %c0_26, %c0_27] : memref<3x3x128x128xf32, #tpu.memory_space<vmem>>, vector<1x1x128x128xf32>
    %66 = vector.shape_cast %65 : vector<1x1x128x128xf32> to vector<128x128xf32>
    %cst_28 = arith.constant dense<0.000000e+00> : vector<256x128xf32>
    %67 = tpu.matmul %64, %66, %cst_28 {dimension_numbers = #tpu.dot_dimension_numbers<[1], [0], [0], [1], [0, 0, 1, 1], [], []>} : vector<256x128xf32>, vector<128x128xf32>, vector<256x128xf32> -> vector<256x128xf32>
    %68 = arith.addf %63, %67 : vector<256x128xf32>
    %69 = vector.extract_strided_slice %40 {offsets = [32, 0], sizes = [256, 128], strides = [1, 1]} : vector<288x128xf32> to vector<256x128xf32>
    %c2 = arith.constant 2 : index
    %c1_29 = arith.constant 1 : index
    %c0_30 = arith.constant 0 : index
    %c0_31 = arith.constant 0 : index
    %70 = vector.load %arg7[%c2, %c1_29, %c0_30, %c0_31] : memref<3x3x128x128xf32, #tpu.memory_space<vmem>>, vector<1x1x128x128xf32>
    %71 = vector.shape_cast %70 : vector<1x1x128x128xf32> to vector<128x128xf32>
    %cst_32 = arith.constant dense<0.000000e+00> : vector<256x128xf32>
    %72 = tpu.matmul %69, %71, %cst_32 {dimension_numbers = #tpu.dot_dimension_numbers<[1], [0], [0], [1], [0, 0, 1, 1], [], []>} : vector<256x128xf32>, vector<128x128xf32>, vector<256x128xf32> -> vector<256x128xf32>
    %73 = arith.addf %68, %72 : vector<256x128xf32>
    %cst_33 = arith.constant 0.000000e+00 : f32
    %74 = vector.broadcast %cst_33 : f32 to vector<256x128xf32>
    %75 = vector.extract_strided_slice %40 {offsets = [0, 0], sizes = [256, 128], strides = [1, 1]} : vector<288x128xf32> to vector<256x128xf32>
    %c0_34 = arith.constant 0 : index
    %c0_35 = arith.constant 0 : index
    %c0_36 = arith.constant 0 : index
    %c0_37 = arith.constant 0 : index
    %76 = vector.load %arg7[%c0_34, %c0_35, %c0_36, %c0_37] : memref<3x3x128x128xf32, #tpu.memory_space<vmem>>, vector<1x1x128x128xf32>
    %77 = vector.shape_cast %76 : vector<1x1x128x128xf32> to vector<128x128xf32>
    %cst_38 = arith.constant dense<0.000000e+00> : vector<256x128xf32>
    %78 = tpu.matmul %75, %77, %cst_38 {dimension_numbers = #tpu.dot_dimension_numbers<[1], [0], [0], [1], [0, 0, 1, 1], [], []>} : vector<256x128xf32>, vector<128x128xf32>, vector<256x128xf32> -> vector<256x128xf32>
    %79 = arith.addf %74, %78 : vector<256x128xf32>
    %80 = vector.extract_strided_slice %40 {offsets = [16, 0], sizes = [256, 128], strides = [1, 1]} : vector<288x128xf32> to vector<256x128xf32>
    %c1_39 = arith.constant 1 : index
    %c0_40 = arith.constant 0 : index
    %c0_41 = arith.constant 0 : index
    %c0_42 = arith.constant 0 : index
    %81 = vector.load %arg7[%c1_39, %c0_40, %c0_41, %c0_42] : memref<3x3x128x128xf32, #tpu.memory_space<vmem>>, vector<1x1x128x128xf32>
    %82 = vector.shape_cast %81 : vector<1x1x128x128xf32> to vector<128x128xf32>
    %cst_43 = arith.constant dense<0.000000e+00> : vector<256x128xf32>
    %83 = tpu.matmul %80, %82, %cst_43 {dimension_numbers = #tpu.dot_dimension_numbers<[1], [0], [0], [1], [0, 0, 1, 1], [], []>} : vector<256x128xf32>, vector<128x128xf32>, vector<256x128xf32> -> vector<256x128xf32>
    %84 = arith.addf %79, %83 : vector<256x128xf32>
    %85 = vector.extract_strided_slice %40 {offsets = [32, 0], sizes = [256, 128], strides = [1, 1]} : vector<288x128xf32> to vector<256x128xf32>
    %c2_44 = arith.constant 2 : index
    %c0_45 = arith.constant 0 : index
    %c0_46 = arith.constant 0 : index
    %c0_47 = arith.constant 0 : index
    %86 = vector.load %arg7[%c2_44, %c0_45, %c0_46, %c0_47] : memref<3x3x128x128xf32, #tpu.memory_space<vmem>>, vector<1x1x128x128xf32>
    %87 = vector.shape_cast %86 : vector<1x1x128x128xf32> to vector<128x128xf32>
    %cst_48 = arith.constant dense<0.000000e+00> : vector<256x128xf32>
    %88 = tpu.matmul %85, %87, %cst_48 {dimension_numbers = #tpu.dot_dimension_numbers<[1], [0], [0], [1], [0, 0, 1, 1], [], []>} : vector<256x128xf32>, vector<128x128xf32>, vector<256x128xf32> -> vector<256x128xf32>
    %89 = arith.addf %84, %88 : vector<256x128xf32>
    %cst_49 = arith.constant 0.000000e+00 : f32
    %90 = vector.broadcast %cst_49 : f32 to vector<1x128xf32>
    %91 = vector.extract_strided_slice %89 {offsets = [0, 0], sizes = [255, 128], strides = [1, 1]} : vector<256x128xf32> to vector<255x128xf32>
    %92 = tpu.concatenate %90, %91 in 0 : vector<1x128xf32>, vector<255x128xf32> -> vector<256x128xf32>
    %c0_i32_50 = arith.constant 0 : i32
    %93 = vector.broadcast %c0_i32_50 : i32 to vector<256x1xi32>
    %94 = arith.cmpi ne, %57, %93 : vector<256x1xi32>
    %cst_51 = arith.constant 0.000000e+00 : f32
    %95 = vector.shape_cast %94 : vector<256x1xi1> to vector<256x1xi1>
    %96 = vector.broadcast %95 : vector<256x1xi1> to vector<256x128xi1>
    %97 = vector.broadcast %cst_51 : f32 to vector<256x128xf32>
    %98 = arith.select %96, %92, %97 : vector<256x128xi1>, vector<256x128xf32>
    %99 = arith.addf %73, %98 : vector<256x128xf32>
    %cst_52 = arith.constant 0.000000e+00 : f32
    %100 = vector.broadcast %cst_52 : f32 to vector<256x128xf32>
    %101 = vector.extract_strided_slice %40 {offsets = [0, 0], sizes = [256, 128], strides = [1, 1]} : vector<288x128xf32> to vector<256x128xf32>
    %c0_53 = arith.constant 0 : index
    %c2_54 = arith.constant 2 : index
    %c0_55 = arith.constant 0 : index
    %c0_56 = arith.constant 0 : index
    %102 = vector.load %arg7[%c0_53, %c2_54, %c0_55, %c0_56] : memref<3x3x128x128xf32, #tpu.memory_space<vmem>>, vector<1x1x128x128xf32>
    %103 = vector.shape_cast %102 : vector<1x1x128x128xf32> to vector<128x128xf32>
    %cst_57 = arith.constant dense<0.000000e+00> : vector<256x128xf32>
    %104 = tpu.matmul %101, %103, %cst_57 {dimension_numbers = #tpu.dot_dimension_numbers<[1], [0], [0], [1], [0, 0, 1, 1], [], []>} : vector<256x128xf32>, vector<128x128xf32>, vector<256x128xf32> -> vector<256x128xf32>
    %105 = arith.addf %100, %104 : vector<256x128xf32>
    %106 = vector.extract_strided_slice %40 {offsets = [16, 0], sizes = [256, 128], strides = [1, 1]} : vector<288x128xf32> to vector<256x128xf32>
    %c1_58 = arith.constant 1 : index
    %c2_59 = arith.constant 2 : index
    %c0_60 = arith.constant 0 : index
    %c0_61 = arith.constant 0 : index
    %107 = vector.load %arg7[%c1_58, %c2_59, %c0_60, %c0_61] : memref<3x3x128x128xf32, #tpu.memory_space<vmem>>, vector<1x1x128x128xf32>
    %108 = vector.shape_cast %107 : vector<1x1x128x128xf32> to vector<128x128xf32>
    %cst_62 = arith.constant dense<0.000000e+00> : vector<256x128xf32>
    %109 = tpu.matmul %106, %108, %cst_62 {dimension_numbers = #tpu.dot_dimension_numbers<[1], [0], [0], [1], [0, 0, 1, 1], [], []>} : vector<256x128xf32>, vector<128x128xf32>, vector<256x128xf32> -> vector<256x128xf32>
    %110 = arith.addf %105, %109 : vector<256x128xf32>
    %111 = vector.extract_strided_slice %40 {offsets = [32, 0], sizes = [256, 128], strides = [1, 1]} : vector<288x128xf32> to vector<256x128xf32>
    %c2_63 = arith.constant 2 : index
    %c2_64 = arith.constant 2 : index
    %c0_65 = arith.constant 0 : index
    %c0_66 = arith.constant 0 : index
    %112 = vector.load %arg7[%c2_63, %c2_64, %c0_65, %c0_66] : memref<3x3x128x128xf32, #tpu.memory_space<vmem>>, vector<1x1x128x128xf32>
    %113 = vector.shape_cast %112 : vector<1x1x128x128xf32> to vector<128x128xf32>
    %cst_67 = arith.constant dense<0.000000e+00> : vector<256x128xf32>
    %114 = tpu.matmul %111, %113, %cst_67 {dimension_numbers = #tpu.dot_dimension_numbers<[1], [0], [0], [1], [0, 0, 1, 1], [], []>} : vector<256x128xf32>, vector<128x128xf32>, vector<256x128xf32> -> vector<256x128xf32>
    %115 = arith.addf %110, %114 : vector<256x128xf32>
    %116 = vector.extract_strided_slice %115 {offsets = [1, 0], sizes = [255, 128], strides = [1, 1]} : vector<256x128xf32> to vector<255x128xf32>
    %cst_68 = arith.constant 0.000000e+00 : f32
    %117 = vector.broadcast %cst_68 : f32 to vector<1x128xf32>
    %118 = tpu.concatenate %116, %117 in 0 : vector<255x128xf32>, vector<1x128xf32> -> vector<256x128xf32>
    %c15_i32 = arith.constant 15 : i32
    %119 = vector.broadcast %c15_i32 : i32 to vector<256x1xi32>
    %120 = arith.cmpi ne, %57, %119 : vector<256x1xi32>
    %cst_69 = arith.constant 0.000000e+00 : f32
    %121 = vector.shape_cast %120 : vector<256x1xi1> to vector<256x1xi1>
    %122 = vector.broadcast %121 : vector<256x1xi1> to vector<256x128xi1>
    %123 = vector.broadcast %cst_69 : f32 to vector<256x128xf32>
    %124 = arith.select %122, %118, %123 : vector<256x128xi1>, vector<256x128xf32>
    %125 = arith.addf %99, %124 : vector<256x128xf32>
    %126 = vector.shape_cast %125 : vector<256x128xf32> to vector<16x16x128xf32>
    %c0_70 = arith.constant 0 : index
    %c0_71 = arith.constant 0 : index
    %c0_72 = arith.constant 0 : index
    %127 = vector.load %arg8[%c0_70, %c0_71, %c0_72] : memref<16x16x128xf32, #tpu.memory_space<vmem>>, vector<16x16x128xf32>
    tpu.vector_store %arg8[%c0_70, %c0_71, %c0_72], %126 {strides = array<i32>} : memref<16x16x128xf32, #tpu.memory_space<vmem>>, vector<16x16x128xf32>,
    %cst_73 = arith.constant dense<0.000000e+00> : vector<128xf32>
    %128 = vector.multi_reduction <add>, %125, %cst_73 [0] : vector<256x128xf32> to vector<128xf32>
    %129 = vector.shape_cast %128 : vector<128xf32> to vector<1x128xf32>
    %130 = arith.mulf %125, %125 : vector<256x128xf32>
    %cst_74 = arith.constant dense<0.000000e+00> : vector<128xf32>
    %131 = vector.multi_reduction <add>, %130, %cst_74 [0] : vector<256x128xf32> to vector<128xf32>
    %132 = vector.shape_cast %131 : vector<128xf32> to vector<1x128xf32>
    %133 = tpu.concatenate %129, %132 in 0 : vector<1x128xf32>, vector<1x128xf32> -> vector<2x128xf32>
    %c0_75 = arith.constant 0 : index
    %c0_76 = arith.constant 0 : index
    %c0_77 = arith.constant 0 : index
    %134 = vector.load %arg9[%c0_75, %c0_76, %c0_77] : memref<1x2x128xf32, #tpu.memory_space<vmem>>, vector<1x2x128xf32>
    %135 = vector.shape_cast %134 : vector<1x2x128xf32> to vector<2x128xf32>
    %136 = vector.shape_cast %133 : vector<2x128xf32> to vector<1x2x128xf32>
    tpu.vector_store %arg9[%c0_75, %c0_76, %c0_77], %136 {strides = array<i32>} : memref<1x2x128xf32, #tpu.memory_space<vmem>>, vector<1x2x128xf32>,
    return
  }
  func.func @transform_0(%arg0: i32, %arg1: i32) -> (i32, i32, i32) {
    %c16_i32 = arith.constant 16 : i32
    %0 = arith.muli %arg0, %c16_i32 : i32
    %c16_i32_0 = arith.constant 16 : i32
    %1 = arith.muli %arg1, %c16_i32_0 : i32
    %c1_i32 = arith.constant 1 : i32
    %2 = arith.subi %1, %c1_i32 : i32
    %c0_i32 = arith.constant 0 : i32
    %3 = arith.maxsi %2, %c0_i32 : i32
    %4 = arith.addi %0, %3 : i32
    %c0_i32_1 = arith.constant 0 : i32
    %c0_i32_2 = arith.constant 0 : i32
    %c0_i32_3 = arith.constant 0 : i32
    return %4, %c0_i32_1, %c0_i32_2 : i32, i32, i32
  }
  func.func @transform_1(%arg0: i32, %arg1: i32) -> (i32, i32, i32) {
    %c1_i32 = arith.constant 1 : i32
    %0 = arith.muli %arg0, %c1_i32 : i32
    %1 = arith.addi %0, %arg1 : i32
    %c0_i32 = arith.constant 0 : i32
    %c0_i32_0 = arith.constant 0 : i32
    %c0_i32_1 = arith.constant 0 : i32
    return %1, %c0_i32, %c0_i32_0 : i32, i32, i32
  }
  func.func @transform_2(%arg0: i32, %arg1: i32) -> (i32, i32, i32) {
    %c16_i32 = arith.constant 16 : i32
    %0 = arith.muli %arg0, %c16_i32 : i32
    %c1_i32 = arith.constant 1 : i32
    %1 = arith.addi %arg1, %c1_i32 : i32
    %c16_i32_0 = arith.constant 16 : i32
    %2 = arith.muli %1, %c16_i32_0 : i32
    %c15_i32 = arith.constant 15 : i32
    %3 = arith.minsi %2, %c15_i32 : i32
    %4 = arith.addi %0, %3 : i32
    %c0_i32 = arith.constant 0 : i32
    %c0_i32_1 = arith.constant 0 : i32
    %c0_i32_2 = arith.constant 0 : i32
    return %4, %c0_i32, %c0_i32_1 : i32, i32, i32
  }
  func.func @transform_3(%arg0: i32, %arg1: i32) -> (i32, i32) {
    %c0_i32 = arith.constant 0 : i32
    %c0_i32_0 = arith.constant 0 : i32
    %c0_i32_1 = arith.constant 0 : i32
    return %c0_i32, %c0_i32_0 : i32, i32
  }
  func.func @transform_4(%arg0: i32, %arg1: i32) -> (i32, i32) {
    %c0_i32 = arith.constant 0 : i32
    %c0_i32_0 = arith.constant 0 : i32
    %c0_i32_1 = arith.constant 0 : i32
    return %c0_i32, %c0_i32_0 : i32, i32
  }
  func.func @transform_5(%arg0: i32, %arg1: i32) -> (i32, i32, i32, i32) {
    %c0_i32 = arith.constant 0 : i32
    %c0_i32_0 = arith.constant 0 : i32
    %c0_i32_1 = arith.constant 0 : i32
    %c0_i32_2 = arith.constant 0 : i32
    %c0_i32_3 = arith.constant 0 : i32
    return %c0_i32, %c0_i32_0, %c0_i32_1, %c0_i32_2 : i32, i32, i32, i32
  }
  func.func @transform_6(%arg0: i32, %arg1: i32) -> (i32, i32, i32) {
    %c1_i32 = arith.constant 1 : i32
    %0 = arith.muli %arg0, %c1_i32 : i32
    %1 = arith.addi %0, %arg1 : i32
    %c0_i32 = arith.constant 0 : i32
    %c0_i32_0 = arith.constant 0 : i32
    %c0_i32_1 = arith.constant 0 : i32
    return %1, %c0_i32, %c0_i32_0 : i32, i32, i32
  }
  func.func @transform_7(%arg0: i32, %arg1: i32) -> (i32, i32, i32) {
    %c1_i32 = arith.constant 1 : i32
    %0 = arith.muli %arg0, %c1_i32 : i32
    %1 = arith.addi %0, %arg1 : i32
    %c0_i32 = arith.constant 0 : i32
    %c0_i32_0 = arith.constant 0 : i32
    %c0_i32_1 = arith.constant 0 : i32
    return %1, %c0_i32, %c0_i32_0 : i32, i32, i32
  }
}

module attributes {stable_mosaic.version = 11 : i64} {
  func.func @_bn_relu_conv1x1_stats_kernel(%arg0: i32, %arg1: memref<512x128xf32, #tpu.memory_space<vmem>>, %arg2: memref<1x128xf32, #tpu.memory_space<vmem>>, %arg3: memref<1x128xf32, #tpu.memory_space<vmem>>, %arg4: memref<128x128xf32, #tpu.memory_space<vmem>>, %arg5: memref<512x128xf32, #tpu.memory_space<vmem>>, %arg6: memref<1x2x128xf32, #tpu.memory_space<vmem>>) attributes {dimension_semantics = [#tpu.dimension_semantics<parallel>], iteration_bounds = array<i64: 1>, scalar_prefetch = 0 : i64, scratch_operands = 0 : i64, tpu.core_type = #tpu.core_type<tc>, window_params = [{transform_indices = @transform_0, window_bounds = array<i64: 512, 128>}, {pipeline_mode = #tpu.pipeline_mode<synchronous>, transform_indices = @transform_1, window_bounds = array<i64: 1, 128>}, {pipeline_mode = #tpu.pipeline_mode<synchronous>, transform_indices = @transform_2, window_bounds = array<i64: 1, 128>}, {pipeline_mode = #tpu.pipeline_mode<synchronous>, transform_indices = @transform_3, window_bounds = array<i64: 128, 128>}, {transform_indices = @transform_4, window_bounds = array<i64: 512, 128>}, {transform_indices = @transform_5, window_bounds = array<i64: 1, 2, 128>}]} {
    %c0 = arith.constant 0 : index
    %c0_0 = arith.constant 0 : index
    %0 = vector.load %arg1[%c0, %c0_0] : memref<512x128xf32, #tpu.memory_space<vmem>>, vector<512x128xf32>
    %c0_1 = arith.constant 0 : index
    %c0_2 = arith.constant 0 : index
    %1 = vector.load %arg2[%c0_1, %c0_2] : memref<1x128xf32, #tpu.memory_space<vmem>>, vector<1x128xf32>
    %2 = vector.broadcast %1 : vector<1x128xf32> to vector<512x128xf32>
    %3 = arith.mulf %0, %2 : vector<512x128xf32>
    %c0_3 = arith.constant 0 : index
    %c0_4 = arith.constant 0 : index
    %4 = vector.load %arg3[%c0_3, %c0_4] : memref<1x128xf32, #tpu.memory_space<vmem>>, vector<1x128xf32>
    %5 = vector.broadcast %4 : vector<1x128xf32> to vector<512x128xf32>
    %6 = arith.addf %3, %5 : vector<512x128xf32>
    %cst = arith.constant 0.000000e+00 : f32
    %7 = vector.broadcast %cst : f32 to vector<512x128xf32>
    %8 = arith.maximumf %6, %7 : vector<512x128xf32>
    %c0_5 = arith.constant 0 : index
    %c0_6 = arith.constant 0 : index
    %9 = vector.load %arg4[%c0_5, %c0_6] : memref<128x128xf32, #tpu.memory_space<vmem>>, vector<128x128xf32>
    %cst_7 = arith.constant dense<0.000000e+00> : vector<512x128xf32>
    %10 = tpu.matmul %8, %9, %cst_7 {dimension_numbers = #tpu.dot_dimension_numbers<[1], [0], [0], [1], [0, 0, 1, 1], [], []>} : vector<512x128xf32>, vector<128x128xf32>, vector<512x128xf32> -> vector<512x128xf32>
    %c0_8 = arith.constant 0 : index
    %c0_9 = arith.constant 0 : index
    %11 = vector.load %arg5[%c0_8, %c0_9] : memref<512x128xf32, #tpu.memory_space<vmem>>, vector<512x128xf32>
    tpu.vector_store %arg5[%c0_8, %c0_9], %10 {strides = array<i32>} : memref<512x128xf32, #tpu.memory_space<vmem>>, vector<512x128xf32>,
    %cst_10 = arith.constant dense<0.000000e+00> : vector<128xf32>
    %12 = vector.multi_reduction <add>, %10, %cst_10 [0] : vector<512x128xf32> to vector<128xf32>
    %13 = vector.shape_cast %12 : vector<128xf32> to vector<1x128xf32>
    %14 = arith.mulf %10, %10 : vector<512x128xf32>
    %cst_11 = arith.constant dense<0.000000e+00> : vector<128xf32>
    %15 = vector.multi_reduction <add>, %14, %cst_11 [0] : vector<512x128xf32> to vector<128xf32>
    %16 = vector.shape_cast %15 : vector<128xf32> to vector<1x128xf32>
    %17 = tpu.concatenate %13, %16 in 0 : vector<1x128xf32>, vector<1x128xf32> -> vector<2x128xf32>
    %c0_12 = arith.constant 0 : index
    %c0_13 = arith.constant 0 : index
    %c0_14 = arith.constant 0 : index
    %18 = vector.load %arg6[%c0_12, %c0_13, %c0_14] : memref<1x2x128xf32, #tpu.memory_space<vmem>>, vector<1x2x128xf32>
    %19 = vector.shape_cast %18 : vector<1x2x128xf32> to vector<2x128xf32>
    %20 = vector.shape_cast %17 : vector<2x128xf32> to vector<1x2x128xf32>
    tpu.vector_store %arg6[%c0_12, %c0_13, %c0_14], %20 {strides = array<i32>} : memref<1x2x128xf32, #tpu.memory_space<vmem>>, vector<1x2x128xf32>,
    return
  }
  func.func @transform_0(%arg0: i32) -> (i32, i32) {
    %c0_i32 = arith.constant 0 : i32
    %c0_i32_0 = arith.constant 0 : i32
    return %arg0, %c0_i32 : i32, i32
  }
  func.func @transform_1(%arg0: i32) -> (i32, i32) {
    %c0_i32 = arith.constant 0 : i32
    %c0_i32_0 = arith.constant 0 : i32
    %c0_i32_1 = arith.constant 0 : i32
    return %c0_i32, %c0_i32_0 : i32, i32
  }
  func.func @transform_2(%arg0: i32) -> (i32, i32) {
    %c0_i32 = arith.constant 0 : i32
    %c0_i32_0 = arith.constant 0 : i32
    %c0_i32_1 = arith.constant 0 : i32
    return %c0_i32, %c0_i32_0 : i32, i32
  }
  func.func @transform_3(%arg0: i32) -> (i32, i32) {
    %c0_i32 = arith.constant 0 : i32
    %c0_i32_0 = arith.constant 0 : i32
    %c0_i32_1 = arith.constant 0 : i32
    return %c0_i32, %c0_i32_0 : i32, i32
  }
  func.func @transform_4(%arg0: i32) -> (i32, i32) {
    %c0_i32 = arith.constant 0 : i32
    %c0_i32_0 = arith.constant 0 : i32
    return %arg0, %c0_i32 : i32, i32
  }
  func.func @transform_5(%arg0: i32) -> (i32, i32, i32) {
    %c0_i32 = arith.constant 0 : i32
    %c0_i32_0 = arith.constant 0 : i32
    %c0_i32_1 = arith.constant 0 : i32
    return %arg0, %c0_i32, %c0_i32_0 : i32, i32, i32
  }
}

module attributes {stable_mosaic.version = 11 : i64} {
  func.func @_bn_add_relu_nchw_kernel(%arg0: i32, %arg1: i32, %arg2: memref<256x128xf32, #tpu.memory_space<vmem>>, %arg3: memref<1x128xf32, #tpu.memory_space<vmem>>, %arg4: memref<1x128xf32, #tpu.memory_space<vmem>>, %arg5: memref<256x16xf32, #tpu.memory_space<vmem>>, %arg6: memref<1x16x256xf32, #tpu.memory_space<vmem>>) attributes {dimension_semantics = [#tpu.dimension_semantics<parallel>, #tpu.dimension_semantics<parallel>], iteration_bounds = array<i64: 2, 1>, scalar_prefetch = 0 : i64, scratch_operands = 0 : i64, tpu.core_type = #tpu.core_type<tc>, window_params = [{transform_indices = @transform_0, window_bounds = array<i64: 256, 128>}, {pipeline_mode = #tpu.pipeline_mode<synchronous>, transform_indices = @transform_1, window_bounds = array<i64: 1, 128>}, {pipeline_mode = #tpu.pipeline_mode<synchronous>, transform_indices = @transform_2, window_bounds = array<i64: 1, 128>}, {transform_indices = @transform_3, window_bounds = array<i64: 256, 16>}, {transform_indices = @transform_4, window_bounds = array<i64: 1, 16, 256>}]} {
    %c0 = arith.constant 0 : index
    %c0_0 = arith.constant 0 : index
    %0 = vector.load %arg2[%c0, %c0_0] : memref<256x128xf32, #tpu.memory_space<vmem>>, vector<256x128xf32>
    %c0_1 = arith.constant 0 : index
    %c0_2 = arith.constant 0 : index
    %1 = vector.load %arg3[%c0_1, %c0_2] : memref<1x128xf32, #tpu.memory_space<vmem>>, vector<1x128xf32>
    %2 = vector.broadcast %1 : vector<1x128xf32> to vector<256x128xf32>
    %3 = arith.mulf %0, %2 : vector<256x128xf32>
    %c0_3 = arith.constant 0 : index
    %c0_4 = arith.constant 0 : index
    %4 = vector.load %arg4[%c0_3, %c0_4] : memref<1x128xf32, #tpu.memory_space<vmem>>, vector<1x128xf32>
    %5 = vector.broadcast %4 : vector<1x128xf32> to vector<256x128xf32>
    %6 = arith.addf %3, %5 : vector<256x128xf32>
    %7 = vector.extract_strided_slice %6 {offsets = [0, 0], sizes = [256, 16], strides = [1, 1]} : vector<256x128xf32> to vector<256x16xf32>
    %c0_5 = arith.constant 0 : index
    %c0_6 = arith.constant 0 : index
    %8 = vector.load %arg5[%c0_5, %c0_6] : memref<256x16xf32, #tpu.memory_space<vmem>>, vector<256x16xf32>
    %9 = arith.addf %7, %8 : vector<256x16xf32>
    %10 = tpu.transpose %9, [1, 0] : vector<256x16xf32> -> vector<16x256xf32>
    %cst = arith.constant 0.000000e+00 : f32
    %11 = vector.broadcast %cst : f32 to vector<16x256xf32>
    %12 = arith.maximumf %10, %11 : vector<16x256xf32>
    %c0_7 = arith.constant 0 : index
    %c0_8 = arith.constant 0 : index
    %c0_9 = arith.constant 0 : index
    %13 = vector.load %arg6[%c0_7, %c0_8, %c0_9] : memref<1x16x256xf32, #tpu.memory_space<vmem>>, vector<1x16x256xf32>
    %14 = vector.shape_cast %13 : vector<1x16x256xf32> to vector<16x256xf32>
    %15 = vector.shape_cast %12 : vector<16x256xf32> to vector<1x16x256xf32>
    tpu.vector_store %arg6[%c0_7, %c0_8, %c0_9], %15 {strides = array<i32>} : memref<1x16x256xf32, #tpu.memory_space<vmem>>, vector<1x16x256xf32>,
    return
  }
  func.func @transform_0(%arg0: i32, %arg1: i32) -> (i32, i32) {
    %c1_i32 = arith.constant 1 : i32
    %0 = arith.muli %arg0, %c1_i32 : i32
    %1 = arith.addi %0, %arg1 : i32
    %c0_i32 = arith.constant 0 : i32
    %c0_i32_0 = arith.constant 0 : i32
    return %1, %c0_i32 : i32, i32
  }
  func.func @transform_1(%arg0: i32, %arg1: i32) -> (i32, i32) {
    %c0_i32 = arith.constant 0 : i32
    %c0_i32_0 = arith.constant 0 : i32
    %c0_i32_1 = arith.constant 0 : i32
    return %c0_i32, %c0_i32_0 : i32, i32
  }
  func.func @transform_2(%arg0: i32, %arg1: i32) -> (i32, i32) {
    %c0_i32 = arith.constant 0 : i32
    %c0_i32_0 = arith.constant 0 : i32
    %c0_i32_1 = arith.constant 0 : i32
    return %c0_i32, %c0_i32_0 : i32, i32
  }
  func.func @transform_3(%arg0: i32, %arg1: i32) -> (i32, i32) {
    %c1_i32 = arith.constant 1 : i32
    %0 = arith.muli %arg0, %c1_i32 : i32
    %1 = arith.addi %0, %arg1 : i32
    %c0_i32 = arith.constant 0 : i32
    %c0_i32_0 = arith.constant 0 : i32
    return %1, %c0_i32 : i32, i32
  }
  func.func @transform_4(%arg0: i32, %arg1: i32) -> (i32, i32, i32) {
    %c0_i32 = arith.constant 0 : i32
    %c0_i32_0 = arith.constant 0 : i32
    return %arg0, %c0_i32, %arg1 : i32, i32, i32
  }
}

</mosaic_0001>

<llo_original>
// kernel: bottleneck_forward.4
$region0: #{bottleneck_forward.4}
  #allocation0 [shape = 'u32[]', space=smem, size = 0x4, offset = 0x4, fixed_abs, tag = 'smem constant byte address 0x4 - core index']
  #allocation1 [shape = 'u32[72,128]{1,0:T(1,128)}', space=vmem, size = 0x9000, scoped, tag = 'internal scratch']
  %s0 = inlined_call_operand.vmem [shape: f32[512,16], index: 0, kind: input, shape index: {}]
  %s1 = inlined_call_operand.vmem [shape: f32[16,128], index: 1, kind: input, shape index: {}]
  %s2 = inlined_call_operand.vmem [shape: f32[512,128], index: 2, kind: output, shape index: {0}]
  %s3 = inlined_call_operand.vmem [shape: f32[1,2,128], index: 3, kind: output, shape index: {1}]
  %4 = xla_tuple %s2, %s3
  %s5 = sld [smem:[#allocation0]]
  $region26: #{bottleneck_forward.4} parent=0
    _
  %s7 = ssub.s32 1, %s5
  %s8 = scalar_select 0, %s7, %s5
  // Predicated region
  $region2: #{bottleneck_forward.4} parent=0 // pred_check
    _
  $region3: #{bottleneck_forward.4} parent=0 // pred_check_branch
    %10 = sbr.rel (0) target = $region5
  $region4: #{bottleneck_forward.4} parent=0 // pred_region
    _
  $region5: #{bottleneck_forward.4} parent=0 // pred_fallthru
    _
  // Predicated region
  $region6: #{bottleneck_forward.4} parent=0 // pred_check
    _
  $region7: #{bottleneck_forward.4} parent=0 // pred_check_branch
    %12 = sbr.rel (0) target = $region9
  $region8: #{bottleneck_forward.4} parent=0 // pred_region
    _
  $region9: #{bottleneck_forward.4} parent=0 // pred_fallthru
    _
  %v13 = vld [vmem:[%s0] sm:$0xff]
  %v14 = vld [vmem:[%s0 + $0x8] sm:$0xff]
  %v15 = vld [vmem:[%s0 + $0x10] sm:$0xff]
  %v16 = vld [vmem:[%s0 + $0x18] sm:$0xff]
  %v17 = vld [vmem:[%s0 + $0x20] sm:$0xff]
  %v18 = vld [vmem:[%s0 + $0x28] sm:$0xff]
  %v19 = vld [vmem:[%s0 + $0x30] sm:$0xff]
  %v20 = vld [vmem:[%s0 + $0x38] sm:$0xff]
  %v21 = vld [vmem:[%s0 + $0x40] sm:$0xff]
  %v22 = vld [vmem:[%s0 + $0x48] sm:$0xff]
  %v23 = vld [vmem:[%s0 + $0x50] sm:$0xff]
  %v24 = vld [vmem:[%s0 + $0x58] sm:$0xff]
  %v25 = vld [vmem:[%s0 + $0x60] sm:$0xff]
  %v26 = vld [vmem:[%s0 + $0x68] sm:$0xff]
  %v27 = vld [vmem:[%s0 + $0x70] sm:$0xff]
  %v28 = vld [vmem:[%s0 + $0x78] sm:$0xff]
  %v29 = vld [vmem:[%s0 + $0x80] sm:$0xff]
  %v30 = vld [vmem:[%s0 + $0x88] sm:$0xff]
  %v31 = vld [vmem:[%s0 + $0x90] sm:$0xff]
  %v32 = vld [vmem:[%s0 + $0x98] sm:$0xff]
  %v33 = vld [vmem:[%s0 + $0xa0] sm:$0xff]
  %v34 = vld [vmem:[%s0 + $0xa8] sm:$0xff]
  %v35 = vld [vmem:[%s0 + $0xb0] sm:$0xff]
  %v36 = vld [vmem:[%s0 + $0xb8] sm:$0xff]
  %v37 = vld [vmem:[%s0 + $0xc0] sm:$0xff]
  %v38 = vld [vmem:[%s0 + $0xc8] sm:$0xff]
  %v39 = vld [vmem:[%s0 + $0xd0] sm:$0xff]
  %v40 = vld [vmem:[%s0 + $0xd8] sm:$0xff]
  %v41 = vld [vmem:[%s0 + $0xe0] sm:$0xff]
  %v42 = vld [vmem:[%s0 + $0xe8] sm:$0xff]
  %v43 = vld [vmem:[%s0 + $0xf0] sm:$0xff]
  %v44 = vld [vmem:[%s0 + $0xf8] sm:$0xff]
  %v45 = vld [vmem:[%s0 + $0x100] sm:$0xff]
  %v46 = vld [vmem:[%s0 + $0x108] sm:$0xff]
  %v47 = vld [vmem:[%s0 + $0x110] sm:$0xff]
  %v48 = vld [vmem:[%s0 + $0x118] sm:$0xff]
  %v49 = vld [vmem:[%s0 + $0x120] sm:$0xff]
  %v50 = vld [vmem:[%s0 + $0x128] sm:$0xff]
  %v51 = vld [vmem:[%s0 + $0x130] sm:$0xff]
  %v52 = vld [vmem:[%s0 + $0x138] sm:$0xff]
  %v53 = vld [vmem:[%s0 + $0x140] sm:$0xff]
  %v54 = vld [vmem:[%s0 + $0x148] sm:$0xff]
  %v55 = vld [vmem:[%s0 + $0x150] sm:$0xff]
  %v56 = vld [vmem:[%s0 + $0x158] sm:$0xff]
  %v57 = vld [vmem:[%s0 + $0x160] sm:$0xff]
  %v58 = vld [vmem:[%s0 + $0x168] sm:$0xff]
  %v59 = vld [vmem:[%s0 + $0x170] sm:$0xff]
  %v60 = vld [vmem:[%s0 + $0x178] sm:$0xff]
  %v61 = vld [vmem:[%s0 + $0x180] sm:$0xff]
  %v62 = vld [vmem:[%s0 + $0x188] sm:$0xff]
  %v63 = vld [vmem:[%s0 + $0x190] sm:$0xff]
  %v64 = vld [vmem:[%s0 + $0x198] sm:$0xff]
  %v65 = vld [vmem:[%s0 + $0x1a0] sm:$0xff]
  %v66 = vld [vmem:[%s0 + $0x1a8] sm:$0xff]
  %v67 = vld [vmem:[%s0 + $0x1b0] sm:$0xff]
  %v68 = vld [vmem:[%s0 + $0x1b8] sm:$0xff]
  %v69 = vld [vmem:[%s0 + $0x1c0] sm:$0xff]
  %v70 = vld [vmem:[%s0 + $0x1c8] sm:$0xff]
  %v71 = vld [vmem:[%s0 + $0x1d0] sm:$0xff]
  %v72 = vld [vmem:[%s0 + $0x1d8] sm:$0xff]
  %v73 = vld [vmem:[%s0 + $0x1e0] sm:$0xff]
  %v74 = vld [vmem:[%s0 + $0x1e8] sm:$0xff]
  %v75 = vld [vmem:[%s0 + $0x1f0] sm:$0xff]
  %v76 = vld [vmem:[%s0 + $0x1f8] sm:$0xff]
  %v77 = vld [vmem:[%s1] sm:$0xff]
  %v78 = vld [vmem:[%s1 + $0x8] sm:$0xff]
  %vm79 = vcmask 130048
  %v81 = vsel %vm79, %v13, 0
  %v84 = vsel %vm79, %v14, 0
  %v87 = vsel %vm79, %v15, 0
  %v90 = vsel %vm79, %v16, 0
  %v93 = vsel %vm79, %v17, 0
  %v96 = vsel %vm79, %v18, 0
  %v99 = vsel %vm79, %v19, 0
  %v102 = vsel %vm79, %v20, 0
  %v105 = vsel %vm79, %v21, 0
  %v108 = vsel %vm79, %v22, 0
  %v111 = vsel %vm79, %v23, 0
  %v114 = vsel %vm79, %v24, 0
  %v117 = vsel %vm79, %v25, 0
  %v120 = vsel %vm79, %v26, 0
  %v123 = vsel %vm79, %v27, 0
  %v126 = vsel %vm79, %v28, 0
  %v129 = vsel %vm79, %v29, 0
  %v132 = vsel %vm79, %v30, 0
  %v135 = vsel %vm79, %v31, 0
  %v138 = vsel %vm79, %v32, 0
  %v141 = vsel %vm79, %v33, 0
  %v144 = vsel %vm79, %v34, 0
  %v147 = vsel %vm79, %v35, 0
  %v150 = vsel %vm79, %v36, 0
  %v153 = vsel %vm79, %v37, 0
  %v156 = vsel %vm79, %v38, 0
  %v159 = vsel %vm79, %v39, 0
  %v162 = vsel %vm79, %v40, 0
  %v165 = vsel %vm79, %v41, 0
  %v168 = vsel %vm79, %v42, 0
  %v171 = vsel %vm79, %v43, 0
  %v174 = vsel %vm79, %v44, 0
  %v177 = vsel %vm79, %v45, 0
  %v180 = vsel %vm79, %v46, 0
  %v183 = vsel %vm79, %v47, 0
  %v186 = vsel %vm79, %v48, 0
  %v189 = vsel %vm79, %v49, 0
  %v192 = vsel %vm79, %v50, 0
  %v195 = vsel %vm79, %v51, 0
  %v198 = vsel %vm79, %v52, 0
  %v201 = vsel %vm79, %v53, 0
  %v204 = vsel %vm79, %v54, 0
  %v207 = vsel %vm79, %v55, 0
  %v210 = vsel %vm79, %v56, 0
  %v213 = vsel %vm79, %v57, 0
  %v216 = vsel %vm79, %v58, 0
  %v219 = vsel %vm79, %v59, 0
  %v222 = vsel %vm79, %v60, 0
  %v225 = vsel %vm79, %v61, 0
  %v228 = vsel %vm79, %v62, 0
  %v231 = vsel %vm79, %v63, 0
  %v234 = vsel %vm79, %v64, 0
  %v237 = vsel %vm79, %v65, 0
  %v240 = vsel %vm79, %v66, 0
  %v243 = vsel %vm79, %v67, 0
  %v246 = vsel %vm79, %v68, 0
  %v249 = vsel %vm79, %v69, 0
  %v252 = vsel %vm79, %v70, 0
  %v255 = vsel %vm79, %v71, 0
  %v258 = vsel %vm79, %v72, 0
  %v261 = vsel %vm79, %v73, 0
  %v264 = vsel %vm79, %v74, 0
  %v267 = vsel %vm79, %v75, 0
  %v270 = vsel %vm79, %v76, 0
  %272 = vmatpush.msra.mxu0 0.0
  %273 = vmatpush.msra.mxu0 0.0
  %274 = vmatpush.msra.mxu0 0.0
  %275 = vmatpush.msra.mxu0 0.0
  %276 = vmatpush.msra.mxu0 0.0
  %277 = vmatpush.msra.mxu0 0.0
  %278 = vmatpush.msra.mxu0 0.0
  %279 = vmatpush.msra.mxu0 0.0
  %280 = vmatpush.msra.mxu0 0.0
  %281 = vmatpush.msra.mxu0 0.0
  %282 = vmatpush.msra.mxu0 0.0
  %283 = vmatpush.msra.mxu0 0.0
  %284 = vmatpush.msra.mxu0 0.0
  %285 = vmatpush.msra.mxu0 0.0
  %286 = vmatpush.msra.mxu0 %v78
  %287 = vmatpush.msra.mxu0 %v77
  %288 = vmatmul.f32.gmra.mxu0 %v81
  %v289 = vpop.f32.mrf.mxu0
  %v290 = vadd.f32 0.0, %v289
  %291 = vmatmul.f32.gmra.mxu0 %v84
  %v292 = vpop.f32.mrf.mxu0
  %v293 = vadd.f32 0.0, %v292
  %294 = vmatmul.f32.gmra.mxu0 %v87
  %v295 = vpop.f32.mrf.mxu0
  %v296 = vadd.f32 0.0, %v295
  %297 = vmatmul.f32.gmra.mxu0 %v90
  %v298 = vpop.f32.mrf.mxu0
  %v299 = vadd.f32 0.0, %v298
  %300 = vmatmul.f32.gmra.mxu0 %v93
  %v301 = vpop.f32.mrf.mxu0
  %v302 = vadd.f32 0.0, %v301
  %303 = vmatmul.f32.gmra.mxu0 %v96
  %v304 = vpop.f32.mrf.mxu0
  %v305 = vadd.f32 0.0, %v304
  %306 = vmatmul.f32.gmra.mxu0 %v99
  %v307 = vpop.f32.mrf.mxu0
  %v308 = vadd.f32 0.0, %v307
  %309 = vmatmul.f32.gmra.mxu0 %v102
  %v310 = vpop.f32.mrf.mxu0
  %v311 = vadd.f32 0.0, %v310
  %312 = vmatmul.f32.gmra.mxu0 %v105
  %v313 = vpop.f32.mrf.mxu0
  %v314 = vadd.f32 0.0, %v313
  %315 = vmatmul.f32.gmra.mxu0 %v108
  %v316 = vpop.f32.mrf.mxu0
  %v317 = vadd.f32 0.0, %v316
  %318 = vmatmul.f32.gmra.mxu0 %v111
  %v319 = vpop.f32.mrf.mxu0
  %v320 = vadd.f32 0.0, %v319
  %321 = vmatmul.f32.gmra.mxu0 %v114
  %v322 = vpop.f32.mrf.mxu0
  %v323 = vadd.f32 0.0, %v322
  %324 = vmatmul.f32.gmra.mxu0 %v117
  %v325 = vpop.f32.mrf.mxu0
  %v326 = vadd.f32 0.0, %v325
  %327 = vmatmul.f32.gmra.mxu0 %v120
  %v328 = vpop.f32.mrf.mxu0
  %v329 = vadd.f32 0.0, %v328
  %330 = vmatmul.f32.gmra.mxu0 %v123
  %v331 = vpop.f32.mrf.mxu0
  %v332 = vadd.f32 0.0, %v331
  %333 = vmatmul.f32.gmra.mxu0 %v126
  %v334 = vpop.f32.mrf.mxu0
  %v335 = vadd.f32 0.0, %v334
  %336 = vmatmul.f32.gmra.mxu0 %v129
  %v337 = vpop.f32.mrf.mxu0
  %v338 = vadd.f32 0.0, %v337
  %339 = vmatmul.f32.gmra.mxu0 %v132
  %v340 = vpop.f32.mrf.mxu0
  %v341 = vadd.f32 0.0, %v340
  %342 = vmatmul.f32.gmra.mxu0 %v135
  %v343 = vpop.f32.mrf.mxu0
  %v344 = vadd.f32 0.0, %v343
  %345 = vmatmul.f32.gmra.mxu0 %v138
  %v346 = vpop.f32.mrf.mxu0
  %v347 = vadd.f32 0.0, %v346
  %348 = vmatmul.f32.gmra.mxu0 %v141
  %v349 = vpop.f32.mrf.mxu0
  %v350 = vadd.f32 0.0, %v349
  %351 = vmatmul.f32.gmra.mxu0 %v144
  %v352 = vpop.f32.mrf.mxu0
  %v353 = vadd.f32 0.0, %v352
  %354 = vmatmul.f32.gmra.mxu0 %v147
  %v355 = vpop.f32.mrf.mxu0
  %v356 = vadd.f32 0.0, %v355
  %357 = vmatmul.f32.gmra.mxu0 %v150
  %v358 = vpop.f32.mrf.mxu0
  %v359 = vadd.f32 0.0, %v358
  %360 = vmatmul.f32.gmra.mxu0 %v153
  %v361 = vpop.f32.mrf.mxu0
  %v362 = vadd.f32 0.0, %v361
  %363 = vmatmul.f32.gmra.mxu0 %v156
  %v364 = vpop.f32.mrf.mxu0
  %v365 = vadd.f32 0.0, %v364
  %366 = vmatmul.f32.gmra.mxu0 %v159
  %v367 = vpop.f32.mrf.mxu0
  %v368 = vadd.f32 0.0, %v367
  %369 = vmatmul.f32.gmra.mxu0 %v162
  %v370 = vpop.f32.mrf.mxu0
  %v371 = vadd.f32 0.0, %v370
  %372 = vmatmul.f32.gmra.mxu0 %v165
  %v373 = vpop.f32.mrf.mxu0
  %v374 = vadd.f32 0.0, %v373
  %375 = vmatmul.f32.gmra.mxu0 %v168
  %v376 = vpop.f32.mrf.mxu0
  %v377 = vadd.f32 0.0, %v376
  %378 = vmatmul.f32.gmra.mxu0 %v171
  %v379 = vpop.f32.mrf.mxu0
  %v380 = vadd.f32 0.0, %v379
  %381 = vmatmul.f32.gmra.mxu0 %v174
  %v382 = vpop.f32.mrf.mxu0
  %v383 = vadd.f32 0.0, %v382
  %384 = vmatmul.f32.gmra.mxu0 %v177
  %v385 = vpop.f32.mrf.mxu0
  %v386 = vadd.f32 0.0, %v385
  %387 = vmatmul.f32.gmra.mxu0 %v180
  %v388 = vpop.f32.mrf.mxu0
  %v389 = vadd.f32 0.0, %v388
  %390 = vmatmul.f32.gmra.mxu0 %v183
  %v391 = vpop.f32.mrf.mxu0
  %v392 = vadd.f32 0.0, %v391
  %393 = vmatmul.f32.gmra.mxu0 %v186
  %v394 = vpop.f32.mrf.mxu0
  %v395 = vadd.f32 0.0, %v394
  %396 = vmatmul.f32.gmra.mxu0 %v189
  %v397 = vpop.f32.mrf.mxu0
  %v398 = vadd.f32 0.0, %v397
  %399 = vmatmul.f32.gmra.mxu0 %v192
  %v400 = vpop.f32.mrf.mxu0
  %v401 = vadd.f32 0.0, %v400
  %402 = vmatmul.f32.gmra.mxu0 %v195
  %v403 = vpop.f32.mrf.mxu0
  %v404 = vadd.f32 0.0, %v403
  %405 = vmatmul.f32.gmra.mxu0 %v198
  %v406 = vpop.f32.mrf.mxu0
  %v407 = vadd.f32 0.0, %v406
  %408 = vmatmul.f32.gmra.mxu0 %v201
  %v409 = vpop.f32.mrf.mxu0
  %v410 = vadd.f32 0.0, %v409
  %411 = vmatmul.f32.gmra.mxu0 %v204
  %v412 = vpop.f32.mrf.mxu0
  %v413 = vadd.f32 0.0, %v412
  %414 = vmatmul.f32.gmra.mxu0 %v207
  %v415 = vpop.f32.mrf.mxu0
  %v416 = vadd.f32 0.0, %v415
  %417 = vmatmul.f32.gmra.mxu0 %v210
  %v418 = vpop.f32.mrf.mxu0
  %v419 = vadd.f32 0.0, %v418
  %420 = vmatmul.f32.gmra.mxu0 %v213
  %v421 = vpop.f32.mrf.mxu0
  %v422 = vadd.f32 0.0, %v421
  %423 = vmatmul.f32.gmra.mxu0 %v216
  %v424 = vpop.f32.mrf.mxu0
  %v425 = vadd.f32 0.0, %v424
  %426 = vmatmul.f32.gmra.mxu0 %v219
  %v427 = vpop.f32.mrf.mxu0
  %v428 = vadd.f32 0.0, %v427
  %429 = vmatmul.f32.gmra.mxu0 %v222
  %v430 = vpop.f32.mrf.mxu0
  %v431 = vadd.f32 0.0, %v430
  %432 = vmatmul.f32.gmra.mxu0 %v225
  %v433 = vpop.f32.mrf.mxu0
  %v434 = vadd.f32 0.0, %v433
  %435 = vmatmul.f32.gmra.mxu0 %v228
  %v436 = vpop.f32.mrf.mxu0
  %v437 = vadd.f32 0.0, %v436
  %438 = vmatmul.f32.gmra.mxu0 %v231
  %v439 = vpop.f32.mrf.mxu0
  %v440 = vadd.f32 0.0, %v439
  %441 = vmatmul.f32.gmra.mxu0 %v234
  %v442 = vpop.f32.mrf.mxu0
  %v443 = vadd.f32 0.0, %v442
  %444 = vmatmul.f32.gmra.mxu0 %v237
  %v445 = vpop.f32.mrf.mxu0
  %v446 = vadd.f32 0.0, %v445
  %447 = vmatmul.f32.gmra.mxu0 %v240
  %v448 = vpop.f32.mrf.mxu0
  %v449 = vadd.f32 0.0, %v448
  %450 = vmatmul.f32.gmra.mxu0 %v243
  %v451 = vpop.f32.mrf.mxu0
  %v452 = vadd.f32 0.0, %v451
  %453 = vmatmul.f32.gmra.mxu0 %v246
  %v454 = vpop.f32.mrf.mxu0
  %v455 = vadd.f32 0.0, %v454
  %456 = vmatmul.f32.gmra.mxu0 %v249
  %v457 = vpop.f32.mrf.mxu0
  %v458 = vadd.f32 0.0, %v457
  %459 = vmatmul.f32.gmra.mxu0 %v252
  %v460 = vpop.f32.mrf.mxu0
  %v461 = vadd.f32 0.0, %v460
  %462 = vmatmul.f32.gmra.mxu0 %v255
  %v463 = vpop.f32.mrf.mxu0
  %v464 = vadd.f32 0.0, %v463
  %465 = vmatmul.f32.gmra.mxu0 %v258
  %v466 = vpop.f32.mrf.mxu0
  %v467 = vadd.f32 0.0, %v466
  %468 = vmatmul.f32.gmra.mxu0 %v261
  %v469 = vpop.f32.mrf.mxu0
  %v470 = vadd.f32 0.0, %v469
  %471 = vmatmul.f32.gmra.mxu0 %v264
  %v472 = vpop.f32.mrf.mxu0
  %v473 = vadd.f32 0.0, %v472
  %474 = vmatmul.f32.gmra.mxu0 %v267
  %v475 = vpop.f32.mrf.mxu0
  %v476 = vadd.f32 0.0, %v475
  %477 = vmatmul.f32.gmra.mxu0 %v270
  %v478 = vpop.f32.mrf.mxu0
  %v479 = vadd.f32 0.0, %v478
  %480 = vdwg.mxu0
  %481 = vst [vmem:[%s2] sm:$0xff] %v290
  %482 = vst [vmem:[%s2 + $0x8] sm:$0xff] %v293
  %483 = vst [vmem:[%s2 + $0x10] sm:$0xff] %v296
  %484 = vst [vmem:[%s2 + $0x18] sm:$0xff] %v299
  %485 = vst [vmem:[%s2 + $0x20] sm:$0xff] %v302
  %486 = vst [vmem:[%s2 + $0x28] sm:$0xff] %v305
  %487 = vst [vmem:[%s2 + $0x30] sm:$0xff] %v308
  %488 = vst [vmem:[%s2 + $0x38] sm:$0xff] %v311
  %489 = vst [vmem:[%s2 + $0x40] sm:$0xff] %v314
  %490 = vst [vmem:[%s2 + $0x48] sm:$0xff] %v317
  %491 = vst [vmem:[%s2 + $0x50] sm:$0xff] %v320
  %492 = vst [vmem:[%s2 + $0x58] sm:$0xff] %v323
  %493 = vst [vmem:[%s2 + $0x60] sm:$0xff] %v326
  %494 = vst [vmem:[%s2 + $0x68] sm:$0xff] %v329
  %495 = vst [vmem:[%s2 + $0x70] sm:$0xff] %v332
  %496 = vst [vmem:[%s2 + $0x78] sm:$0xff] %v335
  %497 = vst [vmem:[%s2 + $0x80] sm:$0xff] %v338
  %498 = vst [vmem:[%s2 + $0x88] sm:$0xff] %v341
  %499 = vst [vmem:[%s2 + $0x90] sm:$0xff] %v344
  %500 = vst [vmem:[%s2 + $0x98] sm:$0xff] %v347
  %501 = vst [vmem:[%s2 + $0xa0] sm:$0xff] %v350
  %502 = vst [vmem:[%s2 + $0xa8] sm:$0xff] %v353
  %503 = vst [vmem:[%s2 + $0xb0] sm:$0xff] %v356
  %504 = vst [vmem:[%s2 + $0xb8] sm:$0xff] %v359
  %505 = vst [vmem:[%s2 + $0xc0] sm:$0xff] %v362
  %506 = vst [vmem:[%s2 + $0xc8] sm:$0xff] %v365
  %507 = vst [vmem:[%s2 + $0xd0] sm:$0xff] %v368
  %508 = vst [vmem:[%s2 + $0xd8] sm:$0xff] %v371
  %509 = vst [vmem:[%s2 + $0xe0] sm:$0xff] %v374
  %510 = vst [vmem:[%s2 + $0xe8] sm:$0xff] %v377
  %511 = vst [vmem:[%s2 + $0xf0] sm:$0xff] %v380
  %512 = vst [vmem:[%s2 + $0xf8] sm:$0xff] %v383
  %513 = vst [vmem:[%s2 + $0x100] sm:$0xff] %v386
  %514 = vst [vmem:[%s2 + $0x108] sm:$0xff] %v389
  %515 = vst [vmem:[%s2 + $0x110] sm:$0xff] %v392
  %516 = vst [vmem:[%s2 + $0x118] sm:$0xff] %v395
  %517 = vst [vmem:[%s2 + $0x120] sm:$0xff] %v398
  %518 = vst [vmem:[%s2 + $0x128] sm:$0xff] %v401
  %519 = vst [vmem:[%s2 + $0x130] sm:$0xff] %v404
  %520 = vst [vmem:[%s2 + $0x138] sm:$0xff] %v407
  %521 = vst [vmem:[%s2 + $0x140] sm:$0xff] %v410
  %522 = vst [vmem:[%s2 + $0x148] sm:$0xff] %v413
  %523 = vst [vmem:[%s2 + $0x150] sm:$0xff] %v416
  %524 = vst [vmem:[%s2 + $0x158] sm:$0xff] %v419
  %525 = vst [vmem:[%s2 + $0x160] sm:$0xff] %v422
  %526 = vst [vmem:[%s2 + $0x168] sm:$0xff] %v425
  %527 = vst [vmem:[%s2 + $0x170] sm:$0xff] %v428
  %528 = vst [vmem:[%s2 + $0x178] sm:$0xff] %v431
  %529 = vst [vmem:[%s2 + $0x180] sm:$0xff] %v434
  %530 = vst [vmem:[%s2 + $0x188] sm:$0xff] %v437
  %531 = vst [vmem:[%s2 + $0x190] sm:$0xff] %v440
  %532 = vst [vmem:[%s2 + $0x198] sm:$0xff] %v443
  %533 = vst [vmem:[%s2 + $0x1a0] sm:$0xff] %v446
  %534 = vst [vmem:[%s2 + $0x1a8] sm:$0xff] %v449
  %535 = vst [vmem:[%s2 + $0x1b0] sm:$0xff] %v452
  %536 = vst [vmem:[%s2 + $0x1b8] sm:$0xff] %v455
  %537 = vst [vmem:[%s2 + $0x1c0] sm:$0xff] %v458
  %538 = vst [vmem:[%s2 + $0x1c8] sm:$0xff] %v461
  %539 = vst [vmem:[%s2 + $0x1d0] sm:$0xff] %v464
  %540 = vst [vmem:[%s2 + $0x1d8] sm:$0xff] %v467
  %541 = vst [vmem:[%s2 + $0x1e0] sm:$0xff] %v470
  %542 = vst [vmem:[%s2 + $0x1e8] sm:$0xff] %v473
  %543 = vst [vmem:[%s2 + $0x1f0] sm:$0xff] %v476
  %544 = vst [vmem:[%s2 + $0x1f8] sm:$0xff] %v479
  %v545 = vadd.f32 %v290, %v293
  %v546 = vadd.f32 %v545, %v296
  %v547 = vadd.f32 %v546, %v299
  %v548 = vadd.f32 %v547, %v302
  %v549 = vadd.f32 %v548, %v305
  %v550 = vadd.f32 %v549, %v308
  %v551 = vadd.f32 %v550, %v311
  %v552 = vadd.f32 %v551, %v314
  %v553 = vadd.f32 %v552, %v317
  %v554 = vadd.f32 %v553, %v320
  %v555 = vadd.f32 %v554, %v323
  %v556 = vadd.f32 %v555, %v326
  %v557 = vadd.f32 %v556, %v329
  %v558 = vadd.f32 %v557, %v332
  %v559 = vadd.f32 %v558, %v335
  %v560 = vadd.f32 %v559, %v338
  %v561 = vadd.f32 %v560, %v341
  %v562 = vadd.f32 %v561, %v344
  %v563 = vadd.f32 %v562, %v347
  %v564 = vadd.f32 %v563, %v350
  %v565 = vadd.f32 %v564, %v353
  %v566 = vadd.f32 %v565, %v356
  %v567 = vadd.f32 %v566, %v359
  %v568 = vadd.f32 %v567, %v362
  %v569 = vadd.f32 %v568, %v365
  %v570 = vadd.f32 %v569, %v368
  %v571 = vadd.f32 %v570, %v371
  %v572 = vadd.f32 %v571, %v374
  %v573 = vadd.f32 %v572, %v377
  %v574 = vadd.f32 %v573, %v380
  %v575 = vadd.f32 %v574, %v383
  %v576 = vadd.f32 %v575, %v386
  %v577 = vadd.f32 %v576, %v389
  %v578 = vadd.f32 %v577, %v392
  %v579 = vadd.f32 %v578, %v395
  %v580 = vadd.f32 %v579, %v398
  %v581 = vadd.f32 %v580, %v401
  %v582 = vadd.f32 %v581, %v404
  %v583 = vadd.f32 %v582, %v407
  %v584 = vadd.f32 %v583, %v410
  %v585 = vadd.f32 %v584, %v413
  %v586 = vadd.f32 %v585, %v416
  %v587 = vadd.f32 %v586, %v419
  %v588 = vadd.f32 %v587, %v422
  %v589 = vadd.f32 %v588, %v425
  %v590 = vadd.f32 %v589, %v428
  %v591 = vadd.f32 %v590, %v431
  %v592 = vadd.f32 %v591, %v434
  %v593 = vadd.f32 %v592, %v437
  %v594 = vadd.f32 %v593, %v440
  %v595 = vadd.f32 %v594, %v443
  %v596 = vadd.f32 %v595, %v446
  %v597 = vadd.f32 %v596, %v449
  %v598 = vadd.f32 %v597, %v452
  %v599 = vadd.f32 %v598, %v455
  %v600 = vadd.f32 %v599, %v458
  %v601 = vadd.f32 %v600, %v461
  %v602 = vadd.f32 %v601, %v464
  %v603 = vadd.f32 %v602, %v467
  %v604 = vadd.f32 %v603, %v470
  %v605 = vadd.f32 %v604, %v473
  %v606 = vadd.f32 %v605, %v476
  %v607 = vadd.f32 %v606, %v479
  %v608 = vrot.slane %v607, 4
  %v609 = vadd.f32 %v607, %v608
  %v610 = vrot.slane %v609, 2
  %v611 = vadd.f32 %v609, %v610
  %v612 = vrot.slane %v611, 1
  %v613 = vadd.f32 %v611, %v612
  %v614 = vmul.f32 %v290, %v290
  %v615 = vmul.f32 %v293, %v293
  %v616 = vmul.f32 %v296, %v296
  %v617 = vmul.f32 %v299, %v299
  %v618 = vmul.f32 %v302, %v302
  %v619 = vmul.f32 %v305, %v305
  %v620 = vmul.f32 %v308, %v308
  %v621 = vmul.f32 %v311, %v311
  %v622 = vmul.f32 %v314, %v314
  %v623 = vmul.f32 %v317, %v317
  %v624 = vmul.f32 %v320, %v320
  %v625 = vmul.f32 %v323, %v323
  %v626 = vmul.f32 %v326, %v326
  %v627 = vmul.f32 %v329, %v329
  %v628 = vmul.f32 %v332, %v332
  %v629 = vmul.f32 %v335, %v335
  %v630 = vmul.f32 %v338, %v338
  %v631 = vmul.f32 %v341, %v341
  %v632 = vmul.f32 %v344, %v344
  %v633 = vmul.f32 %v347, %v347
  %v634 = vmul.f32 %v350, %v350
  %v635 = vmul.f32 %v353, %v353
  %v636 = vmul.f32 %v356, %v356
  %v637 = vmul.f32 %v359, %v359
  %v638 = vmul.f32 %v362, %v362
  %v639 = vmul.f32 %v365, %v365
  %v640 = vmul.f32 %v368, %v368
  %v641 = vmul.f32 %v371, %v371
  %v642 = vmul.f32 %v374, %v374
  %v643 = vmul.f32 %v377, %v377
  %v644 = vmul.f32 %v380, %v380
  %v645 = vmul.f32 %v383, %v383
  %v646 = vmul.f32 %v386, %v386
  %v647 = vmul.f32 %v389, %v389
  %v648 = vmul.f32 %v392, %v392
  %v649 = vmul.f32 %v395, %v395
  %v650 = vmul.f32 %v398, %v398
  %v651 = vmul.f32 %v401, %v401
  %v652 = vmul.f32 %v404, %v404
  %v653 = vmul.f32 %v407, %v407
  %v654 = vmul.f32 %v410, %v410
  %v655 = vmul.f32 %v413, %v413
  %v656 = vmul.f32 %v416, %v416
  %v657 = vmul.f32 %v419, %v419
  %v658 = vmul.f32 %v422, %v422
  %v659 = vmul.f32 %v425, %v425
  %v660 = vmul.f32 %v428, %v428
  %v661 = vmul.f32 %v431, %v431
  %v662 = vmul.f32 %v434, %v434
  %v663 = vmul.f32 %v437, %v437
  %v664 = vmul.f32 %v440, %v440
  %v665 = vmul.f32 %v443, %v443
  %v666 = vmul.f32 %v446, %v446
  %v667 = vmul.f32 %v449, %v449
  %v668 = vmul.f32 %v452, %v452
  %v669 = vmul.f32 %v455, %v455
  %v670 = vmul.f32 %v458, %v458
  %v671 = vmul.f32 %v461, %v461
  %v672 = vmul.f32 %v464, %v464
  %v673 = vmul.f32 %v467, %v467
  %v674 = vmul.f32 %v470, %v470
  %v675 = vmul.f32 %v473, %v473
  %v676 = vmul.f32 %v476, %v476
  %v677 = vmul.f32 %v479, %v479
  %v678 = vadd.f32 %v614, %v615
  %v679 = vadd.f32 %v678, %v616
  %v680 = vadd.f32 %v679, %v617
  %v681 = vadd.f32 %v680, %v618
  %v682 = vadd.f32 %v681, %v619
  %v683 = vadd.f32 %v682, %v620
  %v684 = vadd.f32 %v683, %v621
  %v685 = vadd.f32 %v684, %v622
  %v686 = vadd.f32 %v685, %v623
  %v687 = vadd.f32 %v686, %v624
  %v688 = vadd.f32 %v687, %v625
  %v689 = vadd.f32 %v688, %v626
  %v690 = vadd.f32 %v689, %v627
  %v691 = vadd.f32 %v690, %v628
  %v692 = vadd.f32 %v691, %v629
  %v693 = vadd.f32 %v692, %v630
  %v694 = vadd.f32 %v693, %v631
  %v695 = vadd.f32 %v694, %v632
  %v696 = vadd.f32 %v695, %v633
  %v697 = vadd.f32 %v696, %v634
  %v698 = vadd.f32 %v697, %v635
  %v699 = vadd.f32 %v698, %v636
  %v700 = vadd.f32 %v699, %v637
  %v701 = vadd.f32 %v700, %v638
  %v702 = vadd.f32 %v701, %v639
  %v703 = vadd.f32 %v702, %v640
  %v704 = vadd.f32 %v703, %v641
  %v705 = vadd.f32 %v704, %v642
  %v706 = vadd.f32 %v705, %v643
  %v707 = vadd.f32 %v706, %v644
  %v708 = vadd.f32 %v707, %v645
  %v709 = vadd.f32 %v708, %v646
  %v710 = vadd.f32 %v709, %v647
  %v711 = vadd.f32 %v710, %v648
  %v712 = vadd.f32 %v711, %v649
  %v713 = vadd.f32 %v712, %v650
  %v714 = vadd.f32 %v713, %v651
  %v715 = vadd.f32 %v714, %v652
  %v716 = vadd.f32 %v715, %v653
  %v717 = vadd.f32 %v716, %v654
  %v718 = vadd.f32 %v717, %v655
  %v719 = vadd.f32 %v718, %v656
  %v720 = vadd.f32 %v719, %v657
  %v721 = vadd.f32 %v720, %v658
  %v722 = vadd.f32 %v721, %v659
  %v723 = vadd.f32 %v722, %v660
  %v724 = vadd.f32 %v723, %v661
  %v725 = vadd.f32 %v724, %v662
  %v726 = vadd.f32 %v725, %v663
  %v727 = vadd.f32 %v726, %v664
  %v728 = vadd.f32 %v727, %v665
  %v729 = vadd.f32 %v728, %v666
  %v730 = vadd.f32 %v729, %v667
  %v731 = vadd.f32 %v730, %v668
  %v732 = vadd.f32 %v731, %v669
  %v733 = vadd.f32 %v732, %v670
  %v734 = vadd.f32 %v733, %v671
  %v735 = vadd.f32 %v734, %v672
  %v736 = vadd.f32 %v735, %v673
  %v737 = vadd.f32 %v736, %v674
  %v738 = vadd.f32 %v737, %v675
  %v739 = vadd.f32 %v738, %v676
  %v740 = vadd.f32 %v739, %v677
  %v741 = vrot.slane %v740, 4
  %v742 = vadd.f32 %v740, %v741
  %v743 = vrot.slane %v742, 2
  %v744 = vadd.f32 %v742, %v743
  %v745 = vrot.slane %v744, 1
  %v746 = vadd.f32 %v744, %v745
  %vm747 = vcmask 1040384
  %v748 = vsel %vm747, %v613, %v746
  %749 = vst [vmem:[%s3] sm:$0x3] %v748
  // Predicated region
  $region10: #{bottleneck_forward.4} parent=0 // pred_check
    _
  $region11: #{bottleneck_forward.4} parent=0 // pred_check_branch
    %751 = sbr.rel (0) target = $region13
  $region12: #{bottleneck_forward.4} parent=0 // pred_region
    _
  $region13: #{bottleneck_forward.4} parent=0 // pred_fallthru
    _
  // Predicated region
  $region14: #{bottleneck_forward.4} parent=0 // pred_check
    _
  $region15: #{bottleneck_forward.4} parent=0 // pred_check_branch
    %753 = sbr.rel (0) target = $region17
  $region16: #{bottleneck_forward.4} parent=0 // pred_region
    _
  $region17: #{bottleneck_forward.4} parent=0 // pred_fallthru
    _
  // Predicated region
  $region18: #{bottleneck_forward.4} parent=0 // pred_check
    _
  $region19: #{bottleneck_forward.4} parent=0 // pred_check_branch
    %755 = sbr.rel (0) target = $region21
  $region20: #{bottleneck_forward.4} parent=0 // pred_region
    _
  $region21: #{bottleneck_forward.4} parent=0 // pred_fallthru
    _
  // Predicated region
  $region22: #{bottleneck_forward.4} parent=0 // pred_check
    _
  $region23: #{bottleneck_forward.4} parent=0 // pred_check_branch
    %757 = sbr.rel (0) target = $region25
  $region24: #{bottleneck_forward.4} parent=0 // pred_region
    _
  $region25: #{bottleneck_forward.4} parent=0 // pred_fallthru
    _

// kernel: bottleneck_forward.7
$region0: #{bottleneck_forward.7}
  #allocation0 [shape = 'u32[]', space=smem, size = 0x4, offset = 0x4, fixed_abs, tag = 'smem constant byte address 0x4 - core index']
  #allocation1 [shape = 'u32[72,128]{1,0:T(1,128)}', space=vmem, size = 0x9000, scoped, tag = 'internal scratch']
  %s0 = inlined_call_operand.vmem [shape: f32[512,128], index: 0, kind: input, shape index: {}]
  %s1 = inlined_call_operand.vmem [shape: f32[1,128], index: 1, kind: input, shape index: {}]
  %s2 = inlined_call_operand.vmem [shape: f32[1,128], index: 2, kind: input, shape index: {}]
  %s3 = inlined_call_operand.vmem [shape: f32[512,16], index: 3, kind: input, shape index: {}]
  %s4 = inlined_call_operand.vmem [shape: f32[2,16,256], index: 4, kind: output, shape index: {}]
  %s5 = sld [smem:[#allocation0]]
  $region49: #{bottleneck_forward.7} parent=0
    _
  %s7 = ssub.s32 1, %s5
  %s8 = scalar_select 0, %s7, %s5
  loop: start=0, step=1, limit=4
  $region2: #{bottleneck_forward.7} parent=0 // loop_pre_header
    _
  $region3: #{bottleneck_forward.7} parent=0 // loop_header
    %s10 = sphi 0, %s14
    %p11 = scmp.ge.s32.totalorder %s10, 4
    %s17 = sphi 0, %s29
    %s18 = sphi 0, %s25
    %s19 = sphi 0, %s17
    %s20 = sphi 0, %s18
    %s21 = sphi 0, %s19
    %s22 = sphi 0, %s20
    %s34 = sphi 0, %s36
    %s37 = sphi 0, %s34
    %s38 = sphi 0, %s37
    %s54 = sphi 0, %s38
    %s58 = sphi 0, %s58
    %s60 = sphi 0, %s58
    %s61 = sphi 0, %s60
    %s75 = sphi 0, %s61
    %s79 = sphi 0, %s79
    %s81 = sphi 0, %s79
    %s82 = sphi 0, %s81
    %s96 = sphi 0, %s82
    %s104 = sphi 0, %s106
    %s107 = sphi 0, %s104
    %s108 = sphi 0, %s107
    %s124 = sphi 0, %s108
    %s132 = sphi 0, %s134
    %s135 = sphi 0, %s132
    %s136 = sphi 0, %s135
    %s152 = sphi 0, %s136
  $region4: #{bottleneck_forward.7} parent=0 // loop_header_branch
    %13 = sbr.rel (%p11) target = $region8
  $region5: #{bottleneck_forward.7} parent=0 // loop_body
    %s15 = ssub.s32 %s10, 1
    %s16 = ssub.s32 %s10, 2
    %s23 = sadd.s32 1, %s18
    %p24 = scmp.ge.s32.totalorder %s23, 1
    %s25 = scalar_select %p24, 0, %s23
    %s26 = sadd.s32 1, %s17
    %s27 = scalar_select %p24, %s26, %s17
    %p28 = scmp.ge.s32.totalorder %s27, 2
    %s29 = scalar_select %p28, 0, %s27
    %s30 = sadd.s32 %s17, %s18
    %s31 = sadd.s32 %s29, %s25
    %s32 = ssub.s32 %s30, %s31
    %p33 = scmp.eq.s32.totalorder %s32, 0
    %s35 = sadd.s32 %s34, 1
    %s36 = scalar_select %p33, %s34, %s35
    %p39 = pneg %p33
    %p40 = scmp.eq.s32.totalorder %s10, 1
    %p41 = por %p39, %p40
    %p42 = scmp.ne.s32.totalorder %s34, %s37
    %p43 = scmp.eq.s32.totalorder %s10, 0
    %p44 = por %p42, %p43
    %p45 = scmp.ne.s32.totalorder %s34, %s37
    %p46 = scmp.eq.s32.totalorder %s15, 1
    %p47 = por %p45, %p46
    %p48 = scmp.ne.s32.totalorder %s37, %s38
    %p49 = scmp.eq.s32.totalorder %s15, 0
    %p50 = por %p48, %p49
    %p51 = scmp.ne.s32.totalorder %s37, %s38
    %p52 = scmp.eq.s32.totalorder %s16, 1
    %p53 = por %p51, %p52
    %p55 = scmp.ne.s32.totalorder %s38, %s54
    %p56 = scmp.eq.s32.totalorder %s16, 0
    %p57 = por %p55, %p56
    %s59 = sadd.s32 %s58, 1
    %p62 = scmp.eq.s32.totalorder %s10, 1
    %p63 = scmp.ne.s32.totalorder %s58, %s60
    %p64 = scmp.eq.s32.totalorder %s10, 0
    %p65 = por %p63, %p64
    %p66 = scmp.ne.s32.totalorder %s58, %s60
    %p67 = scmp.eq.s32.totalorder %s15, 1
    %p68 = por %p66, %p67
    %p69 = scmp.ne.s32.totalorder %s60, %s61
    %p70 = scmp.eq.s32.totalorder %s15, 0
    %p71 = por %p69, %p70
    %p72 = scmp.ne.s32.totalorder %s60, %s61
    %p73 = scmp.eq.s32.totalorder %s16, 1
    %p74 = por %p72, %p73
    %p76 = scmp.ne.s32.totalorder %s61, %s75
    %p77 = scmp.eq.s32.totalorder %s16, 0
    %p78 = por %p76, %p77
    %s80 = sadd.s32 %s79, 1
    %p83 = scmp.eq.s32.totalorder %s10, 1
    %p84 = scmp.ne.s32.totalorder %s79, %s81
    %p85 = scmp.eq.s32.totalorder %s10, 0
    %p86 = por %p84, %p85
    %p87 = scmp.ne.s32.totalorder %s79, %s81
    %p88 = scmp.eq.s32.totalorder %s15, 1
    %p89 = por %p87, %p88
    %p90 = scmp.ne.s32.totalorder %s81, %s82
    %p91 = scmp.eq.s32.totalorder %s15, 0
    %p92 = por %p90, %p91
    %p93 = scmp.ne.s32.totalorder %s81, %s82
    %p94 = scmp.eq.s32.totalorder %s16, 1
    %p95 = por %p93, %p94
    %p97 = scmp.ne.s32.totalorder %s82, %s96
    %p98 = scmp.eq.s32.totalorder %s16, 0
    %p99 = por %p97, %p98
    %s100 = sadd.s32 %s17, %s18
    %s101 = sadd.s32 %s29, %s25
    %s102 = ssub.s32 %s100, %s101
    %p103 = scmp.eq.s32.totalorder %s102, 0
    %s105 = sadd.s32 %s104, 1
    %s106 = scalar_select %p103, %s104, %s105
    %p109 = pneg %p103
    %p110 = scmp.eq.s32.totalorder %s10, 1
    %p111 = por %p109, %p110
    %p112 = scmp.ne.s32.totalorder %s104, %s107
    %p113 = scmp.eq.s32.totalorder %s10, 0
    %p114 = por %p112, %p113
    %p115 = scmp.ne.s32.totalorder %s104, %s107
    %p116 = scmp.eq.s32.totalorder %s15, 1
    %p117 = por %p115, %p116
    %p118 = scmp.ne.s32.totalorder %s107, %s108
    %p119 = scmp.eq.s32.totalorder %s15, 0
    %p120 = por %p118, %p119
    %p121 = scmp.ne.s32.totalorder %s107, %s108
    %p122 = scmp.eq.s32.totalorder %s16, 1
    %p123 = por %p121, %p122
    %p125 = scmp.ne.s32.totalorder %s108, %s124
    %p126 = scmp.eq.s32.totalorder %s16, 0
    %p127 = por %p125, %p126
    %s128 = ssub.s32 %s17, %s29
    %s129 = ssub.s32 %s18, %s25
    %s130 = sor.u32 %s128, %s129
    %p131 = scmp.eq.s32.totalorder %s130, 0
    %s133 = sadd.s32 %s132, 1
    %s134 = scalar_select %p131, %s132, %s133
    %p137 = pneg %p131
    %p138 = scmp.eq.s32.totalorder %s10, 1
    %p139 = por %p137, %p138
    %p140 = scmp.ne.s32.totalorder %s132, %s135
    %p141 = scmp.eq.s32.totalorder %s10, 0
    %p142 = por %p140, %p141
    %p143 = scmp.ne.s32.totalorder %s132, %s135
    %p144 = scmp.eq.s32.totalorder %s15, 1
    %p145 = por %p143, %p144
    %p146 = scmp.ne.s32.totalorder %s135, %s136
    %p147 = scmp.eq.s32.totalorder %s15, 0
    %p148 = por %p146, %p147
    %p149 = scmp.ne.s32.totalorder %s135, %s136
    %p150 = scmp.eq.s32.totalorder %s16, 1
    %p151 = por %p149, %p150
    %p153 = scmp.ne.s32.totalorder %s136, %s152
    %p154 = scmp.eq.s32.totalorder %s16, 0
    %p155 = por %p153, %p154
    %p156 = scmp.le.s32.totalorder 1, %s10
    %p157 = scmp.lt.s32.totalorder %s10, 3
    %p158 = pnand %p156, %p157
    %p159 = pneg %p158
    // Predicated region
    $region9: #{bottleneck_forward.7} parent=5 // pred_check
      _
    $region10: #{bottleneck_forward.7} parent=5 // pred_check_branch
      %161 = sbr.rel (%p158) target = $region12
    $region11: #{bottleneck_forward.7} parent=5 // pred_region
      %s162 = ssub.s32 %s10, 1
      // Predicated region
      $region13: #{bottleneck_forward.7} parent=11 // pred_check
        %p163 = pneg %p71
      $region14: #{bottleneck_forward.7} parent=11 // pred_check_branch
        %165 = sbr.rel (%p163) target = $region16
      $region15: #{bottleneck_forward.7} parent=11 // pred_region
        _
      $region16: #{bottleneck_forward.7} parent=11 // pred_fallthru
        _
      // Predicated region
      $region17: #{bottleneck_forward.7} parent=11 // pred_check
        %p166 = pneg %p92
      $region18: #{bottleneck_forward.7} parent=11 // pred_check_branch
        %168 = sbr.rel (%p166) target = $region20
      $region19: #{bottleneck_forward.7} parent=11 // pred_region
        _
      $region20: #{bottleneck_forward.7} parent=11 // pred_fallthru
        _
    $region12: #{bottleneck_forward.7} parent=5 // pred_fallthru
      _
    %p169 = scmp.lt.s32.totalorder %s10, 2
    // Predicated region
    $region21: #{bottleneck_forward.7} parent=5 // pred_check
      %p170 = pneg %p169
    $region22: #{bottleneck_forward.7} parent=5 // pred_check_branch
      %172 = sbr.rel (%p170) target = $region24
    $region23: #{bottleneck_forward.7} parent=5 // pred_region
      // Predicated region
      $region25: #{bottleneck_forward.7} parent=23 // pred_check
        %p173 = pneg %p44
      $region26: #{bottleneck_forward.7} parent=23 // pred_check_branch
        %175 = sbr.rel (%p173) target = $region28
      $region27: #{bottleneck_forward.7} parent=23 // pred_region
        %s176 = sadd.s32 %s17, %s18
        %s177 = smul.u32 32, %s176
        %p178 = scmp.lt.s32.totalorder %s177, 63
        %s179 = scalar_select %p178, %s177, 63
        %s180 = smul.addr %s179, 8
        %s181 = scalar_lea.vmem %s0, %s180
        %s182 = sadd.s32 %s17, %s18
        %s183 = smul.u32 32, %s182
      $region28: #{bottleneck_forward.7} parent=23 // pred_fallthru
        _
      // Predicated region
      $region29: #{bottleneck_forward.7} parent=23 // pred_check
        %p184 = pneg %p114
      $region30: #{bottleneck_forward.7} parent=23 // pred_check_branch
        %186 = sbr.rel (%p184) target = $region32
      $region31: #{bottleneck_forward.7} parent=23 // pred_region
        %s187 = sadd.s32 %s17, %s18
        %s188 = smul.u32 32, %s187
        %p189 = scmp.lt.s32.totalorder %s188, 63
        %s190 = scalar_select %p189, %s188, 63
        %s191 = smul.addr %s190, 8
        %s192 = scalar_lea.vmem %s3, %s191
        %s193 = sadd.s32 %s17, %s18
        %s194 = smul.u32 32, %s193
      $region32: #{bottleneck_forward.7} parent=23 // pred_fallthru
        _
    $region24: #{bottleneck_forward.7} parent=5 // pred_fallthru
      _
    %p195 = scmp.le.s32.totalorder 1, %s10
    %p196 = scmp.lt.s32.totalorder %s10, 3
    %p197 = pnand %p195, %p196
    %p198 = pneg %p197
    // Predicated region
    $region33: #{bottleneck_forward.7} parent=5 // pred_check
      _
    $region34: #{bottleneck_forward.7} parent=5 // pred_check_branch
      %200 = sbr.rel (%p197) target = $region36
    $region35: #{bottleneck_forward.7} parent=5 // pred_region
      %s201 = ssub.s32 %s10, 1
      %s202 = sadd.s32 %s19, %s20
      %s203 = smul.u32 32, %s202
      %p204 = scmp.lt.s32.totalorder %s203, 63
      %s205 = scalar_select %p204, %s203, 63
      %s206 = smul.addr %s205, 8
      %s207 = scalar_lea.vmem %s0, %s206
      %p208 = pneg %p50
      %p209 = pneg %p47
      %p210 = pneg %p71
      %p211 = pneg %p68
      %p212 = pneg %p92
      %p213 = pneg %p89
      %s214 = sadd.s32 %s19, %s20
      %s215 = smul.u32 32, %s214
      %p216 = scmp.lt.s32.totalorder %s215, 63
      %s217 = scalar_select %p216, %s215, 63
      %s218 = smul.addr %s217, 8
      %s219 = scalar_lea.vmem %s3, %s218
      %p220 = pneg %p120
      %p221 = pneg %p117
      %p222 = pneg %p148
      %p223 = pneg %p145
      %s224 = smul.u32 2, %s20
      %p225 = scmp.lt.s32.totalorder %s19, 1
      %s226 = scalar_select %p225, %s19, 1
      %p227 = scmp.lt.s32.totalorder %s224, 1
      %s228 = scalar_select %p227, %s224, 1
      %s229 = smul.addr %s226, 4
      %s230 = sadd.s32 %s228, %s229
      %s231 = smul.addr %s230, 8
      %s232 = scalar_lea.vmem %s4, %s231
      %s233 = sadd.s32 %s19, %s20
      %s234 = smul.u32 32, %s233
      %p235 = scmp.lt.s32.totalorder %s234, 63
      %s236 = scalar_select %p235, %s234, 63
      %s237 = smul.addr %s236, 8
      %s238 = scalar_lea.vmem %s0, %s237
      %s239 = sadd.s32 %s19, %s20
      %s240 = smul.u32 32, %s239
      %s241 = sadd.s32 %s19, %s20
      %s242 = smul.u32 32, %s241
      %p243 = scmp.lt.s32.totalorder %s242, 63
      %s244 = scalar_select %p243, %s242, 63
      %s245 = smul.addr %s244, 8
      %s246 = scalar_lea.vmem %s3, %s245
      %s247 = sadd.s32 %s19, %s20
      %s248 = smul.u32 32, %s247
      %s249 = smul.u32 2, %s20
      %p250 = scmp.lt.s32.totalorder %s19, 1
      %s251 = scalar_select %p250, %s19, 1
      %p252 = scmp.lt.s32.totalorder %s249, 1
      %s253 = scalar_select %p252, %s249, 1
      %s254 = smul.addr %s251, 4
      %s255 = sadd.s32 %s253, %s254
      %s256 = smul.addr %s255, 8
      %s257 = scalar_lea.vmem %s4, %s256
      %s258 = smul.u32 2, %s20
      %v259 = vld [vmem:[%s238] sm:$0xff]
      %v260 = vld [vmem:[%s238 + $0x8] sm:$0xff]
      %v261 = vld [vmem:[%s238 + $0x10] sm:$0xff]
      %v262 = vld [vmem:[%s238 + $0x18] sm:$0xff]
      %v263 = vld [vmem:[%s238 + $0x20] sm:$0xff]
      %v264 = vld [vmem:[%s238 + $0x28] sm:$0xff]
      %v265 = vld [vmem:[%s238 + $0x30] sm:$0xff]
      %v266 = vld [vmem:[%s238 + $0x38] sm:$0xff]
      %v267 = vld [vmem:[%s238 + $0x40] sm:$0xff]
      %v268 = vld [vmem:[%s238 + $0x48] sm:$0xff]
      %v269 = vld [vmem:[%s238 + $0x50] sm:$0xff]
      %v270 = vld [vmem:[%s238 + $0x58] sm:$0xff]
      %v271 = vld [vmem:[%s238 + $0x60] sm:$0xff]
      %v272 = vld [vmem:[%s238 + $0x68] sm:$0xff]
      %v273 = vld [vmem:[%s238 + $0x70] sm:$0xff]
      %v274 = vld [vmem:[%s238 + $0x78] sm:$0xff]
      %v275 = vld [vmem:[%s238 + $0x80] sm:$0xff]
      %v276 = vld [vmem:[%s238 + $0x88] sm:$0xff]
      %v277 = vld [vmem:[%s238 + $0x90] sm:$0xff]
      %v278 = vld [vmem:[%s238 + $0x98] sm:$0xff]
      %v279 = vld [vmem:[%s238 + $0xa0] sm:$0xff]
      %v280 = vld [vmem:[%s238 + $0xa8] sm:$0xff]
      %v281 = vld [vmem:[%s238 + $0xb0] sm:$0xff]
      %v282 = vld [vmem:[%s238 + $0xb8] sm:$0xff]
      %v283 = vld [vmem:[%s238 + $0xc0] sm:$0xff]
      %v284 = vld [vmem:[%s238 + $0xc8] sm:$0xff]
      %v285 = vld [vmem:[%s238 + $0xd0] sm:$0xff]
      %v286 = vld [vmem:[%s238 + $0xd8] sm:$0xff]
      %v287 = vld [vmem:[%s238 + $0xe0] sm:$0xff]
      %v288 = vld [vmem:[%s238 + $0xe8] sm:$0xff]
      %v289 = vld [vmem:[%s238 + $0xf0] sm:$0xff]
      %v290 = vld [vmem:[%s238 + $0xf8] sm:$0xff]
      %v291 = vld [vmem:[%s1] sm:$0x1]
      %v293 = vperm.slane %v291, 0
      %v295 = vmul.f32 %v259, %v293
      %v296 = vmul.f32 %v260, %v293
      %v297 = vmul.f32 %v261, %v293
      %v298 = vmul.f32 %v262, %v293
      %v299 = vmul.f32 %v263, %v293
      %v300 = vmul.f32 %v264, %v293
      %v301 = vmul.f32 %v265, %v293
      %v302 = vmul.f32 %v266, %v293
      %v303 = vmul.f32 %v267, %v293
      %v304 = vmul.f32 %v268, %v293
      %v305 = vmul.f32 %v269, %v293
      %v306 = vmul.f32 %v270, %v293
      %v307 = vmul.f32 %v271, %v293
      %v308 = vmul.f32 %v272, %v293
      %v309 = vmul.f32 %v273, %v293
      %v310 = vmul.f32 %v274, %v293
      %v311 = vmul.f32 %v275, %v293
      %v312 = vmul.f32 %v276, %v293
      %v313 = vmul.f32 %v277, %v293
      %v314 = vmul.f32 %v278, %v293
      %v315 = vmul.f32 %v279, %v293
      %v316 = vmul.f32 %v280, %v293
      %v317 = vmul.f32 %v281, %v293
      %v318 = vmul.f32 %v282, %v293
      %v319 = vmul.f32 %v283, %v293
      %v320 = vmul.f32 %v284, %v293
      %v321 = vmul.f32 %v285, %v293
      %v322 = vmul.f32 %v286, %v293
      %v323 = vmul.f32 %v287, %v293
      %v324 = vmul.f32 %v288, %v293
      %v325 = vmul.f32 %v289, %v293
      %v326 = vmul.f32 %v290, %v293
      %v327 = vld [vmem:[%s2] sm:$0x1]
      %v329 = vperm.slane %v327, 0
      %v331 = vadd.f32 %v295, %v329
      %v332 = vadd.f32 %v296, %v329
      %v333 = vadd.f32 %v297, %v329
      %v334 = vadd.f32 %v298, %v329
      %v335 = vadd.f32 %v299, %v329
      %v336 = vadd.f32 %v300, %v329
      %v337 = vadd.f32 %v301, %v329
      %v338 = vadd.f32 %v302, %v329
      %v339 = vadd.f32 %v303, %v329
      %v340 = vadd.f32 %v304, %v329
      %v341 = vadd.f32 %v305, %v329
      %v342 = vadd.f32 %v306, %v329
      %v343 = vadd.f32 %v307, %v329
      %v344 = vadd.f32 %v308, %v329
      %v345 = vadd.f32 %v309, %v329
      %v346 = vadd.f32 %v310, %v329
      %v347 = vadd.f32 %v311, %v329
      %v348 = vadd.f32 %v312, %v329
      %v349 = vadd.f32 %v313, %v329
      %v350 = vadd.f32 %v314, %v329
      %v351 = vadd.f32 %v315, %v329
      %v352 = vadd.f32 %v316, %v329
      %v353 = vadd.f32 %v317, %v329
      %v354 = vadd.f32 %v318, %v329
      %v355 = vadd.f32 %v319, %v329
      %v356 = vadd.f32 %v320, %v329
      %v357 = vadd.f32 %v321, %v329
      %v358 = vadd.f32 %v322, %v329
      %v359 = vadd.f32 %v323, %v329
      %v360 = vadd.f32 %v324, %v329
      %v361 = vadd.f32 %v325, %v329
      %v362 = vadd.f32 %v326, %v329
      %v363 = vld [vmem:[%s246] sm:$0xff]
      %v364 = vld [vmem:[%s246 + $0x8] sm:$0xff]
      %v365 = vld [vmem:[%s246 + $0x10] sm:$0xff]
      %v366 = vld [vmem:[%s246 + $0x18] sm:$0xff]
      %v367 = vld [vmem:[%s246 + $0x20] sm:$0xff]
      %v368 = vld [vmem:[%s246 + $0x28] sm:$0xff]
      %v369 = vld [vmem:[%s246 + $0x30] sm:$0xff]
      %v370 = vld [vmem:[%s246 + $0x38] sm:$0xff]
      %v371 = vld [vmem:[%s246 + $0x40] sm:$0xff]
      %v372 = vld [vmem:[%s246 + $0x48] sm:$0xff]
      %v373 = vld [vmem:[%s246 + $0x50] sm:$0xff]
      %v374 = vld [vmem:[%s246 + $0x58] sm:$0xff]
      %v375 = vld [vmem:[%s246 + $0x60] sm:$0xff]
      %v376 = vld [vmem:[%s246 + $0x68] sm:$0xff]
      %v377 = vld [vmem:[%s246 + $0x70] sm:$0xff]
      %v378 = vld [vmem:[%s246 + $0x78] sm:$0xff]
      %v379 = vld [vmem:[%s246 + $0x80] sm:$0xff]
      %v380 = vld [vmem:[%s246 + $0x88] sm:$0xff]
      %v381 = vld [vmem:[%s246 + $0x90] sm:$0xff]
      %v382 = vld [vmem:[%s246 + $0x98] sm:$0xff]
      %v383 = vld [vmem:[%s246 + $0xa0] sm:$0xff]
      %v384 = vld [vmem:[%s246 + $0xa8] sm:$0xff]
      %v385 = vld [vmem:[%s246 + $0xb0] sm:$0xff]
      %v386 = vld [vmem:[%s246 + $0xb8] sm:$0xff]
      %v387 = vld [vmem:[%s246 + $0xc0] sm:$0xff]
      %v388 = vld [vmem:[%s246 + $0xc8] sm:$0xff]
      %v389 = vld [vmem:[%s246 + $0xd0] sm:$0xff]
      %v390 = vld [vmem:[%s246 + $0xd8] sm:$0xff]
      %v391 = vld [vmem:[%s246 + $0xe0] sm:$0xff]
      %v392 = vld [vmem:[%s246 + $0xe8] sm:$0xff]
      %v393 = vld [vmem:[%s246 + $0xf0] sm:$0xff]
      %v394 = vld [vmem:[%s246 + $0xf8] sm:$0xff]
      %v395 = vadd.f32 %v331, %v363
      %v396 = vadd.f32 %v332, %v364
      %v397 = vadd.f32 %v333, %v365
      %v398 = vadd.f32 %v334, %v366
      %v399 = vadd.f32 %v335, %v367
      %v400 = vadd.f32 %v336, %v368
      %v401 = vadd.f32 %v337, %v369
      %v402 = vadd.f32 %v338, %v370
      %v403 = vadd.f32 %v339, %v371
      %v404 = vadd.f32 %v340, %v372
      %v405 = vadd.f32 %v341, %v373
      %v406 = vadd.f32 %v342, %v374
      %v407 = vadd.f32 %v343, %v375
      %v408 = vadd.f32 %v344, %v376
      %v409 = vadd.f32 %v345, %v377
      %v410 = vadd.f32 %v346, %v378
      %v411 = vadd.f32 %v347, %v379
      %v412 = vadd.f32 %v348, %v380
      %v413 = vadd.f32 %v349, %v381
      %v414 = vadd.f32 %v350, %v382
      %v415 = vadd.f32 %v351, %v383
      %v416 = vadd.f32 %v352, %v384
      %v417 = vadd.f32 %v353, %v385
      %v418 = vadd.f32 %v354, %v386
      %v419 = vadd.f32 %v355, %v387
      %v420 = vadd.f32 %v356, %v388
      %v421 = vadd.f32 %v357, %v389
      %v422 = vadd.f32 %v358, %v390
      %v423 = vadd.f32 %v359, %v391
      %v424 = vadd.f32 %v360, %v392
      %v425 = vadd.f32 %v361, %v393
      %v426 = vadd.f32 %v362, %v394
      %427 = vxpose.xlu0.b32.start [1/16] %v395, 128
      %428 = vxpose.xlu0.b32.cont [2/16] %v396, 128
      %429 = vxpose.xlu0.b32.cont [3/16] %v397, 128
      %430 = vxpose.xlu0.b32.cont [4/16] %v398, 128
      %431 = vxpose.xlu0.b32.cont [5/16] %v399, 128
      %432 = vxpose.xlu0.b32.cont [6/16] %v400, 128
      %433 = vxpose.xlu0.b32.cont [7/16] %v401, 128
      %434 = vxpose.xlu0.b32.cont [8/16] %v402, 128
      %435 = vxpose.xlu0.b32.cont [9/16] %v403, 128
      %436 = vxpose.xlu0.b32.cont [10/16] %v404, 128
      %437 = vxpose.xlu0.b32.cont [11/16] %v405, 128
      %438 = vxpose.xlu0.b32.cont [12/16] %v406, 128
      %439 = vxpose.xlu0.b32.cont [13/16] %v407, 128
      %440 = vxpose.xlu0.b32.cont [14/16] %v408, 128
      %441 = vxpose.xlu0.b32.cont [15/16] %v409, 128
      %442 = vxpose.xlu0.b32.end [16/16] %v410, 128
      %v443 = vpop.trf.xlu0
      %v444 = vpop.trf.xlu0
      %v445 = vpop.trf.xlu0
      %v446 = vpop.trf.xlu0
      %v447 = vpop.trf.xlu0
      %v448 = vpop.trf.xlu0
      %v449 = vpop.trf.xlu0
      %v450 = vpop.trf.xlu0
      %v451 = vpop.trf.xlu0
      %v452 = vpop.trf.xlu0
      %v453 = vpop.trf.xlu0
      %v454 = vpop.trf.xlu0
      %v455 = vpop.trf.xlu0
      %v456 = vpop.trf.xlu0
      %v457 = vpop.trf.xlu0
      %v458 = vpop.trf.xlu0
      %459 = vxpose.xlu0.b32.start [1/16] %v411, 128
      %460 = vxpose.xlu0.b32.cont [2/16] %v412, 128
      %461 = vxpose.xlu0.b32.cont [3/16] %v413, 128
      %462 = vxpose.xlu0.b32.cont [4/16] %v414, 128
      %463 = vxpose.xlu0.b32.cont [5/16] %v415, 128
      %464 = vxpose.xlu0.b32.cont [6/16] %v416, 128
      %465 = vxpose.xlu0.b32.cont [7/16] %v417, 128
      %466 = vxpose.xlu0.b32.cont [8/16] %v418, 128
      %467 = vxpose.xlu0.b32.cont [9/16] %v419, 128
      %468 = vxpose.xlu0.b32.cont [10/16] %v420, 128
      %469 = vxpose.xlu0.b32.cont [11/16] %v421, 128
      %470 = vxpose.xlu0.b32.cont [12/16] %v422, 128
      %471 = vxpose.xlu0.b32.cont [13/16] %v423, 128
      %472 = vxpose.xlu0.b32.cont [14/16] %v424, 128
      %473 = vxpose.xlu0.b32.cont [15/16] %v425, 128
      %474 = vxpose.xlu0.b32.end [16/16] %v426, 128
      %v475 = vpop.trf.xlu0
      %v476 = vpop.trf.xlu0
      %v477 = vpop.trf.xlu0
      %v478 = vpop.trf.xlu0
      %v479 = vpop.trf.xlu0
      %v480 = vpop.trf.xlu0
      %v481 = vpop.trf.xlu0
      %v482 = vpop.trf.xlu0
      %v483 = vpop.trf.xlu0
      %v484 = vpop.trf.xlu0
      %v485 = vpop.trf.xlu0
      %v486 = vpop.trf.xlu0
      %v487 = vpop.trf.xlu0
      %v488 = vpop.trf.xlu0
      %v489 = vpop.trf.xlu0
      %v490 = vpop.trf.xlu0
      %v491 = vmax.f32 %v443, 0.0
      %v492 = vmax.f32 %v475, 0.0
      %v493 = vmax.f32 %v444, 0.0
      %v494 = vmax.f32 %v476, 0.0
      %495 = vst [vmem:[%s257] sm:$0xff] %v491
      %496 = vst [vmem:[%s257 + $0x8] sm:$0xff] %v492
      %497 = vst [vmem:[%s257 + $0x10] sm:$0xff] %v493
      %498 = vst [vmem:[%s257 + $0x18] sm:$0xff] %v494
      %s499 = smul.u32 2, %s20
      %p500 = scmp.lt.s32.totalorder %s19, 1
      %s501 = scalar_select %p500, %s19, 1
      %p502 = scmp.lt.s32.totalorder %s499, 1
      %s503 = scalar_select %p502, %s499, 1
      %s504 = smul.addr %s501, 4
      %s505 = sadd.s32 %s503, %s504
      %s506 = smul.addr %s505, 8
      %s507 = scalar_lea.vmem %s4, %s506
      // Predicated region
      $region37: #{bottleneck_forward.7} parent=35 // pred_check
        %p508 = pneg %p145
      $region38: #{bottleneck_forward.7} parent=35 // pred_check_branch
        %510 = sbr.rel (%p508) target = $region40
      $region39: #{bottleneck_forward.7} parent=35 // pred_region
        %s511 = smul.u32 2, %s20
      $region40: #{bottleneck_forward.7} parent=35 // pred_fallthru
        _
    $region36: #{bottleneck_forward.7} parent=5 // pred_fallthru
      _
    %p512 = scmp.le.s32.totalorder 2, %s10
    // Predicated region
    $region41: #{bottleneck_forward.7} parent=5 // pred_check
      %p513 = pneg %p512
    $region42: #{bottleneck_forward.7} parent=5 // pred_check_branch
      %515 = sbr.rel (%p513) target = $region44
    $region43: #{bottleneck_forward.7} parent=5 // pred_region
      %s516 = ssub.s32 %s10, 2
      // Predicated region
      $region45: #{bottleneck_forward.7} parent=43 // pred_check
        %p517 = pneg %p151
      $region46: #{bottleneck_forward.7} parent=43 // pred_check_branch
        %519 = sbr.rel (%p517) target = $region48
      $region47: #{bottleneck_forward.7} parent=43 // pred_region
        %s520 = smul.u32 2, %s22
        %p521 = scmp.lt.s32.totalorder %s21, 1
        %s522 = scalar_select %p521, %s21, 1
        %p523 = scmp.lt.s32.totalorder %s520, 1
        %s524 = scalar_select %p523, %s520, 1
        %s525 = smul.addr %s522, 4
        %s526 = sadd.s32 %s524, %s525
        %s527 = smul.addr %s526, 8
        %s528 = scalar_lea.vmem %s4, %s527
      $region48: #{bottleneck_forward.7} parent=43 // pred_fallthru
        _
    $region44: #{bottleneck_forward.7} parent=5 // pred_fallthru
      _
  $region6: #{bottleneck_forward.7} parent=0 // loop_footer
    %s14 = sadd.s32 1, %s10
  $region7: #{bottleneck_forward.7} parent=0 // loop_footer_branch
    %9 = sbr.rel target = $region3
  $region8: #{bottleneck_forward.7} parent=0 // loop_exit
    _

// kernel: bottleneck_forward.6
$region0: #{bottleneck_forward.6}
  #allocation0 [shape = 'u32[]', space=smem, size = 0x4, offset = 0x4, fixed_abs, tag = 'smem constant byte address 0x4 - core index']
  #allocation1 [shape = 'u32[72,128]{1,0:T(1,128)}', space=vmem, size = 0x9000, scoped, tag = 'internal scratch']
  %s0 = inlined_call_operand.vmem [shape: f32[512,128], index: 0, kind: input, shape index: {}]
  %s1 = inlined_call_operand.vmem [shape: f32[1,128], index: 1, kind: input, shape index: {}]
  %s2 = inlined_call_operand.vmem [shape: f32[1,128], index: 2, kind: input, shape index: {}]
  %s3 = inlined_call_operand.vmem [shape: f32[128,128], index: 3, kind: input, shape index: {}]
  %s4 = inlined_call_operand.vmem [shape: f32[512,128], index: 4, kind: output, shape index: {0}]
  %s5 = inlined_call_operand.vmem [shape: f32[1,2,128], index: 5, kind: output, shape index: {1}]
  %6 = xla_tuple %s4, %s5
  %s7 = sld [smem:[#allocation0]]
  $region34: #{bottleneck_forward.6} parent=0
    _
  %s9 = ssub.s32 1, %s7
  %s10 = scalar_select 0, %s9, %s7
  // Predicated region
  $region2: #{bottleneck_forward.6} parent=0 // pred_check
    _
  $region3: #{bottleneck_forward.6} parent=0 // pred_check_branch
    %12 = sbr.rel (0) target = $region5
  $region4: #{bottleneck_forward.6} parent=0 // pred_region
    _
  $region5: #{bottleneck_forward.6} parent=0 // pred_fallthru
    _
  // Predicated region
  $region6: #{bottleneck_forward.6} parent=0 // pred_check
    _
  $region7: #{bottleneck_forward.6} parent=0 // pred_check_branch
    %14 = sbr.rel (0) target = $region9
  $region8: #{bottleneck_forward.6} parent=0 // pred_region
    _
  $region9: #{bottleneck_forward.6} parent=0 // pred_fallthru
    _
  // Predicated region
  $region10: #{bottleneck_forward.6} parent=0 // pred_check
    _
  $region11: #{bottleneck_forward.6} parent=0 // pred_check_branch
    %16 = sbr.rel (0) target = $region13
  $region12: #{bottleneck_forward.6} parent=0 // pred_region
    _
  $region13: #{bottleneck_forward.6} parent=0 // pred_fallthru
    _
  // Predicated region
  $region14: #{bottleneck_forward.6} parent=0 // pred_check
    _
  $region15: #{bottleneck_forward.6} parent=0 // pred_check_branch
    %18 = sbr.rel (0) target = $region17
  $region16: #{bottleneck_forward.6} parent=0 // pred_region
    _
  $region17: #{bottleneck_forward.6} parent=0 // pred_fallthru
    _
  %v19 = vld [vmem:[%s0] sm:$0xff]
  %v20 = vld [vmem:[%s0 + $0x8] sm:$0xff]
  %v21 = vld [vmem:[%s0 + $0x10] sm:$0xff]
  %v22 = vld [vmem:[%s0 + $0x18] sm:$0xff]
  %v23 = vld [vmem:[%s0 + $0x20] sm:$0xff]
  %v24 = vld [vmem:[%s0 + $0x28] sm:$0xff]
  %v25 = vld [vmem:[%s0 + $0x30] sm:$0xff]
  %v26 = vld [vmem:[%s0 + $0x38] sm:$0xff]
  %v27 = vld [vmem:[%s0 + $0x40] sm:$0xff]
  %v28 = vld [vmem:[%s0 + $0x48] sm:$0xff]
  %v29 = vld [vmem:[%s0 + $0x50] sm:$0xff]
  %v30 = vld [vmem:[%s0 + $0x58] sm:$0xff]
  %v31 = vld [vmem:[%s0 + $0x60] sm:$0xff]
  %v32 = vld [vmem:[%s0 + $0x68] sm:$0xff]
  %v33 = vld [vmem:[%s0 + $0x70] sm:$0xff]
  %v34 = vld [vmem:[%s0 + $0x78] sm:$0xff]
  %v35 = vld [vmem:[%s0 + $0x80] sm:$0xff]
  %v36 = vld [vmem:[%s0 + $0x88] sm:$0xff]
  %v37 = vld [vmem:[%s0 + $0x90] sm:$0xff]
  %v38 = vld [vmem:[%s0 + $0x98] sm:$0xff]
  %v39 = vld [vmem:[%s0 + $0xa0] sm:$0xff]
  %v40 = vld [vmem:[%s0 + $0xa8] sm:$0xff]
  %v41 = vld [vmem:[%s0 + $0xb0] sm:$0xff]
  %v42 = vld [vmem:[%s0 + $0xb8] sm:$0xff]
  %v43 = vld [vmem:[%s0 + $0xc0] sm:$0xff]
  %v44 = vld [vmem:[%s0 + $0xc8] sm:$0xff]
  %v45 = vld [vmem:[%s0 + $0xd0] sm:$0xff]
  %v46 = vld [vmem:[%s0 + $0xd8] sm:$0xff]
  %v47 = vld [vmem:[%s0 + $0xe0] sm:$0xff]
  %v48 = vld [vmem:[%s0 + $0xe8] sm:$0xff]
  %v49 = vld [vmem:[%s0 + $0xf0] sm:$0xff]
  %v50 = vld [vmem:[%s0 + $0xf8] sm:$0xff]
  %v51 = vld [vmem:[%s0 + $0x100] sm:$0xff]
  %v52 = vld [vmem:[%s0 + $0x108] sm:$0xff]
  %v53 = vld [vmem:[%s0 + $0x110] sm:$0xff]
  %v54 = vld [vmem:[%s0 + $0x118] sm:$0xff]
  %v55 = vld [vmem:[%s0 + $0x120] sm:$0xff]
  %v56 = vld [vmem:[%s0 + $0x128] sm:$0xff]
  %v57 = vld [vmem:[%s0 + $0x130] sm:$0xff]
  %v58 = vld [vmem:[%s0 + $0x138] sm:$0xff]
  %v59 = vld [vmem:[%s0 + $0x140] sm:$0xff]
  %v60 = vld [vmem:[%s0 + $0x148] sm:$0xff]
  %v61 = vld [vmem:[%s0 + $0x150] sm:$0xff]
  %v62 = vld [vmem:[%s0 + $0x158] sm:$0xff]
  %v63 = vld [vmem:[%s0 + $0x160] sm:$0xff]
  %v64 = vld [vmem:[%s0 + $0x168] sm:$0xff]
  %v65 = vld [vmem:[%s0 + $0x170] sm:$0xff]
  %v66 = vld [vmem:[%s0 + $0x178] sm:$0xff]
  %v67 = vld [vmem:[%s0 + $0x180] sm:$0xff]
  %v68 = vld [vmem:[%s0 + $0x188] sm:$0xff]
  %v69 = vld [vmem:[%s0 + $0x190] sm:$0xff]
  %v70 = vld [vmem:[%s0 + $0x198] sm:$0xff]
  %v71 = vld [vmem:[%s0 + $0x1a0] sm:$0xff]
  %v72 = vld [vmem:[%s0 + $0x1a8] sm:$0xff]
  %v73 = vld [vmem:[%s0 + $0x1b0] sm:$0xff]
  %v74 = vld [vmem:[%s0 + $0x1b8] sm:$0xff]
  %v75 = vld [vmem:[%s0 + $0x1c0] sm:$0xff]
  %v76 = vld [vmem:[%s0 + $0x1c8] sm:$0xff]
  %v77 = vld [vmem:[%s0 + $0x1d0] sm:$0xff]
  %v78 = vld [vmem:[%s0 + $0x1d8] sm:$0xff]
  %v79 = vld [vmem:[%s0 + $0x1e0] sm:$0xff]
  %v80 = vld [vmem:[%s0 + $0x1e8] sm:$0xff]
  %v81 = vld [vmem:[%s0 + $0x1f0] sm:$0xff]
  %v82 = vld [vmem:[%s0 + $0x1f8] sm:$0xff]
  %v83 = vld [vmem:[%s1] sm:$0x1]
  %v85 = vperm.slane %v83, 0
  %v87 = vmul.f32 %v19, %v85
  %v88 = vmul.f32 %v20, %v85
  %v89 = vmul.f32 %v21, %v85
  %v90 = vmul.f32 %v22, %v85
  %v91 = vmul.f32 %v23, %v85
  %v92 = vmul.f32 %v24, %v85
  %v93 = vmul.f32 %v25, %v85
  %v94 = vmul.f32 %v26, %v85
  %v95 = vmul.f32 %v27, %v85
  %v96 = vmul.f32 %v28, %v85
  %v97 = vmul.f32 %v29, %v85
  %v98 = vmul.f32 %v30, %v85
  %v99 = vmul.f32 %v31, %v85
  %v100 = vmul.f32 %v32, %v85
  %v101 = vmul.f32 %v33, %v85
  %v102 = vmul.f32 %v34, %v85
  %v103 = vmul.f32 %v35, %v85
  %v104 = vmul.f32 %v36, %v85
  %v105 = vmul.f32 %v37, %v85
  %v106 = vmul.f32 %v38, %v85
  %v107 = vmul.f32 %v39, %v85
  %v108 = vmul.f32 %v40, %v85
  %v109 = vmul.f32 %v41, %v85
  %v110 = vmul.f32 %v42, %v85
  %v111 = vmul.f32 %v43, %v85
  %v112 = vmul.f32 %v44, %v85
  %v113 = vmul.f32 %v45, %v85
  %v114 = vmul.f32 %v46, %v85
  %v115 = vmul.f32 %v47, %v85
  %v116 = vmul.f32 %v48, %v85
  %v117 = vmul.f32 %v49, %v85
  %v118 = vmul.f32 %v50, %v85
  %v119 = vmul.f32 %v51, %v85
  %v120 = vmul.f32 %v52, %v85
  %v121 = vmul.f32 %v53, %v85
  %v122 = vmul.f32 %v54, %v85
  %v123 = vmul.f32 %v55, %v85
  %v124 = vmul.f32 %v56, %v85
  %v125 = vmul.f32 %v57, %v85
  %v126 = vmul.f32 %v58, %v85
  %v127 = vmul.f32 %v59, %v85
  %v128 = vmul.f32 %v60, %v85
  %v129 = vmul.f32 %v61, %v85
  %v130 = vmul.f32 %v62, %v85
  %v131 = vmul.f32 %v63, %v85
  %v132 = vmul.f32 %v64, %v85
  %v133 = vmul.f32 %v65, %v85
  %v134 = vmul.f32 %v66, %v85
  %v135 = vmul.f32 %v67, %v85
  %v136 = vmul.f32 %v68, %v85
  %v137 = vmul.f32 %v69, %v85
  %v138 = vmul.f32 %v70, %v85
  %v139 = vmul.f32 %v71, %v85
  %v140 = vmul.f32 %v72, %v85
  %v141 = vmul.f32 %v73, %v85
  %v142 = vmul.f32 %v74, %v85
  %v143 = vmul.f32 %v75, %v85
  %v144 = vmul.f32 %v76, %v85
  %v145 = vmul.f32 %v77, %v85
  %v146 = vmul.f32 %v78, %v85
  %v147 = vmul.f32 %v79, %v85
  %v148 = vmul.f32 %v80, %v85
  %v149 = vmul.f32 %v81, %v85
  %v150 = vmul.f32 %v82, %v85
  %v151 = vld [vmem:[%s2] sm:$0x1]
  %v153 = vperm.slane %v151, 0
  %v155 = vadd.f32 %v87, %v153
  %v156 = vadd.f32 %v88, %v153
  %v157 = vadd.f32 %v89, %v153
  %v158 = vadd.f32 %v90, %v153
  %v159 = vadd.f32 %v91, %v153
  %v160 = vadd.f32 %v92, %v153
  %v161 = vadd.f32 %v93, %v153
  %v162 = vadd.f32 %v94, %v153
  %v163 = vadd.f32 %v95, %v153
  %v164 = vadd.f32 %v96, %v153
  %v165 = vadd.f32 %v97, %v153
  %v166 = vadd.f32 %v98, %v153
  %v167 = vadd.f32 %v99, %v153
  %v168 = vadd.f32 %v100, %v153
  %v169 = vadd.f32 %v101, %v153
  %v170 = vadd.f32 %v102, %v153
  %v171 = vadd.f32 %v103, %v153
  %v172 = vadd.f32 %v104, %v153
  %v173 = vadd.f32 %v105, %v153
  %v174 = vadd.f32 %v106, %v153
  %v175 = vadd.f32 %v107, %v153
  %v176 = vadd.f32 %v108, %v153
  %v177 = vadd.f32 %v109, %v153
  %v178 = vadd.f32 %v110, %v153
  %v179 = vadd.f32 %v111, %v153
  %v180 = vadd.f32 %v112, %v153
  %v181 = vadd.f32 %v113, %v153
  %v182 = vadd.f32 %v114, %v153
  %v183 = vadd.f32 %v115, %v153
  %v184 = vadd.f32 %v116, %v153
  %v185 = vadd.f32 %v117, %v153
  %v186 = vadd.f32 %v118, %v153
  %v187 = vadd.f32 %v119, %v153
  %v188 = vadd.f32 %v120, %v153
  %v189 = vadd.f32 %v121, %v153
  %v190 = vadd.f32 %v122, %v153
  %v191 = vadd.f32 %v123, %v153
  %v192 = vadd.f32 %v124, %v153
  %v193 = vadd.f32 %v125, %v153
  %v194 = vadd.f32 %v126, %v153
  %v195 = vadd.f32 %v127, %v153
  %v196 = vadd.f32 %v128, %v153
  %v197 = vadd.f32 %v129, %v153
  %v198 = vadd.f32 %v130, %v153
  %v199 = vadd.f32 %v131, %v153
  %v200 = vadd.f32 %v132, %v153
  %v201 = vadd.f32 %v133, %v153
  %v202 = vadd.f32 %v134, %v153
  %v203 = vadd.f32 %v135, %v153
  %v204 = vadd.f32 %v136, %v153
  %v205 = vadd.f32 %v137, %v153
  %v206 = vadd.f32 %v138, %v153
  %v207 = vadd.f32 %v139, %v153
  %v208 = vadd.f32 %v140, %v153
  %v209 = vadd.f32 %v141, %v153
  %v210 = vadd.f32 %v142, %v153
  %v211 = vadd.f32 %v143, %v153
  %v212 = vadd.f32 %v144, %v153
  %v213 = vadd.f32 %v145, %v153
  %v214 = vadd.f32 %v146, %v153
  %v215 = vadd.f32 %v147, %v153
  %v216 = vadd.f32 %v148, %v153
  %v217 = vadd.f32 %v149, %v153
  %v218 = vadd.f32 %v150, %v153
  %v219 = vmax.f32 %v155, 0.0
  %v220 = vmax.f32 %v156, 0.0
  %v221 = vmax.f32 %v157, 0.0
  %v222 = vmax.f32 %v158, 0.0
  %v223 = vmax.f32 %v159, 0.0
  %v224 = vmax.f32 %v160, 0.0
  %v225 = vmax.f32 %v161, 0.0
  %v226 = vmax.f32 %v162, 0.0
  %v227 = vmax.f32 %v163, 0.0
  %v228 = vmax.f32 %v164, 0.0
  %v229 = vmax.f32 %v165, 0.0
  %v230 = vmax.f32 %v166, 0.0
  %v231 = vmax.f32 %v167, 0.0
  %v232 = vmax.f32 %v168, 0.0
  %v233 = vmax.f32 %v169, 0.0
  %v234 = vmax.f32 %v170, 0.0
  %v235 = vmax.f32 %v171, 0.0
  %v236 = vmax.f32 %v172, 0.0
  %v237 = vmax.f32 %v173, 0.0
  %v238 = vmax.f32 %v174, 0.0
  %v239 = vmax.f32 %v175, 0.0
  %v240 = vmax.f32 %v176, 0.0
  %v241 = vmax.f32 %v177, 0.0
  %v242 = vmax.f32 %v178, 0.0
  %v243 = vmax.f32 %v179, 0.0
  %v244 = vmax.f32 %v180, 0.0
  %v245 = vmax.f32 %v181, 0.0
  %v246 = vmax.f32 %v182, 0.0
  %v247 = vmax.f32 %v183, 0.0
  %v248 = vmax.f32 %v184, 0.0
  %v249 = vmax.f32 %v185, 0.0
  %v250 = vmax.f32 %v186, 0.0
  %v251 = vmax.f32 %v187, 0.0
  %v252 = vmax.f32 %v188, 0.0
  %v253 = vmax.f32 %v189, 0.0
  %v254 = vmax.f32 %v190, 0.0
  %v255 = vmax.f32 %v191, 0.0
  %v256 = vmax.f32 %v192, 0.0
  %v257 = vmax.f32 %v193, 0.0
  %v258 = vmax.f32 %v194, 0.0
  %v259 = vmax.f32 %v195, 0.0
  %v260 = vmax.f32 %v196, 0.0
  %v261 = vmax.f32 %v197, 0.0
  %v262 = vmax.f32 %v198, 0.0
  %v263 = vmax.f32 %v199, 0.0
  %v264 = vmax.f32 %v200, 0.0
  %v265 = vmax.f32 %v201, 0.0
  %v266 = vmax.f32 %v202, 0.0
  %v267 = vmax.f32 %v203, 0.0
  %v268 = vmax.f32 %v204, 0.0
  %v269 = vmax.f32 %v205, 0.0
  %v270 = vmax.f32 %v206, 0.0
  %v271 = vmax.f32 %v207, 0.0
  %v272 = vmax.f32 %v208, 0.0
  %v273 = vmax.f32 %v209, 0.0
  %v274 = vmax.f32 %v210, 0.0
  %v275 = vmax.f32 %v211, 0.0
  %v276 = vmax.f32 %v212, 0.0
  %v277 = vmax.f32 %v213, 0.0
  %v278 = vmax.f32 %v214, 0.0
  %v279 = vmax.f32 %v215, 0.0
  %v280 = vmax.f32 %v216, 0.0
  %v281 = vmax.f32 %v217, 0.0
  %v282 = vmax.f32 %v218, 0.0
  %v283 = vld [vmem:[%s3] sm:$0xff]
  %v284 = vld [vmem:[%s3 + $0x8] sm:$0xff]
  %v285 = vld [vmem:[%s3 + $0x10] sm:$0xff]
  %v286 = vld [vmem:[%s3 + $0x18] sm:$0xff]
  %v287 = vld [vmem:[%s3 + $0x20] sm:$0xff]
  %v288 = vld [vmem:[%s3 + $0x28] sm:$0xff]
  %v289 = vld [vmem:[%s3 + $0x30] sm:$0xff]
  %v290 = vld [vmem:[%s3 + $0x38] sm:$0xff]
  %v291 = vld [vmem:[%s3 + $0x40] sm:$0xff]
  %v292 = vld [vmem:[%s3 + $0x48] sm:$0xff]
  %v293 = vld [vmem:[%s3 + $0x50] sm:$0xff]
  %v294 = vld [vmem:[%s3 + $0x58] sm:$0xff]
  %v295 = vld [vmem:[%s3 + $0x60] sm:$0xff]
  %v296 = vld [vmem:[%s3 + $0x68] sm:$0xff]
  %v297 = vld [vmem:[%s3 + $0x70] sm:$0xff]
  %v298 = vld [vmem:[%s3 + $0x78] sm:$0xff]
  %299 = vmatpush.msra.mxu0 %v298
  %300 = vmatpush.msra.mxu0 %v297
  %301 = vmatpush.msra.mxu0 %v296
  %302 = vmatpush.msra.mxu0 %v295
  %303 = vmatpush.msra.mxu0 %v294
  %304 = vmatpush.msra.mxu0 %v293
  %305 = vmatpush.msra.mxu0 %v292
  %306 = vmatpush.msra.mxu0 %v291
  %307 = vmatpush.msra.mxu0 %v290
  %308 = vmatpush.msra.mxu0 %v289
  %309 = vmatpush.msra.mxu0 %v288
  %310 = vmatpush.msra.mxu0 %v287
  %311 = vmatpush.msra.mxu0 %v286
  %312 = vmatpush.msra.mxu0 %v285
  %313 = vmatpush.msra.mxu0 %v284
  %314 = vmatpush.msra.mxu0 %v283
  %315 = vmatmul.f32.gmra.mxu0 %v219
  %v316 = vpop.f32.mrf.mxu0
  %v317 = vadd.f32 0.0, %v316
  %318 = vmatmul.f32.gmra.mxu0 %v220
  %v319 = vpop.f32.mrf.mxu0
  %v320 = vadd.f32 0.0, %v319
  %321 = vmatmul.f32.gmra.mxu0 %v221
  %v322 = vpop.f32.mrf.mxu0
  %v323 = vadd.f32 0.0, %v322
  %324 = vmatmul.f32.gmra.mxu0 %v222
  %v325 = vpop.f32.mrf.mxu0
  %v326 = vadd.f32 0.0, %v325
  %327 = vmatmul.f32.gmra.mxu0 %v223
  %v328 = vpop.f32.mrf.mxu0
  %v329 = vadd.f32 0.0, %v328
  %330 = vmatmul.f32.gmra.mxu0 %v224
  %v331 = vpop.f32.mrf.mxu0
  %v332 = vadd.f32 0.0, %v331
  %333 = vmatmul.f32.gmra.mxu0 %v225
  %v334 = vpop.f32.mrf.mxu0
  %v335 = vadd.f32 0.0, %v334
  %336 = vmatmul.f32.gmra.mxu0 %v226
  %v337 = vpop.f32.mrf.mxu0
  %v338 = vadd.f32 0.0, %v337
  %339 = vmatmul.f32.gmra.mxu0 %v227
  %v340 = vpop.f32.mrf.mxu0
  %v341 = vadd.f32 0.0, %v340
  %342 = vmatmul.f32.gmra.mxu0 %v228
  %v343 = vpop.f32.mrf.mxu0
  %v344 = vadd.f32 0.0, %v343
  %345 = vmatmul.f32.gmra.mxu0 %v229
  %v346 = vpop.f32.mrf.mxu0
  %v347 = vadd.f32 0.0, %v346
  %348 = vmatmul.f32.gmra.mxu0 %v230
  %v349 = vpop.f32.mrf.mxu0
  %v350 = vadd.f32 0.0, %v349
  %351 = vmatmul.f32.gmra.mxu0 %v231
  %v352 = vpop.f32.mrf.mxu0
  %v353 = vadd.f32 0.0, %v352
  %354 = vmatmul.f32.gmra.mxu0 %v232
  %v355 = vpop.f32.mrf.mxu0
  %v356 = vadd.f32 0.0, %v355
  %357 = vmatmul.f32.gmra.mxu0 %v233
  %v358 = vpop.f32.mrf.mxu0
  %v359 = vadd.f32 0.0, %v358
  %360 = vmatmul.f32.gmra.mxu0 %v234
  %v361 = vpop.f32.mrf.mxu0
  %v362 = vadd.f32 0.0, %v361
  %363 = vmatmul.f32.gmra.mxu0 %v235
  %v364 = vpop.f32.mrf.mxu0
  %v365 = vadd.f32 0.0, %v364
  %366 = vmatmul.f32.gmra.mxu0 %v236
  %v367 = vpop.f32.mrf.mxu0
  %v368 = vadd.f32 0.0, %v367
  %369 = vmatmul.f32.gmra.mxu0 %v237
  %v370 = vpop.f32.mrf.mxu0
  %v371 = vadd.f32 0.0, %v370
  %372 = vmatmul.f32.gmra.mxu0 %v238
  %v373 = vpop.f32.mrf.mxu0
  %v374 = vadd.f32 0.0, %v373
  %375 = vmatmul.f32.gmra.mxu0 %v239
  %v376 = vpop.f32.mrf.mxu0
  %v377 = vadd.f32 0.0, %v376
  %378 = vmatmul.f32.gmra.mxu0 %v240
  %v379 = vpop.f32.mrf.mxu0
  %v380 = vadd.f32 0.0, %v379
  %381 = vmatmul.f32.gmra.mxu0 %v241
  %v382 = vpop.f32.mrf.mxu0
  %v383 = vadd.f32 0.0, %v382
  %384 = vmatmul.f32.gmra.mxu0 %v242
  %v385 = vpop.f32.mrf.mxu0
  %v386 = vadd.f32 0.0, %v385
  %387 = vmatmul.f32.gmra.mxu0 %v243
  %v388 = vpop.f32.mrf.mxu0
  %v389 = vadd.f32 0.0, %v388
  %390 = vmatmul.f32.gmra.mxu0 %v244
  %v391 = vpop.f32.mrf.mxu0
  %v392 = vadd.f32 0.0, %v391
  %393 = vmatmul.f32.gmra.mxu0 %v245
  %v394 = vpop.f32.mrf.mxu0
  %v395 = vadd.f32 0.0, %v394
  %396 = vmatmul.f32.gmra.mxu0 %v246
  %v397 = vpop.f32.mrf.mxu0
  %v398 = vadd.f32 0.0, %v397
  %399 = vmatmul.f32.gmra.mxu0 %v247
  %v400 = vpop.f32.mrf.mxu0
  %v401 = vadd.f32 0.0, %v400
  %402 = vmatmul.f32.gmra.mxu0 %v248
  %v403 = vpop.f32.mrf.mxu0
  %v404 = vadd.f32 0.0, %v403
  %405 = vmatmul.f32.gmra.mxu0 %v249
  %v406 = vpop.f32.mrf.mxu0
  %v407 = vadd.f32 0.0, %v406
  %408 = vmatmul.f32.gmra.mxu0 %v250
  %v409 = vpop.f32.mrf.mxu0
  %v410 = vadd.f32 0.0, %v409
  %411 = vmatmul.f32.gmra.mxu0 %v251
  %v412 = vpop.f32.mrf.mxu0
  %v413 = vadd.f32 0.0, %v412
  %414 = vmatmul.f32.gmra.mxu0 %v252
  %v415 = vpop.f32.mrf.mxu0
  %v416 = vadd.f32 0.0, %v415
  %417 = vmatmul.f32.gmra.mxu0 %v253
  %v418 = vpop.f32.mrf.mxu0
  %v419 = vadd.f32 0.0, %v418
  %420 = vmatmul.f32.gmra.mxu0 %v254
  %v421 = vpop.f32.mrf.mxu0
  %v422 = vadd.f32 0.0, %v421
  %423 = vmatmul.f32.gmra.mxu0 %v255
  %v424 = vpop.f32.mrf.mxu0
  %v425 = vadd.f32 0.0, %v424
  %426 = vmatmul.f32.gmra.mxu0 %v256
  %v427 = vpop.f32.mrf.mxu0
  %v428 = vadd.f32 0.0, %v427
  %429 = vmatmul.f32.gmra.mxu0 %v257
  %v430 = vpop.f32.mrf.mxu0
  %v431 = vadd.f32 0.0, %v430
  %432 = vmatmul.f32.gmra.mxu0 %v258
  %v433 = vpop.f32.mrf.mxu0
  %v434 = vadd.f32 0.0, %v433
  %435 = vmatmul.f32.gmra.mxu0 %v259
  %v436 = vpop.f32.mrf.mxu0
  %v437 = vadd.f32 0.0, %v436
  %438 = vmatmul.f32.gmra.mxu0 %v260
  %v439 = vpop.f32.mrf.mxu0
  %v440 = vadd.f32 0.0, %v439
  %441 = vmatmul.f32.gmra.mxu0 %v261
  %v442 = vpop.f32.mrf.mxu0
  %v443 = vadd.f32 0.0, %v442
  %444 = vmatmul.f32.gmra.mxu0 %v262
  %v445 = vpop.f32.mrf.mxu0
  %v446 = vadd.f32 0.0, %v445
  %447 = vmatmul.f32.gmra.mxu0 %v263
  %v448 = vpop.f32.mrf.mxu0
  %v449 = vadd.f32 0.0, %v448
  %450 = vmatmul.f32.gmra.mxu0 %v264
  %v451 = vpop.f32.mrf.mxu0
  %v452 = vadd.f32 0.0, %v451
  %453 = vmatmul.f32.gmra.mxu0 %v265
  %v454 = vpop.f32.mrf.mxu0
  %v455 = vadd.f32 0.0, %v454
  %456 = vmatmul.f32.gmra.mxu0 %v266
  %v457 = vpop.f32.mrf.mxu0
  %v458 = vadd.f32 0.0, %v457
  %459 = vmatmul.f32.gmra.mxu0 %v267
  %v460 = vpop.f32.mrf.mxu0
  %v461 = vadd.f32 0.0, %v460
  %462 = vmatmul.f32.gmra.mxu0 %v268
  %v463 = vpop.f32.mrf.mxu0
  %v464 = vadd.f32 0.0, %v463
  %465 = vmatmul.f32.gmra.mxu0 %v269
  %v466 = vpop.f32.mrf.mxu0
  %v467 = vadd.f32 0.0, %v466
  %468 = vmatmul.f32.gmra.mxu0 %v270
  %v469 = vpop.f32.mrf.mxu0
  %v470 = vadd.f32 0.0, %v469
  %471 = vmatmul.f32.gmra.mxu0 %v271
  %v472 = vpop.f32.mrf.mxu0
  %v473 = vadd.f32 0.0, %v472
  %474 = vmatmul.f32.gmra.mxu0 %v272
  %v475 = vpop.f32.mrf.mxu0
  %v476 = vadd.f32 0.0, %v475
  %477 = vmatmul.f32.gmra.mxu0 %v273
  %v478 = vpop.f32.mrf.mxu0
  %v479 = vadd.f32 0.0, %v478
  %480 = vmatmul.f32.gmra.mxu0 %v274
  %v481 = vpop.f32.mrf.mxu0
  %v482 = vadd.f32 0.0, %v481
  %483 = vmatmul.f32.gmra.mxu0 %v275
  %v484 = vpop.f32.mrf.mxu0
  %v485 = vadd.f32 0.0, %v484
  %486 = vmatmul.f32.gmra.mxu0 %v276
  %v487 = vpop.f32.mrf.mxu0
  %v488 = vadd.f32 0.0, %v487
  %489 = vmatmul.f32.gmra.mxu0 %v277
  %v490 = vpop.f32.mrf.mxu0
  %v491 = vadd.f32 0.0, %v490
  %492 = vmatmul.f32.gmra.mxu0 %v278
  %v493 = vpop.f32.mrf.mxu0
  %v494 = vadd.f32 0.0, %v493
  %495 = vmatmul.f32.gmra.mxu0 %v279
  %v496 = vpop.f32.mrf.mxu0
  %v497 = vadd.f32 0.0, %v496
  %498 = vmatmul.f32.gmra.mxu0 %v280
  %v499 = vpop.f32.mrf.mxu0
  %v500 = vadd.f32 0.0, %v499
  %501 = vmatmul.f32.gmra.mxu0 %v281
  %v502 = vpop.f32.mrf.mxu0
  %v503 = vadd.f32 0.0, %v502
  %504 = vmatmul.f32.gmra.mxu0 %v282
  %v505 = vpop.f32.mrf.mxu0
  %v506 = vadd.f32 0.0, %v505
  %507 = vdwg.mxu0
  %508 = vst [vmem:[%s4] sm:$0xff] %v317
  %509 = vst [vmem:[%s4 + $0x8] sm:$0xff] %v320
  %510 = vst [vmem:[%s4 + $0x10] sm:$0xff] %v323
  %511 = vst [vmem:[%s4 + $0x18] sm:$0xff] %v326
  %512 = vst [vmem:[%s4 + $0x20] sm:$0xff] %v329
  %513 = vst [vmem:[%s4 + $0x28] sm:$0xff] %v332
  %514 = vst [vmem:[%s4 + $0x30] sm:$0xff] %v335
  %515 = vst [vmem:[%s4 + $0x38] sm:$0xff] %v338
  %516 = vst [vmem:[%s4 + $0x40] sm:$0xff] %v341
  %517 = vst [vmem:[%s4 + $0x48] sm:$0xff] %v344
  %518 = vst [vmem:[%s4 + $0x50] sm:$0xff] %v347
  %519 = vst [vmem:[%s4 + $0x58] sm:$0xff] %v350
  %520 = vst [vmem:[%s4 + $0x60] sm:$0xff] %v353
  %521 = vst [vmem:[%s4 + $0x68] sm:$0xff] %v356
  %522 = vst [vmem:[%s4 + $0x70] sm:$0xff] %v359
  %523 = vst [vmem:[%s4 + $0x78] sm:$0xff] %v362
  %524 = vst [vmem:[%s4 + $0x80] sm:$0xff] %v365
  %525 = vst [vmem:[%s4 + $0x88] sm:$0xff] %v368
  %526 = vst [vmem:[%s4 + $0x90] sm:$0xff] %v371
  %527 = vst [vmem:[%s4 + $0x98] sm:$0xff] %v374
  %528 = vst [vmem:[%s4 + $0xa0] sm:$0xff] %v377
  %529 = vst [vmem:[%s4 + $0xa8] sm:$0xff] %v380
  %530 = vst [vmem:[%s4 + $0xb0] sm:$0xff] %v383
  %531 = vst [vmem:[%s4 + $0xb8] sm:$0xff] %v386
  %532 = vst [vmem:[%s4 + $0xc0] sm:$0xff] %v389
  %533 = vst [vmem:[%s4 + $0xc8] sm:$0xff] %v392
  %534 = vst [vmem:[%s4 + $0xd0] sm:$0xff] %v395
  %535 = vst [vmem:[%s4 + $0xd8] sm:$0xff] %v398
  %536 = vst [vmem:[%s4 + $0xe0] sm:$0xff] %v401
  %537 = vst [vmem:[%s4 + $0xe8] sm:$0xff] %v404
  %538 = vst [vmem:[%s4 + $0xf0] sm:$0xff] %v407
  %539 = vst [vmem:[%s4 + $0xf8] sm:$0xff] %v410
  %540 = vst [vmem:[%s4 + $0x100] sm:$0xff] %v413
  %541 = vst [vmem:[%s4 + $0x108] sm:$0xff] %v416
  %542 = vst [vmem:[%s4 + $0x110] sm:$0xff] %v419
  %543 = vst [vmem:[%s4 + $0x118] sm:$0xff] %v422
  %544 = vst [vmem:[%s4 + $0x120] sm:$0xff] %v425
  %545 = vst [vmem:[%s4 + $0x128] sm:$0xff] %v428
  %546 = vst [vmem:[%s4 + $0x130] sm:$0xff] %v431
  %547 = vst [vmem:[%s4 + $0x138] sm:$0xff] %v434
  %548 = vst [vmem:[%s4 + $0x140] sm:$0xff] %v437
  %549 = vst [vmem:[%s4 + $0x148] sm:$0xff] %v440
  %550 = vst [vmem:[%s4 + $0x150] sm:$0xff] %v443
  %551 = vst [vmem:[%s4 + $0x158] sm:$0xff] %v446
  %552 = vst [vmem:[%s4 + $0x160] sm:$0xff] %v449
  %553 = vst [vmem:[%s4 + $0x168] sm:$0xff] %v452
  %554 = vst [vmem:[%s4 + $0x170] sm:$0xff] %v455
  %555 = vst [vmem:[%s4 + $0x178] sm:$0xff] %v458
  %556 = vst [vmem:[%s4 + $0x180] sm:$0xff] %v461
  %557 = vst [vmem:[%s4 + $0x188] sm:$0xff] %v464
  %558 = vst [vmem:[%s4 + $0x190] sm:$0xff] %v467
  %559 = vst [vmem:[%s4 + $0x198] sm:$0xff] %v470
  %560 = vst [vmem:[%s4 + $0x1a0] sm:$0xff] %v473
  %561 = vst [vmem:[%s4 + $0x1a8] sm:$0xff] %v476
  %562 = vst [vmem:[%s4 + $0x1b0] sm:$0xff] %v479
  %563 = vst [vmem:[%s4 + $0x1b8] sm:$0xff] %v482
  %564 = vst [vmem:[%s4 + $0x1c0] sm:$0xff] %v485
  %565 = vst [vmem:[%s4 + $0x1c8] sm:$0xff] %v488
  %566 = vst [vmem:[%s4 + $0x1d0] sm:$0xff] %v491
  %567 = vst [vmem:[%s4 + $0x1d8] sm:$0xff] %v494
  %568 = vst [vmem:[%s4 + $0x1e0] sm:$0xff] %v497
  %569 = vst [vmem:[%s4 + $0x1e8] sm:$0xff] %v500
  %570 = vst [vmem:[%s4 + $0x1f0] sm:$0xff] %v503
  %571 = vst [vmem:[%s4 + $0x1f8] sm:$0xff] %v506
  %v572 = vadd.f32 %v317, %v320
  %v573 = vadd.f32 %v572, %v323
  %v574 = vadd.f32 %v573, %v326
  %v575 = vadd.f32 %v574, %v329
  %v576 = vadd.f32 %v575, %v332
  %v577 = vadd.f32 %v576, %v335
  %v578 = vadd.f32 %v577, %v338
  %v579 = vadd.f32 %v578, %v341
  %v580 = vadd.f32 %v579, %v344
  %v581 = vadd.f32 %v580, %v347
  %v582 = vadd.f32 %v581, %v350
  %v583 = vadd.f32 %v582, %v353
  %v584 = vadd.f32 %v583, %v356
  %v585 = vadd.f32 %v584, %v359
  %v586 = vadd.f32 %v585, %v362
  %v587 = vadd.f32 %v586, %v365
  %v588 = vadd.f32 %v587, %v368
  %v589 = vadd.f32 %v588, %v371
  %v590 = vadd.f32 %v589, %v374
  %v591 = vadd.f32 %v590, %v377
  %v592 = vadd.f32 %v591, %v380
  %v593 = vadd.f32 %v592, %v383
  %v594 = vadd.f32 %v593, %v386
  %v595 = vadd.f32 %v594, %v389
  %v596 = vadd.f32 %v595, %v392
  %v597 = vadd.f32 %v596, %v395
  %v598 = vadd.f32 %v597, %v398
  %v599 = vadd.f32 %v598, %v401
  %v600 = vadd.f32 %v599, %v404
  %v601 = vadd.f32 %v600, %v407
  %v602 = vadd.f32 %v601, %v410
  %v603 = vadd.f32 %v602, %v413
  %v604 = vadd.f32 %v603, %v416
  %v605 = vadd.f32 %v604, %v419
  %v606 = vadd.f32 %v605, %v422
  %v607 = vadd.f32 %v606, %v425
  %v608 = vadd.f32 %v607, %v428
  %v609 = vadd.f32 %v608, %v431
  %v610 = vadd.f32 %v609, %v434
  %v611 = vadd.f32 %v610, %v437
  %v612 = vadd.f32 %v611, %v440
  %v613 = vadd.f32 %v612, %v443
  %v614 = vadd.f32 %v613, %v446
  %v615 = vadd.f32 %v614, %v449
  %v616 = vadd.f32 %v615, %v452
  %v617 = vadd.f32 %v616, %v455
  %v618 = vadd.f32 %v617, %v458
  %v619 = vadd.f32 %v618, %v461
  %v620 = vadd.f32 %v619, %v464
  %v621 = vadd.f32 %v620, %v467
  %v622 = vadd.f32 %v621, %v470
  %v623 = vadd.f32 %v622, %v473
  %v624 = vadd.f32 %v623, %v476
  %v625 = vadd.f32 %v624, %v479
  %v626 = vadd.f32 %v625, %v482
  %v627 = vadd.f32 %v626, %v485
  %v628 = vadd.f32 %v627, %v488
  %v629 = vadd.f32 %v628, %v491
  %v630 = vadd.f32 %v629, %v494
  %v631 = vadd.f32 %v630, %v497
  %v632 = vadd.f32 %v631, %v500
  %v633 = vadd.f32 %v632, %v503
  %v634 = vadd.f32 %v633, %v506
  %v635 = vrot.slane %v634, 4
  %v636 = vadd.f32 %v634, %v635
  %v637 = vrot.slane %v636, 2
  %v638 = vadd.f32 %v636, %v637
  %v639 = vrot.slane %v638, 1
  %v640 = vadd.f32 %v638, %v639
  %v641 = vmul.f32 %v317, %v317
  %v642 = vmul.f32 %v320, %v320
  %v643 = vmul.f32 %v323, %v323
  %v644 = vmul.f32 %v326, %v326
  %v645 = vmul.f32 %v329, %v329
  %v646 = vmul.f32 %v332, %v332
  %v647 = vmul.f32 %v335, %v335
  %v648 = vmul.f32 %v338, %v338
  %v649 = vmul.f32 %v341, %v341
  %v650 = vmul.f32 %v344, %v344
  %v651 = vmul.f32 %v347, %v347
  %v652 = vmul.f32 %v350, %v350
  %v653 = vmul.f32 %v353, %v353
  %v654 = vmul.f32 %v356, %v356
  %v655 = vmul.f32 %v359, %v359
  %v656 = vmul.f32 %v362, %v362
  %v657 = vmul.f32 %v365, %v365
  %v658 = vmul.f32 %v368, %v368
  %v659 = vmul.f32 %v371, %v371
  %v660 = vmul.f32 %v374, %v374
  %v661 = vmul.f32 %v377, %v377
  %v662 = vmul.f32 %v380, %v380
  %v663 = vmul.f32 %v383, %v383
  %v664 = vmul.f32 %v386, %v386
  %v665 = vmul.f32 %v389, %v389
  %v666 = vmul.f32 %v392, %v392
  %v667 = vmul.f32 %v395, %v395
  %v668 = vmul.f32 %v398, %v398
  %v669 = vmul.f32 %v401, %v401
  %v670 = vmul.f32 %v404, %v404
  %v671 = vmul.f32 %v407, %v407
  %v672 = vmul.f32 %v410, %v410
  %v673 = vmul.f32 %v413, %v413
  %v674 = vmul.f32 %v416, %v416
  %v675 = vmul.f32 %v419, %v419
  %v676 = vmul.f32 %v422, %v422
  %v677 = vmul.f32 %v425, %v425
  %v678 = vmul.f32 %v428, %v428
  %v679 = vmul.f32 %v431, %v431
  %v680 = vmul.f32 %v434, %v434
  %v681 = vmul.f32 %v437, %v437
  %v682 = vmul.f32 %v440, %v440
  %v683 = vmul.f32 %v443, %v443
  %v684 = vmul.f32 %v446, %v446
  %v685 = vmul.f32 %v449, %v449
  %v686 = vmul.f32 %v452, %v452
  %v687 = vmul.f32 %v455, %v455
  %v688 = vmul.f32 %v458, %v458
  %v689 = vmul.f32 %v461, %v461
  %v690 = vmul.f32 %v464, %v464
  %v691 = vmul.f32 %v467, %v467
  %v692 = vmul.f32 %v470, %v470
  %v693 = vmul.f32 %v473, %v473
  %v694 = vmul.f32 %v476, %v476
  %v695 = vmul.f32 %v479, %v479
  %v696 = vmul.f32 %v482, %v482
  %v697 = vmul.f32 %v485, %v485
  %v698 = vmul.f32 %v488, %v488
  %v699 = vmul.f32 %v491, %v491
  %v700 = vmul.f32 %v494, %v494
  %v701 = vmul.f32 %v497, %v497
  %v702 = vmul.f32 %v500, %v500
  %v703 = vmul.f32 %v503, %v503
  %v704 = vmul.f32 %v506, %v506
  %v705 = vadd.f32 %v641, %v642
  %v706 = vadd.f32 %v705, %v643
  %v707 = vadd.f32 %v706, %v644
  %v708 = vadd.f32 %v707, %v645
  %v709 = vadd.f32 %v708, %v646
  %v710 = vadd.f32 %v709, %v647
  %v711 = vadd.f32 %v710, %v648
  %v712 = vadd.f32 %v711, %v649
  %v713 = vadd.f32 %v712, %v650
  %v714 = vadd.f32 %v713, %v651
  %v715 = vadd.f32 %v714, %v652
  %v716 = vadd.f32 %v715, %v653
  %v717 = vadd.f32 %v716, %v654
  %v718 = vadd.f32 %v717, %v655
  %v719 = vadd.f32 %v718, %v656
  %v720 = vadd.f32 %v719, %v657
  %v721 = vadd.f32 %v720, %v658
  %v722 = vadd.f32 %v721, %v659
  %v723 = vadd.f32 %v722, %v660
  %v724 = vadd.f32 %v723, %v661
  %v725 = vadd.f32 %v724, %v662
  %v726 = vadd.f32 %v725, %v663
  %v727 = vadd.f32 %v726, %v664
  %v728 = vadd.f32 %v727, %v665
  %v729 = vadd.f32 %v728, %v666
  %v730 = vadd.f32 %v729, %v667
  %v731 = vadd.f32 %v730, %v668
  %v732 = vadd.f32 %v731, %v669
  %v733 = vadd.f32 %v732, %v670
  %v734 = vadd.f32 %v733, %v671
  %v735 = vadd.f32 %v734, %v672
  %v736 = vadd.f32 %v735, %v673
  %v737 = vadd.f32 %v736, %v674
  %v738 = vadd.f32 %v737, %v675
  %v739 = vadd.f32 %v738, %v676
  %v740 = vadd.f32 %v739, %v677
  %v741 = vadd.f32 %v740, %v678
  %v742 = vadd.f32 %v741, %v679
  %v743 = vadd.f32 %v742, %v680
  %v744 = vadd.f32 %v743, %v681
  %v745 = vadd.f32 %v744, %v682
  %v746 = vadd.f32 %v745, %v683
  %v747 = vadd.f32 %v746, %v684
  %v748 = vadd.f32 %v747, %v685
  %v749 = vadd.f32 %v748, %v686
  %v750 = vadd.f32 %v749, %v687
  %v751 = vadd.f32 %v750, %v688
  %v752 = vadd.f32 %v751, %v689
  %v753 = vadd.f32 %v752, %v690
  %v754 = vadd.f32 %v753, %v691
  %v755 = vadd.f32 %v754, %v692
  %v756 = vadd.f32 %v755, %v693
  %v757 = vadd.f32 %v756, %v694
  %v758 = vadd.f32 %v757, %v695
  %v759 = vadd.f32 %v758, %v696
  %v760 = vadd.f32 %v759, %v697
  %v761 = vadd.f32 %v760, %v698
  %v762 = vadd.f32 %v761, %v699
  %v763 = vadd.f32 %v762, %v700
  %v764 = vadd.f32 %v763, %v701
  %v765 = vadd.f32 %v764, %v702
  %v766 = vadd.f32 %v765, %v703
  %v767 = vadd.f32 %v766, %v704
  %v768 = vrot.slane %v767, 4
  %v769 = vadd.f32 %v767, %v768
  %v770 = vrot.slane %v769, 2
  %v771 = vadd.f32 %v769, %v770
  %v772 = vrot.slane %v771, 1
  %v773 = vadd.f32 %v771, %v772
  %vm774 = vcmask 1040384
  %v775 = vsel %vm774, %v640, %v773
  %776 = vst [vmem:[%s5] sm:$0x3] %v775
  // Predicated region
  $region18: #{bottleneck_forward.6} parent=0 // pred_check
    _
  $region19: #{bottleneck_forward.6} parent=0 // pred_check_branch
    %778 = sbr.rel (0) target = $region21
  $region20: #{bottleneck_forward.6} parent=0 // pred_region
    _
  $region21: #{bottleneck_forward.6} parent=0 // pred_fallthru
    _
  // Predicated region
  $region22: #{bottleneck_forward.6} parent=0 // pred_check
    _
  $region23: #{bottleneck_forward.6} parent=0 // pred_check_branch
    %780 = sbr.rel (0) target = $region25
  $region24: #{bottleneck_forward.6} parent=0 // pred_region
    _
  $region25: #{bottleneck_forward.6} parent=0 // pred_fallthru
    _
  // Predicated region
  $region26: #{bottleneck_forward.6} parent=0 // pred_check
    _
  $region27: #{bottleneck_forward.6} parent=0 // pred_check_branch
    %782 = sbr.rel (0) target = $region29
  $region28: #{bottleneck_forward.6} parent=0 // pred_region
    _
  $region29: #{bottleneck_forward.6} parent=0 // pred_fallthru
    _
  // Predicated region
  $region30: #{bottleneck_forward.6} parent=0 // pred_check
    _
  $region31: #{bottleneck_forward.6} parent=0 // pred_check_branch
    %784 = sbr.rel (0) target = $region33
  $region32: #{bottleneck_forward.6} parent=0 // pred_region
    _
  $region33: #{bottleneck_forward.6} parent=0 // pred_fallthru
    _

// kernel: bottleneck_forward.5
$region0: #{bottleneck_forward.5}
  #allocation0 [shape = 'u32[]', space=smem, size = 0x4, offset = 0x4, fixed_abs, tag = 'smem constant byte address 0x4 - core index']
  #allocation1 [shape = 'u32[72,128]{1,0:T(1,128)}', space=vmem, size = 0x9000, scoped, tag = 'internal scratch']
  %s0 = inlined_call_operand.vmem [shape: f32[32,16,128], index: 0, kind: input, shape index: {}, may-alias: {0,1,2}]
  %s1 = inlined_call_operand.vmem [shape: f32[32,16,128], index: 1, kind: input, shape index: {}, may-alias: {0,1,2}]
  %s2 = inlined_call_operand.vmem [shape: f32[32,16,128], index: 2, kind: input, shape index: {}, may-alias: {0,1,2}]
  %s3 = inlined_call_operand.vmem [shape: f32[1,128], index: 3, kind: input, shape index: {}]
  %s4 = inlined_call_operand.vmem [shape: f32[1,128], index: 4, kind: input, shape index: {}]
  %s5 = inlined_call_operand.vmem [shape: f32[3,3,128,128], index: 5, kind: input, shape index: {}]
  %s6 = inlined_call_operand.vmem [shape: f32[32,16,128], index: 6, kind: output, shape index: {0}]
  %s7 = inlined_call_operand.vmem [shape: f32[2,2,128], index: 7, kind: output, shape index: {1}]
  %8 = xla_tuple %s6, %s7
  %s9 = sld [smem:[#allocation0]]
  $region65: #{bottleneck_forward.5} parent=0
    _
  %s11 = ssub.s32 1, %s9
  %s12 = scalar_select 0, %s11, %s9
  loop: start=0, step=1, limit=4
  $region2: #{bottleneck_forward.5} parent=0 // loop_pre_header
    _
  $region3: #{bottleneck_forward.5} parent=0 // loop_header
    %s14 = sphi 0, %s18
    %p15 = scmp.ge.s32.totalorder %s14, 4
    %s21 = sphi 0, %s33
    %s22 = sphi 0, %s29
    %s23 = sphi 0, %s21
    %s24 = sphi 0, %s22
    %s25 = sphi 0, %s23
    %s26 = sphi 0, %s24
    %s48 = sphi 0, %s50
    %s51 = sphi 0, %s48
    %s52 = sphi 0, %s51
    %s68 = sphi 0, %s52
    %s76 = sphi 0, %s78
    %s79 = sphi 0, %s76
    %s80 = sphi 0, %s79
    %s96 = sphi 0, %s80
    %s114 = sphi 0, %s116
    %s117 = sphi 0, %s114
    %s118 = sphi 0, %s117
    %s134 = sphi 0, %s118
    %s138 = sphi 0, %s138
    %s140 = sphi 0, %s138
    %s141 = sphi 0, %s140
    %s155 = sphi 0, %s141
    %s159 = sphi 0, %s159
    %s161 = sphi 0, %s159
    %s162 = sphi 0, %s161
    %s176 = sphi 0, %s162
    %s180 = sphi 0, %s180
    %s182 = sphi 0, %s180
    %s183 = sphi 0, %s182
    %s197 = sphi 0, %s183
    %s205 = sphi 0, %s207
    %s208 = sphi 0, %s205
    %s209 = sphi 0, %s208
    %s225 = sphi 0, %s209
    %s233 = sphi 0, %s235
    %s236 = sphi 0, %s233
    %s237 = sphi 0, %s236
    %s253 = sphi 0, %s237
  $region4: #{bottleneck_forward.5} parent=0 // loop_header_branch
    %17 = sbr.rel (%p15) target = $region8
  $region5: #{bottleneck_forward.5} parent=0 // loop_body
    %s19 = ssub.s32 %s14, 1
    %s20 = ssub.s32 %s14, 2
    %s27 = sadd.s32 1, %s22
    %p28 = scmp.ge.s32.totalorder %s27, 1
    %s29 = scalar_select %p28, 0, %s27
    %s30 = sadd.s32 1, %s21
    %s31 = scalar_select %p28, %s30, %s21
    %p32 = scmp.ge.s32.totalorder %s31, 2
    %s33 = scalar_select %p32, 0, %s31
    %s34 = smul.u32 %s21, 16
    %s35 = smul.u32 %s22, 16
    %s36 = ssub.s32 %s35, 1
    %p37 = scmp.gt.s32.totalorder %s36, 0
    %s38 = scalar_select %p37, %s36, 0
    %s39 = sadd.s32 %s34, %s38
    %s40 = smul.u32 %s33, 16
    %s41 = smul.u32 %s29, 16
    %s42 = ssub.s32 %s41, 1
    %p43 = scmp.gt.s32.totalorder %s42, 0
    %s44 = scalar_select %p43, %s42, 0
    %s45 = sadd.s32 %s40, %s44
    %s46 = ssub.s32 %s39, %s45
    %p47 = scmp.eq.s32.totalorder %s46, 0
    %s49 = sadd.s32 %s48, 1
    %s50 = scalar_select %p47, %s48, %s49
    %p53 = pneg %p47
    %p54 = scmp.eq.s32.totalorder %s14, 1
    %p55 = por %p53, %p54
    %p56 = scmp.ne.s32.totalorder %s48, %s51
    %p57 = scmp.eq.s32.totalorder %s14, 0
    %p58 = por %p56, %p57
    %p59 = scmp.ne.s32.totalorder %s48, %s51
    %p60 = scmp.eq.s32.totalorder %s19, 1
    %p61 = por %p59, %p60
    %p62 = scmp.ne.s32.totalorder %s51, %s52
    %p63 = scmp.eq.s32.totalorder %s19, 0
    %p64 = por %p62, %p63
    %p65 = scmp.ne.s32.totalorder %s51, %s52
    %p66 = scmp.eq.s32.totalorder %s20, 1
    %p67 = por %p65, %p66
    %p69 = scmp.ne.s32.totalorder %s52, %s68
    %p70 = scmp.eq.s32.totalorder %s20, 0
    %p71 = por %p69, %p70
    %s72 = sadd.s32 %s21, %s22
    %s73 = sadd.s32 %s33, %s29
    %s74 = ssub.s32 %s72, %s73
    %p75 = scmp.eq.s32.totalorder %s74, 0
    %s77 = sadd.s32 %s76, 1
    %s78 = scalar_select %p75, %s76, %s77
    %p81 = pneg %p75
    %p82 = scmp.eq.s32.totalorder %s14, 1
    %p83 = por %p81, %p82
    %p84 = scmp.ne.s32.totalorder %s76, %s79
    %p85 = scmp.eq.s32.totalorder %s14, 0
    %p86 = por %p84, %p85
    %p87 = scmp.ne.s32.totalorder %s76, %s79
    %p88 = scmp.eq.s32.totalorder %s19, 1
    %p89 = por %p87, %p88
    %p90 = scmp.ne.s32.totalorder %s79, %s80
    %p91 = scmp.eq.s32.totalorder %s19, 0
    %p92 = por %p90, %p91
    %p93 = scmp.ne.s32.totalorder %s79, %s80
    %p94 = scmp.eq.s32.totalorder %s20, 1
    %p95 = por %p93, %p94
    %p97 = scmp.ne.s32.totalorder %s80, %s96
    %p98 = scmp.eq.s32.totalorder %s20, 0
    %p99 = por %p97, %p98
    %s100 = smul.u32 %s21, 16
    %s101 = sadd.s32 %s22, 1
    %s102 = smul.u32 %s101, 16
    %p103 = scmp.lt.s32.totalorder %s102, 15
    %s104 = scalar_select %p103, %s102, 15
    %s105 = sadd.s32 %s100, %s104
    %s106 = smul.u32 %s33, 16
    %s107 = sadd.s32 %s29, 1
    %s108 = smul.u32 %s107, 16
    %p109 = scmp.lt.s32.totalorder %s108, 15
    %s110 = scalar_select %p109, %s108, 15
    %s111 = sadd.s32 %s106, %s110
    %s112 = ssub.s32 %s105, %s111
    %p113 = scmp.eq.s32.totalorder %s112, 0
    %s115 = sadd.s32 %s114, 1
    %s116 = scalar_select %p113, %s114, %s115
    %p119 = pneg %p113
    %p120 = scmp.eq.s32.totalorder %s14, 1
    %p121 = por %p119, %p120
    %p122 = scmp.ne.s32.totalorder %s114, %s117
    %p123 = scmp.eq.s32.totalorder %s14, 0
    %p124 = por %p122, %p123
    %p125 = scmp.ne.s32.totalorder %s114, %s117
    %p126 = scmp.eq.s32.totalorder %s19, 1
    %p127 = por %p125, %p126
    %p128 = scmp.ne.s32.totalorder %s117, %s118
    %p129 = scmp.eq.s32.totalorder %s19, 0
    %p130 = por %p128, %p129
    %p131 = scmp.ne.s32.totalorder %s117, %s118
    %p132 = scmp.eq.s32.totalorder %s20, 1
    %p133 = por %p131, %p132
    %p135 = scmp.ne.s32.totalorder %s118, %s134
    %p136 = scmp.eq.s32.totalorder %s20, 0
    %p137 = por %p135, %p136
    %s139 = sadd.s32 %s138, 1
    %p142 = scmp.eq.s32.totalorder %s14, 1
    %p143 = scmp.ne.s32.totalorder %s138, %s140
    %p144 = scmp.eq.s32.totalorder %s14, 0
    %p145 = por %p143, %p144
    %p146 = scmp.ne.s32.totalorder %s138, %s140
    %p147 = scmp.eq.s32.totalorder %s19, 1
    %p148 = por %p146, %p147
    %p149 = scmp.ne.s32.totalorder %s140, %s141
    %p150 = scmp.eq.s32.totalorder %s19, 0
    %p151 = por %p149, %p150
    %p152 = scmp.ne.s32.totalorder %s140, %s141
    %p153 = scmp.eq.s32.totalorder %s20, 1
    %p154 = por %p152, %p153
    %p156 = scmp.ne.s32.totalorder %s141, %s155
    %p157 = scmp.eq.s32.totalorder %s20, 0
    %p158 = por %p156, %p157
    %s160 = sadd.s32 %s159, 1
    %p163 = scmp.eq.s32.totalorder %s14, 1
    %p164 = scmp.ne.s32.totalorder %s159, %s161
    %p165 = scmp.eq.s32.totalorder %s14, 0
    %p166 = por %p164, %p165
    %p167 = scmp.ne.s32.totalorder %s159, %s161
    %p168 = scmp.eq.s32.totalorder %s19, 1
    %p169 = por %p167, %p168
    %p170 = scmp.ne.s32.totalorder %s161, %s162
    %p171 = scmp.eq.s32.totalorder %s19, 0
    %p172 = por %p170, %p171
    %p173 = scmp.ne.s32.totalorder %s161, %s162
    %p174 = scmp.eq.s32.totalorder %s20, 1
    %p175 = por %p173, %p174
    %p177 = scmp.ne.s32.totalorder %s162, %s176
    %p178 = scmp.eq.s32.totalorder %s20, 0
    %p179 = por %p177, %p178
    %s181 = sadd.s32 %s180, 1
    %p184 = scmp.eq.s32.totalorder %s14, 1
    %p185 = scmp.ne.s32.totalorder %s180, %s182
    %p186 = scmp.eq.s32.totalorder %s14, 0
    %p187 = por %p185, %p186
    %p188 = scmp.ne.s32.totalorder %s180, %s182
    %p189 = scmp.eq.s32.totalorder %s19, 1
    %p190 = por %p188, %p189
    %p191 = scmp.ne.s32.totalorder %s182, %s183
    %p192 = scmp.eq.s32.totalorder %s19, 0
    %p193 = por %p191, %p192
    %p194 = scmp.ne.s32.totalorder %s182, %s183
    %p195 = scmp.eq.s32.totalorder %s20, 1
    %p196 = por %p194, %p195
    %p198 = scmp.ne.s32.totalorder %s183, %s197
    %p199 = scmp.eq.s32.totalorder %s20, 0
    %p200 = por %p198, %p199
    %s201 = sadd.s32 %s21, %s22
    %s202 = sadd.s32 %s33, %s29
    %s203 = ssub.s32 %s201, %s202
    %p204 = scmp.eq.s32.totalorder %s203, 0
    %s206 = sadd.s32 %s205, 1
    %s207 = scalar_select %p204, %s205, %s206
    %p210 = pneg %p204
    %p211 = scmp.eq.s32.totalorder %s14, 1
    %p212 = por %p210, %p211
    %p213 = scmp.ne.s32.totalorder %s205, %s208
    %p214 = scmp.eq.s32.totalorder %s14, 0
    %p215 = por %p213, %p214
    %p216 = scmp.ne.s32.totalorder %s205, %s208
    %p217 = scmp.eq.s32.totalorder %s19, 1
    %p218 = por %p216, %p217
    %p219 = scmp.ne.s32.totalorder %s208, %s209
    %p220 = scmp.eq.s32.totalorder %s19, 0
    %p221 = por %p219, %p220
    %p222 = scmp.ne.s32.totalorder %s208, %s209
    %p223 = scmp.eq.s32.totalorder %s20, 1
    %p224 = por %p222, %p223
    %p226 = scmp.ne.s32.totalorder %s209, %s225
    %p227 = scmp.eq.s32.totalorder %s20, 0
    %p228 = por %p226, %p227
    %s229 = sadd.s32 %s21, %s22
    %s230 = sadd.s32 %s33, %s29
    %s231 = ssub.s32 %s229, %s230
    %p232 = scmp.eq.s32.totalorder %s231, 0
    %s234 = sadd.s32 %s233, 1
    %s235 = scalar_select %p232, %s233, %s234
    %p238 = pneg %p232
    %p239 = scmp.eq.s32.totalorder %s14, 1
    %p240 = por %p238, %p239
    %p241 = scmp.ne.s32.totalorder %s233, %s236
    %p242 = scmp.eq.s32.totalorder %s14, 0
    %p243 = por %p241, %p242
    %p244 = scmp.ne.s32.totalorder %s233, %s236
    %p245 = scmp.eq.s32.totalorder %s19, 1
    %p246 = por %p244, %p245
    %p247 = scmp.ne.s32.totalorder %s236, %s237
    %p248 = scmp.eq.s32.totalorder %s19, 0
    %p249 = por %p247, %p248
    %p250 = scmp.ne.s32.totalorder %s236, %s237
    %p251 = scmp.eq.s32.totalorder %s20, 1
    %p252 = por %p250, %p251
    %p254 = scmp.ne.s32.totalorder %s237, %s253
    %p255 = scmp.eq.s32.totalorder %s20, 0
    %p256 = por %p254, %p255
    %p257 = scmp.le.s32.totalorder 1, %s14
    %p258 = scmp.lt.s32.totalorder %s14, 3
    %p259 = pnand %p257, %p258
    %p260 = pneg %p259
    // Predicated region
    $region9: #{bottleneck_forward.5} parent=5 // pred_check
      _
    $region10: #{bottleneck_forward.5} parent=5 // pred_check_branch
      %262 = sbr.rel (%p259) target = $region12
    $region11: #{bottleneck_forward.5} parent=5 // pred_region
      %s263 = ssub.s32 %s14, 1
      // Predicated region
      $region13: #{bottleneck_forward.5} parent=11 // pred_check
        %p264 = pneg %p151
      $region14: #{bottleneck_forward.5} parent=11 // pred_check_branch
        %266 = sbr.rel (%p264) target = $region16
      $region15: #{bottleneck_forward.5} parent=11 // pred_region
        _
      $region16: #{bottleneck_forward.5} parent=11 // pred_fallthru
        _
      // Predicated region
      $region17: #{bottleneck_forward.5} parent=11 // pred_check
        %p267 = pneg %p172
      $region18: #{bottleneck_forward.5} parent=11 // pred_check_branch
        %269 = sbr.rel (%p267) target = $region20
      $region19: #{bottleneck_forward.5} parent=11 // pred_region
        _
      $region20: #{bottleneck_forward.5} parent=11 // pred_fallthru
        _
      // Predicated region
      $region21: #{bottleneck_forward.5} parent=11 // pred_check
        %p270 = pneg %p193
      $region22: #{bottleneck_forward.5} parent=11 // pred_check_branch
        %272 = sbr.rel (%p270) target = $region24
      $region23: #{bottleneck_forward.5} parent=11 // pred_region
        _
      $region24: #{bottleneck_forward.5} parent=11 // pred_fallthru
        _
    $region12: #{bottleneck_forward.5} parent=5 // pred_fallthru
      _
    %p273 = scmp.lt.s32.totalorder %s14, 2
    // Predicated region
    $region25: #{bottleneck_forward.5} parent=5 // pred_check
      %p274 = pneg %p273
    $region26: #{bottleneck_forward.5} parent=5 // pred_check_branch
      %276 = sbr.rel (%p274) target = $region28
    $region27: #{bottleneck_forward.5} parent=5 // pred_region
      // Predicated region
      $region29: #{bottleneck_forward.5} parent=27 // pred_check
        %p277 = pneg %p58
      $region30: #{bottleneck_forward.5} parent=27 // pred_check_branch
        %279 = sbr.rel (%p277) target = $region32
      $region31: #{bottleneck_forward.5} parent=27 // pred_region
        %s280 = smul.u32 %s21, 16
        %s281 = smul.u32 %s22, 16
        %s282 = ssub.s32 %s281, 1
        %p283 = scmp.gt.s32.totalorder %s282, 0
        %s284 = scalar_select %p283, %s282, 0
        %s285 = sadd.s32 %s280, %s284
        %p286 = scmp.lt.s32.totalorder %s285, 31
        %s287 = scalar_select %p286, %s285, 31
        %s288 = smul.addr %s287, 2
        %s289 = smul.addr %s288, 8
        %s290 = scalar_lea.vmem %s0, %s289
        %s291 = smul.u32 %s21, 16
        %s292 = smul.u32 %s22, 16
        %s293 = ssub.s32 %s292, 1
        %p294 = scmp.gt.s32.totalorder %s293, 0
        %s295 = scalar_select %p294, %s293, 0
        %s296 = sadd.s32 %s291, %s295
      $region32: #{bottleneck_forward.5} parent=27 // pred_fallthru
        _
      // Predicated region
      $region33: #{bottleneck_forward.5} parent=27 // pred_check
        %p297 = pneg %p86
      $region34: #{bottleneck_forward.5} parent=27 // pred_check_branch
        %299 = sbr.rel (%p297) target = $region36
      $region35: #{bottleneck_forward.5} parent=27 // pred_region
        %s300 = sadd.s32 %s21, %s22
        %s301 = smul.u32 16, %s300
        %p302 = scmp.lt.s32.totalorder %s301, 31
        %s303 = scalar_select %p302, %s301, 31
        %s304 = smul.addr %s303, 2
        %s305 = smul.addr %s304, 8
        %s306 = scalar_lea.vmem %s1, %s305
        %s307 = sadd.s32 %s21, %s22
        %s308 = smul.u32 16, %s307
      $region36: #{bottleneck_forward.5} parent=27 // pred_fallthru
        _
      // Predicated region
      $region37: #{bottleneck_forward.5} parent=27 // pred_check
        %p309 = pneg %p124
      $region38: #{bottleneck_forward.5} parent=27 // pred_check_branch
        %311 = sbr.rel (%p309) target = $region40
      $region39: #{bottleneck_forward.5} parent=27 // pred_region
        %s312 = smul.u32 %s21, 16
        %s313 = sadd.s32 %s22, 1
        %s314 = smul.u32 %s313, 16
        %p315 = scmp.lt.s32.totalorder %s314, 15
        %s316 = scalar_select %p315, %s314, 15
        %s317 = sadd.s32 %s312, %s316
        %p318 = scmp.lt.s32.totalorder %s317, 31
        %s319 = scalar_select %p318, %s317, 31
        %s320 = smul.addr %s319, 2
        %s321 = smul.addr %s320, 8
        %s322 = scalar_lea.vmem %s2, %s321
        %s323 = smul.u32 %s21, 16
        %s324 = sadd.s32 %s22, 1
        %s325 = smul.u32 %s324, 16
        %p326 = scmp.lt.s32.totalorder %s325, 15
        %s327 = scalar_select %p326, %s325, 15
        %s328 = sadd.s32 %s323, %s327
      $region40: #{bottleneck_forward.5} parent=27 // pred_fallthru
        _
    $region28: #{bottleneck_forward.5} parent=5 // pred_fallthru
      _
    %p329 = scmp.le.s32.totalorder 1, %s14
    %p330 = scmp.lt.s32.totalorder %s14, 3
    %p331 = pnand %p329, %p330
    %p332 = pneg %p331
    // Predicated region
    $region41: #{bottleneck_forward.5} parent=5 // pred_check
      _
    $region42: #{bottleneck_forward.5} parent=5 // pred_check_branch
      %334 = sbr.rel (%p331) target = $region44
    $region43: #{bottleneck_forward.5} parent=5 // pred_region
      %s335 = ssub.s32 %s14, 1
      %s336 = smul.u32 %s23, 16
      %s337 = smul.u32 %s24, 16
      %s338 = ssub.s32 %s337, 1
      %p339 = scmp.gt.s32.totalorder %s338, 0
      %s340 = scalar_select %p339, %s338, 0
      %s341 = sadd.s32 %s336, %s340
      %p342 = scmp.lt.s32.totalorder %s341, 31
      %s343 = scalar_select %p342, %s341, 31
      %s344 = smul.addr %s343, 2
      %s345 = smul.addr %s344, 8
      %s346 = scalar_lea.vmem %s0, %s345
      %p347 = pneg %p64
      %p348 = pneg %p61
      %s349 = sadd.s32 %s23, %s24
      %s350 = smul.u32 16, %s349
      %p351 = scmp.lt.s32.totalorder %s350, 31
      %s352 = scalar_select %p351, %s350, 31
      %s353 = smul.addr %s352, 2
      %s354 = smul.addr %s353, 8
      %s355 = scalar_lea.vmem %s1, %s354
      %p356 = pneg %p92
      %p357 = pneg %p89
      %s358 = smul.u32 %s23, 16
      %s359 = sadd.s32 %s24, 1
      %s360 = smul.u32 %s359, 16
      %p361 = scmp.lt.s32.totalorder %s360, 15
      %s362 = scalar_select %p361, %s360, 15
      %s363 = sadd.s32 %s358, %s362
      %p364 = scmp.lt.s32.totalorder %s363, 31
      %s365 = scalar_select %p364, %s363, 31
      %s366 = smul.addr %s365, 2
      %s367 = smul.addr %s366, 8
      %s368 = scalar_lea.vmem %s2, %s367
      %p369 = pneg %p130
      %p370 = pneg %p127
      %p371 = pneg %p151
      %p372 = pneg %p148
      %p373 = pneg %p172
      %p374 = pneg %p169
      %p375 = pneg %p193
      %p376 = pneg %p190
      %p377 = pneg %p221
      %p378 = pneg %p218
      %s379 = sadd.s32 %s23, %s24
      %s380 = smul.u32 16, %s379
      %p381 = scmp.lt.s32.totalorder %s380, 31
      %s382 = scalar_select %p381, %s380, 31
      %s383 = smul.addr %s382, 2
      %s384 = smul.addr %s383, 8
      %s385 = scalar_lea.vmem %s6, %s384
      %p386 = pneg %p249
      %p387 = pneg %p246
      %s388 = sadd.s32 %s23, %s24
      %p389 = scmp.lt.s32.totalorder %s388, 1
      %s390 = scalar_select %p389, %s388, 1
      %s391 = smul.addr %s390, 2
      %s392 = scalar_lea.vmem %s7, %s391
      %s393 = smul.u32 %s23, 16
      %s394 = smul.u32 %s24, 16
      %s395 = ssub.s32 %s394, 1
      %p396 = scmp.gt.s32.totalorder %s395, 0
      %s397 = scalar_select %p396, %s395, 0
      %s398 = sadd.s32 %s393, %s397
      %p399 = scmp.lt.s32.totalorder %s398, 31
      %s400 = scalar_select %p399, %s398, 31
      %s401 = smul.addr %s400, 2
      %s402 = smul.addr %s401, 8
      %s403 = scalar_lea.vmem %s0, %s402
      %s404 = smul.u32 %s23, 16
      %s405 = smul.u32 %s24, 16
      %s406 = ssub.s32 %s405, 1
      %p407 = scmp.gt.s32.totalorder %s406, 0
      %s408 = scalar_select %p407, %s406, 0
      %s409 = sadd.s32 %s404, %s408
      %s410 = sadd.s32 %s23, %s24
      %s411 = smul.u32 16, %s410
      %p412 = scmp.lt.s32.totalorder %s411, 31
      %s413 = scalar_select %p412, %s411, 31
      %s414 = smul.addr %s413, 2
      %s415 = smul.addr %s414, 8
      %s416 = scalar_lea.vmem %s1, %s415
      %s417 = sadd.s32 %s23, %s24
      %s418 = smul.u32 16, %s417
      %s419 = smul.u32 %s23, 16
      %s420 = sadd.s32 %s24, 1
      %s421 = smul.u32 %s420, 16
      %p422 = scmp.lt.s32.totalorder %s421, 15
      %s423 = scalar_select %p422, %s421, 15
      %s424 = sadd.s32 %s419, %s423
      %p425 = scmp.lt.s32.totalorder %s424, 31
      %s426 = scalar_select %p425, %s424, 31
      %s427 = smul.addr %s426, 2
      %s428 = smul.addr %s427, 8
      %s429 = scalar_lea.vmem %s2, %s428
      %s430 = smul.u32 %s23, 16
      %s431 = sadd.s32 %s24, 1
      %s432 = smul.u32 %s431, 16
      %p433 = scmp.lt.s32.totalorder %s432, 15
      %s434 = scalar_select %p433, %s432, 15
      %s435 = sadd.s32 %s430, %s434
      %s436 = sadd.s32 %s23, %s24
      %s437 = smul.u32 16, %s436
      %p438 = scmp.lt.s32.totalorder %s437, 31
      %s439 = scalar_select %p438, %s437, 31
      %s440 = smul.addr %s439, 2
      %s441 = smul.addr %s440, 8
      %s442 = scalar_lea.vmem %s6, %s441
      %s443 = sadd.s32 %s23, %s24
      %s444 = smul.u32 16, %s443
      %s445 = sadd.s32 %s23, %s24
      %p446 = scmp.lt.s32.totalorder %s445, 1
      %s447 = scalar_select %p446, %s445, 1
      %s448 = smul.addr %s447, 2
      %s449 = scalar_lea.vmem %s7, %s448
      %s450 = sadd.s32 %s23, %s24
      %v451 = vld [vmem:[%s3] sm:$0x1]
      %v452 = vld [vmem:[%s4] sm:$0x1]
      %v453 = vld [vmem:[%s403] sm:$0xff]
      %v454 = vld [vmem:[%s403 + $0x8] sm:$0xff]
      %v456 = vperm.slane %v451, 0
      %v458 = vmul.f32 %v453, %v456
      %v459 = vmul.f32 %v454, %v456
      %v461 = vperm.slane %v452, 0
      %v463 = vadd.f32 %v458, %v461
      %v464 = vadd.f32 %v459, %v461
      %v465 = vmax.f32 %v463, 0.0
      %v466 = vmax.f32 %v464, 0.0
      %p467 = scmp.gt.s32.totalorder %s24, 0
      %s468 = scalar_select %p467, 1, 0
      %s469 = scvt.s32.f32 %s468
      %v470 = vstv %s469
      %v471 = vmul.f32 %v465, %v470
      %v472 = vmul.f32 %v466, %v470
      %v473 = vld [vmem:[%s429] sm:$0xff]
      %v474 = vld [vmem:[%s429 + $0x8] sm:$0xff]
      %v475 = vmul.f32 %v473, %v456
      %v476 = vmul.f32 %v474, %v456
      %v477 = vadd.f32 %v475, %v461
      %v478 = vadd.f32 %v476, %v461
      %v479 = vmax.f32 %v477, 0.0
      %v480 = vmax.f32 %v478, 0.0
      %p481 = scmp.lt.s32.totalorder %s24, 0
      %s482 = scalar_select %p481, 1, 0
      %s483 = scvt.s32.f32 %s482
      %v484 = vstv %s483
      %v485 = vmul.f32 %v479, %v484
      %v486 = vmul.f32 %v480, %v484
      %v487 = vld [vmem:[%s416] sm:$0xff]
      %v488 = vld [vmem:[%s416 + $0x8] sm:$0xff]
      %v489 = vld [vmem:[%s416 + $0x10] sm:$0xff]
      %v490 = vld [vmem:[%s416 + $0x18] sm:$0xff]
      %v491 = vld [vmem:[%s416 + $0x20] sm:$0xff]
      %v492 = vld [vmem:[%s416 + $0x28] sm:$0xff]
      %v493 = vld [vmem:[%s416 + $0x30] sm:$0xff]
      %v494 = vld [vmem:[%s416 + $0x38] sm:$0xff]
      %v495 = vld [vmem:[%s416 + $0x40] sm:$0xff]
      %v496 = vld [vmem:[%s416 + $0x48] sm:$0xff]
      %v497 = vld [vmem:[%s416 + $0x50] sm:$0xff]
      %v498 = vld [vmem:[%s416 + $0x58] sm:$0xff]
      %v499 = vld [vmem:[%s416 + $0x60] sm:$0xff]
      %v500 = vld [vmem:[%s416 + $0x68] sm:$0xff]
      %v501 = vld [vmem:[%s416 + $0x70] sm:$0xff]
      %v502 = vld [vmem:[%s416 + $0x78] sm:$0xff]
      %v503 = vld [vmem:[%s416 + $0x80] sm:$0xff]
      %v504 = vld [vmem:[%s416 + $0x88] sm:$0xff]
      %v505 = vld [vmem:[%s416 + $0x90] sm:$0xff]
      %v506 = vld [vmem:[%s416 + $0x98] sm:$0xff]
      %v507 = vld [vmem:[%s416 + $0xa0] sm:$0xff]
      %v508 = vld [vmem:[%s416 + $0xa8] sm:$0xff]
      %v509 = vld [vmem:[%s416 + $0xb0] sm:$0xff]
      %v510 = vld [vmem:[%s416 + $0xb8] sm:$0xff]
      %v511 = vld [vmem:[%s416 + $0xc0] sm:$0xff]
      %v512 = vld [vmem:[%s416 + $0xc8] sm:$0xff]
      %v513 = vld [vmem:[%s416 + $0xd0] sm:$0xff]
      %v514 = vld [vmem:[%s416 + $0xd8] sm:$0xff]
      %v515 = vld [vmem:[%s416 + $0xe0] sm:$0xff]
      %v516 = vld [vmem:[%s416 + $0xe8] sm:$0xff]
      %v517 = vld [vmem:[%s416 + $0xf0] sm:$0xff]
      %v518 = vld [vmem:[%s416 + $0xf8] sm:$0xff]
      %v519 = vmul.f32 %v487, %v456
      %v520 = vmul.f32 %v488, %v456
      %v521 = vmul.f32 %v489, %v456
      %v522 = vmul.f32 %v490, %v456
      %v523 = vmul.f32 %v491, %v456
      %v524 = vmul.f32 %v492, %v456
      %v525 = vmul.f32 %v493, %v456
      %v526 = vmul.f32 %v494, %v456
      %v527 = vmul.f32 %v495, %v456
      %v528 = vmul.f32 %v496, %v456
      %v529 = vmul.f32 %v497, %v456
      %v530 = vmul.f32 %v498, %v456
      %v531 = vmul.f32 %v499, %v456
      %v532 = vmul.f32 %v500, %v456
      %v533 = vmul.f32 %v501, %v456
      %v534 = vmul.f32 %v502, %v456
      %v535 = vmul.f32 %v503, %v456
      %v536 = vmul.f32 %v504, %v456
      %v537 = vmul.f32 %v505, %v456
      %v538 = vmul.f32 %v506, %v456
      %v539 = vmul.f32 %v507, %v456
      %v540 = vmul.f32 %v508, %v456
      %v541 = vmul.f32 %v509, %v456
      %v542 = vmul.f32 %v510, %v456
      %v543 = vmul.f32 %v511, %v456
      %v544 = vmul.f32 %v512, %v456
      %v545 = vmul.f32 %v513, %v456
      %v546 = vmul.f32 %v514, %v456
      %v547 = vmul.f32 %v515, %v456
      %v548 = vmul.f32 %v516, %v456
      %v549 = vmul.f32 %v517, %v456
      %v550 = vmul.f32 %v518, %v456
      %v551 = vadd.f32 %v519, %v461
      %v552 = vadd.f32 %v520, %v461
      %v553 = vadd.f32 %v521, %v461
      %v554 = vadd.f32 %v522, %v461
      %v555 = vadd.f32 %v523, %v461
      %v556 = vadd.f32 %v524, %v461
      %v557 = vadd.f32 %v525, %v461
      %v558 = vadd.f32 %v526, %v461
      %v559 = vadd.f32 %v527, %v461
      %v560 = vadd.f32 %v528, %v461
      %v561 = vadd.f32 %v529, %v461
      %v562 = vadd.f32 %v530, %v461
      %v563 = vadd.f32 %v531, %v461
      %v564 = vadd.f32 %v532, %v461
      %v565 = vadd.f32 %v533, %v461
      %v566 = vadd.f32 %v534, %v461
      %v567 = vadd.f32 %v535, %v461
      %v568 = vadd.f32 %v536, %v461
      %v569 = vadd.f32 %v537, %v461
      %v570 = vadd.f32 %v538, %v461
      %v571 = vadd.f32 %v539, %v461
      %v572 = vadd.f32 %v540, %v461
      %v573 = vadd.f32 %v541, %v461
      %v574 = vadd.f32 %v542, %v461
      %v575 = vadd.f32 %v543, %v461
      %v576 = vadd.f32 %v544, %v461
      %v577 = vadd.f32 %v545, %v461
      %v578 = vadd.f32 %v546, %v461
      %v579 = vadd.f32 %v547, %v461
      %v580 = vadd.f32 %v548, %v461
      %v581 = vadd.f32 %v549, %v461
      %v582 = vadd.f32 %v550, %v461
      %v583 = vmax.f32 %v551, 0.0
      %v584 = vmax.f32 %v552, 0.0
      %v585 = vmax.f32 %v553, 0.0
      %v586 = vmax.f32 %v554, 0.0
      %v587 = vmax.f32 %v555, 0.0
      %v588 = vmax.f32 %v556, 0.0
      %v589 = vmax.f32 %v557, 0.0
      %v590 = vmax.f32 %v558, 0.0
      %v591 = vmax.f32 %v559, 0.0
      %v592 = vmax.f32 %v560, 0.0
      %v593 = vmax.f32 %v561, 0.0
      %v594 = vmax.f32 %v562, 0.0
      %v595 = vmax.f32 %v563, 0.0
      %v596 = vmax.f32 %v564, 0.0
      %v597 = vmax.f32 %v565, 0.0
      %v598 = vmax.f32 %v566, 0.0
      %v599 = vmax.f32 %v567, 0.0
      %v600 = vmax.f32 %v568, 0.0
      %v601 = vmax.f32 %v569, 0.0
      %v602 = vmax.f32 %v570, 0.0
      %v603 = vmax.f32 %v571, 0.0
      %v604 = vmax.f32 %v572, 0.0
      %v605 = vmax.f32 %v573, 0.0
      %v606 = vmax.f32 %v574, 0.0
      %v607 = vmax.f32 %v575, 0.0
      %v608 = vmax.f32 %v576, 0.0
      %v609 = vmax.f32 %v577, 0.0
      %v610 = vmax.f32 %v578, 0.0
      %v611 = vmax.f32 %v579, 0.0
      %v612 = vmax.f32 %v580, 0.0
      %v613 = vmax.f32 %v581, 0.0
      %v614 = vmax.f32 %v582, 0.0
      %v615 = vlaneseq
      %v616 = vshrl.u32 %v615, 7
      %v617 = vadd.s32 %v616, 8
      %v618 = vadd.s32 %v616, 16
      %v619 = vadd.s32 %v616, 24
      %v620 = vadd.s32 %v616, 32
      %v621 = vadd.s32 %v616, 40
      %v622 = vadd.s32 %v616, 48
      %v623 = vadd.s32 %v616, 56
      %v624 = vadd.s32 %v616, 64
      %v625 = vadd.s32 %v616, 72
      %v626 = vadd.s32 %v616, 80
      %v627 = vadd.s32 %v616, 88
      %v628 = vadd.s32 %v616, 96
      %v629 = vadd.s32 %v616, 104
      %v630 = vadd.s32 %v616, 112
      %v631 = vadd.s32 %v616, 120
      %v632 = vadd.s32 %v616, 128
      %v633 = vadd.s32 %v616, 136
      %v634 = vadd.s32 %v616, 144
      %v635 = vadd.s32 %v616, 152
      %v636 = vadd.s32 %v616, 160
      %v637 = vadd.s32 %v616, 168
      %v638 = vadd.s32 %v616, 176
      %v639 = vadd.s32 %v616, 184
      %v640 = vadd.s32 %v616, 192
      %v641 = vadd.s32 %v616, 200
      %v642 = vadd.s32 %v616, 208
      %v643 = vadd.s32 %v616, 216
      %v644 = vadd.s32 %v616, 224
      %v645 = vadd.s32 %v616, 232
      %v646 = vadd.s32 %v616, 240
      %v647 = vadd.s32 %v616, 248
      %vm648 = vcmp.lt.s32.totalorder %v616, 0
      %v649 = vsub.s32 0, %v616
      %v650 = vsel %vm648, %v649, %v616
      %v651 = vshrl.u32 %v650, 4
      %v652 = vand.u32 %v650, 15
      %v653 = vsub.s32 0, %v652
      %v654 = vsel %vm648, %v653, %v652
      %vm655 = vcmp.lt.s32.totalorder %v617, 0
      %v656 = vsub.s32 0, %v617
      %v657 = vsel %vm655, %v656, %v617
      %v658 = vshrl.u32 %v657, 4
      %v659 = vand.u32 %v657, 15
      %v660 = vsub.s32 0, %v659
      %v661 = vsel %vm655, %v660, %v659
      %vm662 = vcmp.lt.s32.totalorder %v618, 0
      %v663 = vsub.s32 0, %v618
      %v664 = vsel %vm662, %v663, %v618
      %v665 = vshrl.u32 %v664, 4
      %v666 = vand.u32 %v664, 15
      %v667 = vsub.s32 0, %v666
      %v668 = vsel %vm662, %v667, %v666
      %vm669 = vcmp.lt.s32.totalorder %v619, 0
      %v670 = vsub.s32 0, %v619
      %v671 = vsel %vm669, %v670, %v619
      %v672 = vshrl.u32 %v671, 4
      %v673 = vand.u32 %v671, 15
      %v674 = vsub.s32 0, %v673
      %v675 = vsel %vm669, %v674, %v673
      %vm676 = vcmp.lt.s32.totalorder %v620, 0
      %v677 = vsub.s32 0, %v620
      %v678 = vsel %vm676, %v677, %v620
      %v679 = vshrl.u32 %v678, 4
      %v680 = vand.u32 %v678, 15
      %v681 = vsub.s32 0, %v680
      %v682 = vsel %vm676, %v681, %v680
      %vm683 = vcmp.lt.s32.totalorder %v621, 0
      %v684 = vsub.s32 0, %v621
      %v685 = vsel %vm683, %v684, %v621
      %v686 = vshrl.u32 %v685, 4
      %v687 = vand.u32 %v685, 15
      %v688 = vsub.s32 0, %v687
      %v689 = vsel %vm683, %v688, %v687
      %vm690 = vcmp.lt.s32.totalorder %v622, 0
      %v691 = vsub.s32 0, %v622
      %v692 = vsel %vm690, %v691, %v622
      %v693 = vshrl.u32 %v692, 4
      %v694 = vand.u32 %v692, 15
      %v695 = vsub.s32 0, %v694
      %v696 = vsel %vm690, %v695, %v694
      %vm697 = vcmp.lt.s32.totalorder %v623, 0
      %v698 = vsub.s32 0, %v623
      %v699 = vsel %vm697, %v698, %v623
      %v700 = vshrl.u32 %v699, 4
      %v701 = vand.u32 %v699, 15
      %v702 = vsub.s32 0, %v701
      %v703 = vsel %vm697, %v702, %v701
      %vm704 = vcmp.lt.s32.totalorder %v624, 0
      %v705 = vsub.s32 0, %v624
      %v706 = vsel %vm704, %v705, %v624
      %v707 = vshrl.u32 %v706, 4
      %v708 = vand.u32 %v706, 15
      %v709 = vsub.s32 0, %v708
      %v710 = vsel %vm704, %v709, %v708
      %vm711 = vcmp.lt.s32.totalorder %v625, 0
      %v712 = vsub.s32 0, %v625
      %v713 = vsel %vm711, %v712, %v625
      %v714 = vshrl.u32 %v713, 4
      %v715 = vand.u32 %v713, 15
      %v716 = vsub.s32 0, %v715
      %v717 = vsel %vm711, %v716, %v715
      %vm718 = vcmp.lt.s32.totalorder %v626, 0
      %v719 = vsub.s32 0, %v626
      %v720 = vsel %vm718, %v719, %v626
      %v721 = vshrl.u32 %v720, 4
      %v722 = vand.u32 %v720, 15
      %v723 = vsub.s32 0, %v722
      %v724 = vsel %vm718, %v723, %v722
      %vm725 = vcmp.lt.s32.totalorder %v627, 0
      %v726 = vsub.s32 0, %v627
      %v727 = vsel %vm725, %v726, %v627
      %v728 = vshrl.u32 %v727, 4
      %v729 = vand.u32 %v727, 15
      %v730 = vsub.s32 0, %v729
      %v731 = vsel %vm725, %v730, %v729
      %vm732 = vcmp.lt.s32.totalorder %v628, 0
      %v733 = vsub.s32 0, %v628
      %v734 = vsel %vm732, %v733, %v628
      %v735 = vshrl.u32 %v734, 4
      %v736 = vand.u32 %v734, 15
      %v737 = vsub.s32 0, %v736
      %v738 = vsel %vm732, %v737, %v736
      %vm739 = vcmp.lt.s32.totalorder %v629, 0
      %v740 = vsub.s32 0, %v629
      %v741 = vsel %vm739, %v740, %v629
      %v742 = vshrl.u32 %v741, 4
      %v743 = vand.u32 %v741, 15
      %v744 = vsub.s32 0, %v743
      %v745 = vsel %vm739, %v744, %v743
      %vm746 = vcmp.lt.s32.totalorder %v630, 0
      %v747 = vsub.s32 0, %v630
      %v748 = vsel %vm746, %v747, %v630
      %v749 = vshrl.u32 %v748, 4
      %v750 = vand.u32 %v748, 15
      %v751 = vsub.s32 0, %v750
      %v752 = vsel %vm746, %v751, %v750
      %vm753 = vcmp.lt.s32.totalorder %v631, 0
      %v754 = vsub.s32 0, %v631
      %v755 = vsel %vm753, %v754, %v631
      %v756 = vshrl.u32 %v755, 4
      %v757 = vand.u32 %v755, 15
      %v758 = vsub.s32 0, %v757
      %v759 = vsel %vm753, %v758, %v757
      %vm760 = vcmp.lt.s32.totalorder %v632, 0
      %v761 = vsub.s32 0, %v632
      %v762 = vsel %vm760, %v761, %v632
      %v763 = vshrl.u32 %v762, 4
      %v764 = vand.u32 %v762, 15
      %v765 = vsub.s32 0, %v764
      %v766 = vsel %vm760, %v765, %v764
      %vm767 = vcmp.lt.s32.totalorder %v633, 0
      %v768 = vsub.s32 0, %v633
      %v769 = vsel %vm767, %v768, %v633
      %v770 = vshrl.u32 %v769, 4
      %v771 = vand.u32 %v769, 15
      %v772 = vsub.s32 0, %v771
      %v773 = vsel %vm767, %v772, %v771
      %vm774 = vcmp.lt.s32.totalorder %v634, 0
      %v775 = vsub.s32 0, %v634
      %v776 = vsel %vm774, %v775, %v634
      %v777 = vshrl.u32 %v776, 4
      %v778 = vand.u32 %v776, 15
      %v779 = vsub.s32 0, %v778
      %v780 = vsel %vm774, %v779, %v778
      %vm781 = vcmp.lt.s32.totalorder %v635, 0
      %v782 = vsub.s32 0, %v635
      %v783 = vsel %vm781, %v782, %v635
      %v784 = vshrl.u32 %v783, 4
      %v785 = vand.u32 %v783, 15
      %v786 = vsub.s32 0, %v785
      %v787 = vsel %vm781, %v786, %v785
      %vm788 = vcmp.lt.s32.totalorder %v636, 0
      %v789 = vsub.s32 0, %v636
      %v790 = vsel %vm788, %v789, %v636
      %v791 = vshrl.u32 %v790, 4
      %v792 = vand.u32 %v790, 15
      %v793 = vsub.s32 0, %v792
      %v794 = vsel %vm788, %v793, %v792
      %vm795 = vcmp.lt.s32.totalorder %v637, 0
      %v796 = vsub.s32 0, %v637
      %v797 = vsel %vm795, %v796, %v637
      %v798 = vshrl.u32 %v797, 4
      %v799 = vand.u32 %v797, 15
      %v800 = vsub.s32 0, %v799
      %v801 = vsel %vm795, %v800, %v799
      %vm802 = vcmp.lt.s32.totalorder %v638, 0
      %v803 = vsub.s32 0, %v638
      %v804 = vsel %vm802, %v803, %v638
      %v805 = vshrl.u32 %v804, 4
      %v806 = vand.u32 %v804, 15
      %v807 = vsub.s32 0, %v806
      %v808 = vsel %vm802, %v807, %v806
      %vm809 = vcmp.lt.s32.totalorder %v639, 0
      %v810 = vsub.s32 0, %v639
      %v811 = vsel %vm809, %v810, %v639
      %v812 = vshrl.u32 %v811, 4
      %v813 = vand.u32 %v811, 15
      %v814 = vsub.s32 0, %v813
      %v815 = vsel %vm809, %v814, %v813
      %vm816 = vcmp.lt.s32.totalorder %v640, 0
      %v817 = vsub.s32 0, %v640
      %v818 = vsel %vm816, %v817, %v640
      %v819 = vshrl.u32 %v818, 4
      %v820 = vand.u32 %v818, 15
      %v821 = vsub.s32 0, %v820
      %v822 = vsel %vm816, %v821, %v820
      %vm823 = vcmp.lt.s32.totalorder %v641, 0
      %v824 = vsub.s32 0, %v641
      %v825 = vsel %vm823, %v824, %v641
      %v826 = vshrl.u32 %v825, 4
      %v827 = vand.u32 %v825, 15
      %v828 = vsub.s32 0, %v827
      %v829 = vsel %vm823, %v828, %v827
      %vm830 = vcmp.lt.s32.totalorder %v642, 0
      %v831 = vsub.s32 0, %v642
      %v832 = vsel %vm830, %v831, %v642
      %v833 = vshrl.u32 %v832, 4
      %v834 = vand.u32 %v832, 15
      %v835 = vsub.s32 0, %v834
      %v836 = vsel %vm830, %v835, %v834
      %vm837 = vcmp.lt.s32.totalorder %v643, 0
      %v838 = vsub.s32 0, %v643
      %v839 = vsel %vm837, %v838, %v643
      %v840 = vshrl.u32 %v839, 4
      %v841 = vand.u32 %v839, 15
      %v842 = vsub.s32 0, %v841
      %v843 = vsel %vm837, %v842, %v841
      %vm844 = vcmp.lt.s32.totalorder %v644, 0
      %v845 = vsub.s32 0, %v644
      %v846 = vsel %vm844, %v845, %v644
      %v847 = vshrl.u32 %v846, 4
      %v848 = vand.u32 %v846, 15
      %v849 = vsub.s32 0, %v848
      %v850 = vsel %vm844, %v849, %v848
      %vm851 = vcmp.lt.s32.totalorder %v645, 0
      %v852 = vsub.s32 0, %v645
      %v853 = vsel %vm851, %v852, %v645
      %v854 = vshrl.u32 %v853, 4
      %v855 = vand.u32 %v853, 15
      %v856 = vsub.s32 0, %v855
      %v857 = vsel %vm851, %v856, %v855
      %vm858 = vcmp.lt.s32.totalorder %v646, 0
      %v859 = vsub.s32 0, %v646
      %v860 = vsel %vm858, %v859, %v646
      %v861 = vshrl.u32 %v860, 4
      %v862 = vand.u32 %v860, 15
      %v863 = vsub.s32 0, %v862
      %v864 = vsel %vm858, %v863, %v862
      %vm865 = vcmp.lt.s32.totalorder %v647, 0
      %v866 = vsub.s32 0, %v647
      %v867 = vsel %vm865, %v866, %v647
      %v868 = vshrl.u32 %v867, 4
      %v869 = vand.u32 %v867, 15
      %v870 = vsub.s32 0, %v869
      %v871 = vsel %vm865, %v870, %v869
      %vm872 = vcmp.ne.s32.totalorder %v654, 0
      %vm873 = vcmp.ne.s32.totalorder %v661, 0
      %vm874 = vcmp.ne.s32.totalorder %v668, 0
      %vm875 = vcmp.ne.s32.totalorder %v675, 0
      %vm876 = vcmp.ne.s32.totalorder %v682, 0
      %vm877 = vcmp.ne.s32.totalorder %v689, 0
      %vm878 = vcmp.ne.s32.totalorder %v696, 0
      %vm879 = vcmp.ne.s32.totalorder %v703, 0
      %vm880 = vcmp.ne.s32.totalorder %v710, 0
      %vm881 = vcmp.ne.s32.totalorder %v717, 0
      %vm882 = vcmp.ne.s32.totalorder %v724, 0
      %vm883 = vcmp.ne.s32.totalorder %v731, 0
      %vm884 = vcmp.ne.s32.totalorder %v738, 0
      %vm885 = vcmp.ne.s32.totalorder %v745, 0
      %vm886 = vcmp.ne.s32.totalorder %v752, 0
      %vm887 = vcmp.ne.s32.totalorder %v759, 0
      %vm888 = vcmp.ne.s32.totalorder %v766, 0
      %vm889 = vcmp.ne.s32.totalorder %v773, 0
      %vm890 = vcmp.ne.s32.totalorder %v780, 0
      %vm891 = vcmp.ne.s32.totalorder %v787, 0
      %vm892 = vcmp.ne.s32.totalorder %v794, 0
      %vm893 = vcmp.ne.s32.totalorder %v801, 0
      %vm894 = vcmp.ne.s32.totalorder %v808, 0
      %vm895 = vcmp.ne.s32.totalorder %v815, 0
      %vm896 = vcmp.ne.s32.totalorder %v822, 0
      %vm897 = vcmp.ne.s32.totalorder %v829, 0
      %vm898 = vcmp.ne.s32.totalorder %v836, 0
      %vm899 = vcmp.ne.s32.totalorder %v843, 0
      %vm900 = vcmp.ne.s32.totalorder %v850, 0
      %vm901 = vcmp.ne.s32.totalorder %v857, 0
      %vm902 = vcmp.ne.s32.totalorder %v864, 0
      %vm903 = vcmp.ne.s32.totalorder %v871, 0
      %vm904 = vcmp.lt.s32.totalorder %v654, 0
      %vm905 = vcmp.lt.s32.totalorder %v661, 0
      %vm906 = vcmp.lt.s32.totalorder %v668, 0
      %vm907 = vcmp.lt.s32.totalorder %v675, 0
      %vm908 = vcmp.lt.s32.totalorder %v682, 0
      %vm909 = vcmp.lt.s32.totalorder %v689, 0
      %vm910 = vcmp.lt.s32.totalorder %v696, 0
      %vm911 = vcmp.lt.s32.totalorder %v703, 0
      %vm912 = vcmp.lt.s32.totalorder %v710, 0
      %vm913 = vcmp.lt.s32.totalorder %v717, 0
      %vm914 = vcmp.lt.s32.totalorder %v724, 0
      %vm915 = vcmp.lt.s32.totalorder %v731, 0
      %vm916 = vcmp.lt.s32.totalorder %v738, 0
      %vm917 = vcmp.lt.s32.totalorder %v745, 0
      %vm918 = vcmp.lt.s32.totalorder %v752, 0
      %vm919 = vcmp.lt.s32.totalorder %v759, 0
      %vm920 = vcmp.lt.s32.totalorder %v766, 0
      %vm921 = vcmp.lt.s32.totalorder %v773, 0
      %vm922 = vcmp.lt.s32.totalorder %v780, 0
      %vm923 = vcmp.lt.s32.totalorder %v787, 0
      %vm924 = vcmp.lt.s32.totalorder %v794, 0
      %vm925 = vcmp.lt.s32.totalorder %v801, 0
      %vm926 = vcmp.lt.s32.totalorder %v808, 0
      %vm927 = vcmp.lt.s32.totalorder %v815, 0
      %vm928 = vcmp.lt.s32.totalorder %v822, 0
      %vm929 = vcmp.lt.s32.totalorder %v829, 0
      %vm930 = vcmp.lt.s32.totalorder %v836, 0
      %vm931 = vcmp.lt.s32.totalorder %v843, 0
      %vm932 = vcmp.lt.s32.totalorder %v850, 0
      %vm933 = vcmp.lt.s32.totalorder %v857, 0
      %vm934 = vcmp.lt.s32.totalorder %v864, 0
      %vm935 = vcmp.lt.s32.totalorder %v871, 0
      %vm936 = vmand %vm904, %vm872
      %vm937 = vmand %vm905, %vm873
      %vm938 = vmand %vm906, %vm874
      %vm939 = vmand %vm907, %vm875
      %vm940 = vmand %vm908, %vm876
      %vm941 = vmand %vm909, %vm877
      %vm942 = vmand %vm910, %vm878
      %vm943 = vmand %vm911, %vm879
      %vm944 = vmand %vm912, %vm880
      %vm945 = vmand %vm913, %vm881
      %vm946 = vmand %vm914, %vm882
      %vm947 = vmand %vm915, %vm883
      %vm948 = vmand %vm916, %vm884
      %vm949 = vmand %vm917, %vm885
      %vm950 = vmand %vm918, %vm886
      %vm951 = vmand %vm919, %vm887
      %vm952 = vmand %vm920, %vm888
      %vm953 = vmand %vm921, %vm889
      %vm954 = vmand %vm922, %vm890
      %vm955 = vmand %vm923, %vm891
      %vm956 = vmand %vm924, %vm892
      %vm957 = vmand %vm925, %vm893
      %vm958 = vmand %vm926, %vm894
      %vm959 = vmand %vm927, %vm895
      %vm960 = vmand %vm928, %vm896
      %vm961 = vmand %vm929, %vm897
      %vm962 = vmand %vm930, %vm898
      %vm963 = vmand %vm931, %vm899
      %vm964 = vmand %vm932, %vm900
      %vm965 = vmand %vm933, %vm901
      %vm966 = vmand %vm934, %vm902
      %vm967 = vmand %vm935, %vm903
      %v968 = vadd.s32 %v654, 16
      %v969 = vadd.s32 %v661, 16
      %v970 = vadd.s32 %v668, 16
      %v971 = vadd.s32 %v675, 16
      %v972 = vadd.s32 %v682, 16
      %v973 = vadd.s32 %v689, 16
      %v974 = vadd.s32 %v696, 16
      %v975 = vadd.s32 %v703, 16
      %v976 = vadd.s32 %v710, 16
      %v977 = vadd.s32 %v717, 16
      %v978 = vadd.s32 %v724, 16
      %v979 = vadd.s32 %v731, 16
      %v980 = vadd.s32 %v738, 16
      %v981 = vadd.s32 %v745, 16
      %v982 = vadd.s32 %v752, 16
      %v983 = vadd.s32 %v759, 16
      %v984 = vadd.s32 %v766, 16
      %v985 = vadd.s32 %v773, 16
      %v986 = vadd.s32 %v780, 16
      %v987 = vadd.s32 %v787, 16
      %v988 = vadd.s32 %v794, 16
      %v989 = vadd.s32 %v801, 16
      %v990 = vadd.s32 %v808, 16
      %v991 = vadd.s32 %v815, 16
      %v992 = vadd.s32 %v822, 16
      %v993 = vadd.s32 %v829, 16
      %v994 = vadd.s32 %v836, 16
      %v995 = vadd.s32 %v843, 16
      %v996 = vadd.s32 %v850, 16
      %v997 = vadd.s32 %v857, 16
      %v998 = vadd.s32 %v864, 16
      %v999 = vadd.s32 %v871, 16
      %v1000 = vsel %vm936, %v968, %v654
      %v1001 = vsel %vm937, %v969, %v661
      %v1002 = vsel %vm938, %v970, %v668
      %v1003 = vsel %vm939, %v971, %v675
      %v1004 = vsel %vm940, %v972, %v682
      %v1005 = vsel %vm941, %v973, %v689
      %v1006 = vsel %vm942, %v974, %v696
      %v1007 = vsel %vm943, %v975, %v703
      %v1008 = vsel %vm944, %v976, %v710
      %v1009 = vsel %vm945, %v977, %v717
      %v1010 = vsel %vm946, %v978, %v724
      %v1011 = vsel %vm947, %v979, %v731
      %v1012 = vsel %vm948, %v980, %v738
      %v1013 = vsel %vm949, %v981, %v745
      %v1014 = vsel %vm950, %v982, %v752
      %v1015 = vsel %vm951, %v983, %v759
      %v1016 = vsel %vm952, %v984, %v766
      %v1017 = vsel %vm953, %v985, %v773
      %v1018 = vsel %vm954, %v986, %v780
      %v1019 = vsel %vm955, %v987, %v787
      %v1020 = vsel %vm956, %v988, %v794
      %v1021 = vsel %vm957, %v989, %v801
      %v1022 = vsel %vm958, %v990, %v808
      %v1023 = vsel %vm959, %v991, %v815
      %v1024 = vsel %vm960, %v992, %v822
      %v1025 = vsel %vm961, %v993, %v829
      %v1026 = vsel %vm962, %v994, %v836
      %v1027 = vsel %vm963, %v995, %v843
      %v1028 = vsel %vm964, %v996, %v850
      %v1029 = vsel %vm965, %v997, %v857
      %v1030 = vsel %vm966, %v998, %v864
      %v1031 = vsel %vm967, %v999, %v871
      %s1032 = scalar_lea.vmem %s5, 128
      %v1033 = vld [vmem:[%s1032] sm:$0xff]
      %v1034 = vld [vmem:[%s1032 + $0x8] sm:$0xff]
      %v1035 = vld [vmem:[%s1032 + $0x10] sm:$0xff]
      %v1036 = vld [vmem:[%s1032 + $0x18] sm:$0xff]
      %v1037 = vld [vmem:[%s1032 + $0x20] sm:$0xff]
      %v1038 = vld [vmem:[%s1032 + $0x28] sm:$0xff]
      %v1039 = vld [vmem:[%s1032 + $0x30] sm:$0xff]
      %v1040 = vld [vmem:[%s1032 + $0x38] sm:$0xff]
      %v1041 = vld [vmem:[%s1032 + $0x40] sm:$0xff]
      %v1042 = vld [vmem:[%s1032 + $0x48] sm:$0xff]
      %v1043 = vld [vmem:[%s1032 + $0x50] sm:$0xff]
      %v1044 = vld [vmem:[%s1032 + $0x58] sm:$0xff]
      %v1045 = vld [vmem:[%s1032 + $0x60] sm:$0xff]
      %v1046 = vld [vmem:[%s1032 + $0x68] sm:$0xff]
      %v1047 = vld [vmem:[%s1032 + $0x70] sm:$0xff]
      %v1048 = vld [vmem:[%s1032 + $0x78] sm:$0xff]
      %s1049 = scalar_lea.vmem %s5, 512
      %v1050 = vld [vmem:[%s1049] sm:$0xff]
      %v1051 = vld [vmem:[%s1049 + $0x8] sm:$0xff]
      %v1052 = vld [vmem:[%s1049 + $0x10] sm:$0xff]
      %v1053 = vld [vmem:[%s1049 + $0x18] sm:$0xff]
      %v1054 = vld [vmem:[%s1049 + $0x20] sm:$0xff]
      %v1055 = vld [vmem:[%s1049 + $0x28] sm:$0xff]
      %v1056 = vld [vmem:[%s1049 + $0x30] sm:$0xff]
      %v1057 = vld [vmem:[%s1049 + $0x38] sm:$0xff]
      %v1058 = vld [vmem:[%s1049 + $0x40] sm:$0xff]
      %v1059 = vld [vmem:[%s1049 + $0x48] sm:$0xff]
      %v1060 = vld [vmem:[%s1049 + $0x50] sm:$0xff]
      %v1061 = vld [vmem:[%s1049 + $0x58] sm:$0xff]
      %v1062 = vld [vmem:[%s1049 + $0x60] sm:$0xff]
      %v1063 = vld [vmem:[%s1049 + $0x68] sm:$0xff]
      %v1064 = vld [vmem:[%s1049 + $0x70] sm:$0xff]
      %v1065 = vld [vmem:[%s1049 + $0x78] sm:$0xff]
      %1066 = vmatpush.msra.mxu0 %v1065
      %1067 = vmatpush.msra.mxu0 %v1064
      %1068 = vmatpush.msra.mxu0 %v1063
      %1069 = vmatpush.msra.mxu0 %v1062
      %1070 = vmatpush.msra.mxu0 %v1061
      %1071 = vmatpush.msra.mxu0 %v1060
      %1072 = vmatpush.msra.mxu0 %v1059
      %1073 = vmatpush.msra.mxu0 %v1058
      %1074 = vmatpush.msra.mxu0 %v1057
      %1075 = vmatpush.msra.mxu0 %v1056
      %1076 = vmatpush.msra.mxu0 %v1055
      %1077 = vmatpush.msra.mxu0 %v1054
      %1078 = vmatpush.msra.mxu0 %v1053
      %1079 = vmatpush.msra.mxu0 %v1052
      %1080 = vmatpush.msra.mxu0 %v1051
      %1081 = vmatpush.msra.mxu0 %v1050
      %1082 = vmatmul.f32.gmra.mxu0 %v583
      %v1083 = vpop.f32.mrf.mxu0
      %v1084 = vadd.f32 0.0, %v1083
      %1085 = vmatmul.f32.gmra.mxu0 %v584
      %v1086 = vpop.f32.mrf.mxu0
      %v1087 = vadd.f32 0.0, %v1086
      %1088 = vmatmul.f32.gmra.mxu0 %v585
      %v1089 = vpop.f32.mrf.mxu0
      %v1090 = vadd.f32 0.0, %v1089
      %1091 = vmatmul.f32.gmra.mxu0 %v586
      %v1092 = vpop.f32.mrf.mxu0
      %v1093 = vadd.f32 0.0, %v1092
      %1094 = vmatmul.f32.gmra.mxu0 %v587
      %v1095 = vpop.f32.mrf.mxu0
      %v1096 = vadd.f32 0.0, %v1095
      %1097 = vmatmul.f32.gmra.mxu0 %v588
      %v1098 = vpop.f32.mrf.mxu0
      %v1099 = vadd.f32 0.0, %v1098
      %1100 = vmatmul.f32.gmra.mxu0 %v589
      %v1101 = vpop.f32.mrf.mxu0
      %v1102 = vadd.f32 0.0, %v1101
      %1103 = vmatmul.f32.gmra.mxu0 %v590
      %v1104 = vpop.f32.mrf.mxu0
      %v1105 = vadd.f32 0.0, %v1104
      %1106 = vmatmul.f32.gmra.mxu0 %v591
      %v1107 = vpop.f32.mrf.mxu0
      %v1108 = vadd.f32 0.0, %v1107
      %1109 = vmatmul.f32.gmra.mxu0 %v592
      %v1110 = vpop.f32.mrf.mxu0
      %v1111 = vadd.f32 0.0, %v1110
      %1112 = vmatmul.f32.gmra.mxu0 %v593
      %v1113 = vpop.f32.mrf.mxu0
      %v1114 = vadd.f32 0.0, %v1113
      %1115 = vmatmul.f32.gmra.mxu0 %v594
      %v1116 = vpop.f32.mrf.mxu0
      %v1117 = vadd.f32 0.0, %v1116
      %1118 = vmatmul.f32.gmra.mxu0 %v595
      %v1119 = vpop.f32.mrf.mxu0
      %v1120 = vadd.f32 0.0, %v1119
      %1121 = vmatmul.f32.gmra.mxu0 %v596
      %v1122 = vpop.f32.mrf.mxu0
      %v1123 = vadd.f32 0.0, %v1122
      %1124 = vmatmul.f32.gmra.mxu0 %v597
      %v1125 = vpop.f32.mrf.mxu0
      %v1126 = vadd.f32 0.0, %v1125
      %1127 = vmatmul.f32.gmra.mxu0 %v598
      %v1128 = vpop.f32.mrf.mxu0
      %v1129 = vadd.f32 0.0, %v1128
      %1130 = vmatmul.f32.gmra.mxu0 %v599
      %v1131 = vpop.f32.mrf.mxu0
      %v1132 = vadd.f32 0.0, %v1131
      %1133 = vmatmul.f32.gmra.mxu0 %v600
      %v1134 = vpop.f32.mrf.mxu0
      %v1135 = vadd.f32 0.0, %v1134
      %1136 = vmatmul.f32.gmra.mxu0 %v601
      %v1137 = vpop.f32.mrf.mxu0
      %v1138 = vadd.f32 0.0, %v1137
      %1139 = vmatmul.f32.gmra.mxu0 %v602
      %v1140 = vpop.f32.mrf.mxu0
      %v1141 = vadd.f32 0.0, %v1140
      %1142 = vmatmul.f32.gmra.mxu0 %v603
      %v1143 = vpop.f32.mrf.mxu0
      %v1144 = vadd.f32 0.0, %v1143
      %1145 = vmatmul.f32.gmra.mxu0 %v604
      %v1146 = vpop.f32.mrf.mxu0
      %v1147 = vadd.f32 0.0, %v1146
      %1148 = vmatmul.f32.gmra.mxu0 %v605
      %v1149 = vpop.f32.mrf.mxu0
      %v1150 = vadd.f32 0.0, %v1149
      %1151 = vmatmul.f32.gmra.mxu0 %v606
      %v1152 = vpop.f32.mrf.mxu0
      %v1153 = vadd.f32 0.0, %v1152
      %1154 = vmatmul.f32.gmra.mxu0 %v607
      %v1155 = vpop.f32.mrf.mxu0
      %v1156 = vadd.f32 0.0, %v1155
      %1157 = vmatmul.f32.gmra.mxu0 %v608
      %v1158 = vpop.f32.mrf.mxu0
      %v1159 = vadd.f32 0.0, %v1158
      %1160 = vmatmul.f32.gmra.mxu0 %v609
      %v1161 = vpop.f32.mrf.mxu0
      %v1162 = vadd.f32 0.0, %v1161
      %1163 = vmatmul.f32.gmra.mxu0 %v610
      %v1164 = vpop.f32.mrf.mxu0
      %v1165 = vadd.f32 0.0, %v1164
      %1166 = vmatmul.f32.gmra.mxu0 %v611
      %v1167 = vpop.f32.mrf.mxu0
      %v1168 = vadd.f32 0.0, %v1167
      %1169 = vmatmul.f32.gmra.mxu0 %v612
      %v1170 = vpop.f32.mrf.mxu0
      %v1171 = vadd.f32 0.0, %v1170
      %1172 = vmatmul.f32.gmra.mxu0 %v613
      %v1173 = vpop.f32.mrf.mxu0
      %v1174 = vadd.f32 0.0, %v1173
      %1175 = vmatmul.f32.gmra.mxu0 %v614
      %v1176 = vpop.f32.mrf.mxu0
      %v1177 = vadd.f32 0.0, %v1176
      %1178 = vdwg.mxu0
      %1179 = vmatpush.msra.mxu0 %v1048
      %1180 = vmatpush.msra.mxu0 %v1047
      %1181 = vmatpush.msra.mxu0 %v1046
      %1182 = vmatpush.msra.mxu0 %v1045
      %1183 = vmatpush.msra.mxu0 %v1044
      %1184 = vmatpush.msra.mxu0 %v1043
      %1185 = vmatpush.msra.mxu0 %v1042
      %1186 = vmatpush.msra.mxu0 %v1041
      %1187 = vmatpush.msra.mxu0 %v1040
      %1188 = vmatpush.msra.mxu0 %v1039
      %1189 = vmatpush.msra.mxu0 %v1038
      %1190 = vmatpush.msra.mxu0 %v1037
      %1191 = vmatpush.msra.mxu0 %v1036
      %1192 = vmatpush.msra.mxu0 %v1035
      %1193 = vmatpush.msra.mxu0 %v1034
      %1194 = vmatpush.msra.mxu0 %v1033
      %1195 = vmatmul.f32.gmra.mxu0 %v471
      %v1196 = vpop.f32.mrf.mxu0
      %v1197 = vadd.f32 %v1084, %v1196
      %1198 = vmatmul.f32.gmra.mxu0 %v472
      %v1199 = vpop.f32.mrf.mxu0
      %v1200 = vadd.f32 %v1087, %v1199
      %1201 = vmatmul.f32.gmra.mxu0 %v583
      %v1202 = vpop.f32.mrf.mxu0
      %v1203 = vadd.f32 %v1090, %v1202
      %1204 = vmatmul.f32.gmra.mxu0 %v584
      %v1205 = vpop.f32.mrf.mxu0
      %v1206 = vadd.f32 %v1093, %v1205
      %1207 = vmatmul.f32.gmra.mxu0 %v585
      %v1208 = vpop.f32.mrf.mxu0
      %v1209 = vadd.f32 %v1096, %v1208
      %1210 = vmatmul.f32.gmra.mxu0 %v586
      %v1211 = vpop.f32.mrf.mxu0
      %v1212 = vadd.f32 %v1099, %v1211
      %1213 = vmatmul.f32.gmra.mxu0 %v587
      %v1214 = vpop.f32.mrf.mxu0
      %v1215 = vadd.f32 %v1102, %v1214
      %1216 = vmatmul.f32.gmra.mxu0 %v588
      %v1217 = vpop.f32.mrf.mxu0
      %v1218 = vadd.f32 %v1105, %v1217
      %1219 = vmatmul.f32.gmra.mxu0 %v589
      %v1220 = vpop.f32.mrf.mxu0
      %v1221 = vadd.f32 %v1108, %v1220
      %1222 = vmatmul.f32.gmra.mxu0 %v590
      %v1223 = vpop.f32.mrf.mxu0
      %v1224 = vadd.f32 %v1111, %v1223
      %1225 = vmatmul.f32.gmra.mxu0 %v591
      %v1226 = vpop.f32.mrf.mxu0
      %v1227 = vadd.f32 %v1114, %v1226
      %1228 = vmatmul.f32.gmra.mxu0 %v592
      %v1229 = vpop.f32.mrf.mxu0
      %v1230 = vadd.f32 %v1117, %v1229
      %1231 = vmatmul.f32.gmra.mxu0 %v593
      %v1232 = vpop.f32.mrf.mxu0
      %v1233 = vadd.f32 %v1120, %v1232
      %1234 = vmatmul.f32.gmra.mxu0 %v594
      %v1235 = vpop.f32.mrf.mxu0
      %v1236 = vadd.f32 %v1123, %v1235
      %1237 = vmatmul.f32.gmra.mxu0 %v595
      %v1238 = vpop.f32.mrf.mxu0
      %v1239 = vadd.f32 %v1126, %v1238
      %1240 = vmatmul.f32.gmra.mxu0 %v596
      %v1241 = vpop.f32.mrf.mxu0
      %v1242 = vadd.f32 %v1129, %v1241
      %1243 = vmatmul.f32.gmra.mxu0 %v597
      %v1244 = vpop.f32.mrf.mxu0
      %v1245 = vadd.f32 %v1132, %v1244
      %1246 = vmatmul.f32.gmra.mxu0 %v598
      %v1247 = vpop.f32.mrf.mxu0
      %v1248 = vadd.f32 %v1135, %v1247
      %1249 = vmatmul.f32.gmra.mxu0 %v599
      %v1250 = vpop.f32.mrf.mxu0
      %v1251 = vadd.f32 %v1138, %v1250
      %1252 = vmatmul.f32.gmra.mxu0 %v600
      %v1253 = vpop.f32.mrf.mxu0
      %v1254 = vadd.f32 %v1141, %v1253
      %1255 = vmatmul.f32.gmra.mxu0 %v601
      %v1256 = vpop.f32.mrf.mxu0
      %v1257 = vadd.f32 %v1144, %v1256
      %1258 = vmatmul.f32.gmra.mxu0 %v602
      %v1259 = vpop.f32.mrf.mxu0
      %v1260 = vadd.f32 %v1147, %v1259
      %1261 = vmatmul.f32.gmra.mxu0 %v603
      %v1262 = vpop.f32.mrf.mxu0
      %v1263 = vadd.f32 %v1150, %v1262
      %1264 = vmatmul.f32.gmra.mxu0 %v604
      %v1265 = vpop.f32.mrf.mxu0
      %v1266 = vadd.f32 %v1153, %v1265
      %1267 = vmatmul.f32.gmra.mxu0 %v605
      %v1268 = vpop.f32.mrf.mxu0
      %v1269 = vadd.f32 %v1156, %v1268
      %1270 = vmatmul.f32.gmra.mxu0 %v606
      %v1271 = vpop.f32.mrf.mxu0
      %v1272 = vadd.f32 %v1159, %v1271
      %1273 = vmatmul.f32.gmra.mxu0 %v607
      %v1274 = vpop.f32.mrf.mxu0
      %v1275 = vadd.f32 %v1162, %v1274
      %1276 = vmatmul.f32.gmra.mxu0 %v608
      %v1277 = vpop.f32.mrf.mxu0
      %v1278 = vadd.f32 %v1165, %v1277
      %1279 = vmatmul.f32.gmra.mxu0 %v609
      %v1280 = vpop.f32.mrf.mxu0
      %v1281 = vadd.f32 %v1168, %v1280
      %1282 = vmatmul.f32.gmra.mxu0 %v610
      %v1283 = vpop.f32.mrf.mxu0
      %v1284 = vadd.f32 %v1171, %v1283
      %1285 = vmatmul.f32.gmra.mxu0 %v611
      %v1286 = vpop.f32.mrf.mxu0
      %v1287 = vadd.f32 %v1174, %v1286
      %1288 = vmatmul.f32.gmra.mxu0 %v612
      %v1289 = vpop.f32.mrf.mxu0
      %v1290 = vadd.f32 %v1177, %v1289
      %1291 = vdwg.mxu0
      %s1292 = scalar_lea.vmem %s5, 896
      %v1293 = vld [vmem:[%s1292] sm:$0xff]
      %v1294 = vld [vmem:[%s1292 + $0x8] sm:$0xff]
      %v1295 = vld [vmem:[%s1292 + $0x10] sm:$0xff]
      %v1296 = vld [vmem:[%s1292 + $0x18] sm:$0xff]
      %v1297 = vld [vmem:[%s1292 + $0x20] sm:$0xff]
      %v1298 = vld [vmem:[%s1292 + $0x28] sm:$0xff]
      %v1299 = vld [vmem:[%s1292 + $0x30] sm:$0xff]
      %v1300 = vld [vmem:[%s1292 + $0x38] sm:$0xff]
      %v1301 = vld [vmem:[%s1292 + $0x40] sm:$0xff]
      %v1302 = vld [vmem:[%s1292 + $0x48] sm:$0xff]
      %v1303 = vld [vmem:[%s1292 + $0x50] sm:$0xff]
      %v1304 = vld [vmem:[%s1292 + $0x58] sm:$0xff]
      %v1305 = vld [vmem:[%s1292 + $0x60] sm:$0xff]
      %v1306 = vld [vmem:[%s1292 + $0x68] sm:$0xff]
      %v1307 = vld [vmem:[%s1292 + $0x70] sm:$0xff]
      %v1308 = vld [vmem:[%s1292 + $0x78] sm:$0xff]
      %1309 = vmatpush.msra.mxu0 %v1308
      %1310 = vmatpush.msra.mxu0 %v1307
      %1311 = vmatpush.msra.mxu0 %v1306
      %1312 = vmatpush.msra.mxu0 %v1305
      %1313 = vmatpush.msra.mxu0 %v1304
      %1314 = vmatpush.msra.mxu0 %v1303
      %1315 = vmatpush.msra.mxu0 %v1302
      %1316 = vmatpush.msra.mxu0 %v1301
      %1317 = vmatpush.msra.mxu0 %v1300
      %1318 = vmatpush.msra.mxu0 %v1299
      %1319 = vmatpush.msra.mxu0 %v1298
      %1320 = vmatpush.msra.mxu0 %v1297
      %1321 = vmatpush.msra.mxu0 %v1296
      %1322 = vmatpush.msra.mxu0 %v1295
      %1323 = vmatpush.msra.mxu0 %v1294
      %1324 = vmatpush.msra.mxu0 %v1293
      %1325 = vmatmul.f32.gmra.mxu0 %v585
      %v1326 = vpop.f32.mrf.mxu0
      %v1327 = vadd.f32 0.0, %v1326
      %1328 = vmatmul.f32.gmra.mxu0 %v586
      %v1329 = vpop.f32.mrf.mxu0
      %v1330 = vadd.f32 0.0, %v1329
      %1331 = vmatmul.f32.gmra.mxu0 %v587
      %v1332 = vpop.f32.mrf.mxu0
      %v1333 = vadd.f32 0.0, %v1332
      %1334 = vmatmul.f32.gmra.mxu0 %v588
      %v1335 = vpop.f32.mrf.mxu0
      %v1336 = vadd.f32 0.0, %v1335
      %1337 = vmatmul.f32.gmra.mxu0 %v589
      %v1338 = vpop.f32.mrf.mxu0
      %v1339 = vadd.f32 0.0, %v1338
      %1340 = vmatmul.f32.gmra.mxu0 %v590
      %v1341 = vpop.f32.mrf.mxu0
      %v1342 = vadd.f32 0.0, %v1341
      %1343 = vmatmul.f32.gmra.mxu0 %v591
      %v1344 = vpop.f32.mrf.mxu0
      %v1345 = vadd.f32 0.0, %v1344
      %1346 = vmatmul.f32.gmra.mxu0 %v592
      %v1347 = vpop.f32.mrf.mxu0
      %v1348 = vadd.f32 0.0, %v1347
      %1349 = vmatmul.f32.gmra.mxu0 %v593
      %v1350 = vpop.f32.mrf.mxu0
      %v1351 = vadd.f32 0.0, %v1350
      %1352 = vmatmul.f32.gmra.mxu0 %v594
      %v1353 = vpop.f32.mrf.mxu0
      %v1354 = vadd.f32 0.0, %v1353
      %1355 = vmatmul.f32.gmra.mxu0 %v595
      %v1356 = vpop.f32.mrf.mxu0
      %v1357 = vadd.f32 0.0, %v1356
      %1358 = vmatmul.f32.gmra.mxu0 %v596
      %v1359 = vpop.f32.mrf.mxu0
      %v1360 = vadd.f32 0.0, %v1359
      %1361 = vmatmul.f32.gmra.mxu0 %v597
      %v1362 = vpop.f32.mrf.mxu0
      %v1363 = vadd.f32 0.0, %v1362
      %1364 = vmatmul.f32.gmra.mxu0 %v598
      %v1365 = vpop.f32.mrf.mxu0
      %v1366 = vadd.f32 0.0, %v1365
      %1367 = vmatmul.f32.gmra.mxu0 %v599
      %v1368 = vpop.f32.mrf.mxu0
      %v1369 = vadd.f32 0.0, %v1368
      %1370 = vmatmul.f32.gmra.mxu0 %v600
      %v1371 = vpop.f32.mrf.mxu0
      %v1372 = vadd.f32 0.0, %v1371
      %1373 = vmatmul.f32.gmra.mxu0 %v601
      %v1374 = vpop.f32.mrf.mxu0
      %v1375 = vadd.f32 0.0, %v1374
      %1376 = vmatmul.f32.gmra.mxu0 %v602
      %v1377 = vpop.f32.mrf.mxu0
      %v1378 = vadd.f32 0.0, %v1377
      %1379 = vmatmul.f32.gmra.mxu0 %v603
      %v1380 = vpop.f32.mrf.mxu0
      %v1381 = vadd.f32 0.0, %v1380
      %1382 = vmatmul.f32.gmra.mxu0 %v604
      %v1383 = vpop.f32.mrf.mxu0
      %v1384 = vadd.f32 0.0, %v1383
      %1385 = vmatmul.f32.gmra.mxu0 %v605
      %v1386 = vpop.f32.mrf.mxu0
      %v1387 = vadd.f32 0.0, %v1386
      %1388 = vmatmul.f32.gmra.mxu0 %v606
      %v1389 = vpop.f32.mrf.mxu0
      %v1390 = vadd.f32 0.0, %v1389
      %1391 = vmatmul.f32.gmra.mxu0 %v607
      %v1392 = vpop.f32.mrf.mxu0
      %v1393 = vadd.f32 0.0, %v1392
      %1394 = vmatmul.f32.gmra.mxu0 %v608
      %v1395 = vpop.f32.mrf.mxu0
      %v1396 = vadd.f32 0.0, %v1395
      %1397 = vmatmul.f32.gmra.mxu0 %v609
      %v1398 = vpop.f32.mrf.mxu0
      %v1399 = vadd.f32 0.0, %v1398
      %1400 = vmatmul.f32.gmra.mxu0 %v610
      %v1401 = vpop.f32.mrf.mxu0
      %v1402 = vadd.f32 0.0, %v1401
      %1403 = vmatmul.f32.gmra.mxu0 %v611
      %v1404 = vpop.f32.mrf.mxu0
      %v1405 = vadd.f32 0.0, %v1404
      %1406 = vmatmul.f32.gmra.mxu0 %v612
      %v1407 = vpop.f32.mrf.mxu0
      %v1408 = vadd.f32 0.0, %v1407
      %1409 = vmatmul.f32.gmra.mxu0 %v613
      %v1410 = vpop.f32.mrf.mxu0
      %v1411 = vadd.f32 0.0, %v1410
      %1412 = vmatmul.f32.gmra.mxu0 %v614
      %v1413 = vpop.f32.mrf.mxu0
      %v1414 = vadd.f32 0.0, %v1413
      %1415 = vmatmul.f32.gmra.mxu0 %v485
      %v1416 = vpop.f32.mrf.mxu0
      %v1417 = vadd.f32 0.0, %v1416
      %1418 = vmatmul.f32.gmra.mxu0 %v486
      %v1419 = vpop.f32.mrf.mxu0
      %v1420 = vadd.f32 0.0, %v1419
      %1421 = vdwg.mxu0
      %v1422 = vadd.f32 %v1197, %v1327
      %v1423 = vadd.f32 %v1200, %v1330
      %v1424 = vadd.f32 %v1203, %v1333
      %v1425 = vadd.f32 %v1206, %v1336
      %v1426 = vadd.f32 %v1209, %v1339
      %v1427 = vadd.f32 %v1212, %v1342
      %v1428 = vadd.f32 %v1215, %v1345
      %v1429 = vadd.f32 %v1218, %v1348
      %v1430 = vadd.f32 %v1221, %v1351
      %v1431 = vadd.f32 %v1224, %v1354
      %v1432 = vadd.f32 %v1227, %v1357
      %v1433 = vadd.f32 %v1230, %v1360
      %v1434 = vadd.f32 %v1233, %v1363
      %v1435 = vadd.f32 %v1236, %v1366
      %v1436 = vadd.f32 %v1239, %v1369
      %v1437 = vadd.f32 %v1242, %v1372
      %v1438 = vadd.f32 %v1245, %v1375
      %v1439 = vadd.f32 %v1248, %v1378
      %v1440 = vadd.f32 %v1251, %v1381
      %v1441 = vadd.f32 %v1254, %v1384
      %v1442 = vadd.f32 %v1257, %v1387
      %v1443 = vadd.f32 %v1260, %v1390
      %v1444 = vadd.f32 %v1263, %v1393
      %v1445 = vadd.f32 %v1266, %v1396
      %v1446 = vadd.f32 %v1269, %v1399
      %v1447 = vadd.f32 %v1272, %v1402
      %v1448 = vadd.f32 %v1275, %v1405
      %v1449 = vadd.f32 %v1278, %v1408
      %v1450 = vadd.f32 %v1281, %v1411
      %v1451 = vadd.f32 %v1284, %v1414
      %v1452 = vadd.f32 %v1287, %v1417
      %v1453 = vadd.f32 %v1290, %v1420
      %v1454 = vld [vmem:[%s5] sm:$0xff]
      %v1455 = vld [vmem:[%s5 + $0x8] sm:$0xff]
      %v1456 = vld [vmem:[%s5 + $0x10] sm:$0xff]
      %v1457 = vld [vmem:[%s5 + $0x18] sm:$0xff]
      %v1458 = vld [vmem:[%s5 + $0x20] sm:$0xff]
      %v1459 = vld [vmem:[%s5 + $0x28] sm:$0xff]
      %v1460 = vld [vmem:[%s5 + $0x30] sm:$0xff]
      %v1461 = vld [vmem:[%s5 + $0x38] sm:$0xff]
      %v1462 = vld [vmem:[%s5 + $0x40] sm:$0xff]
      %v1463 = vld [vmem:[%s5 + $0x48] sm:$0xff]
      %v1464 = vld [vmem:[%s5 + $0x50] sm:$0xff]
      %v1465 = vld [vmem:[%s5 + $0x58] sm:$0xff]
      %v1466 = vld [vmem:[%s5 + $0x60] sm:$0xff]
      %v1467 = vld [vmem:[%s5 + $0x68] sm:$0xff]
      %v1468 = vld [vmem:[%s5 + $0x70] sm:$0xff]
      %v1469 = vld [vmem:[%s5 + $0x78] sm:$0xff]
      %s1470 = scalar_lea.vmem %s5, 384
      %v1471 = vld [vmem:[%s1470] sm:$0xff]
      %v1472 = vld [vmem:[%s1470 + $0x8] sm:$0xff]
      %v1473 = vld [vmem:[%s1470 + $0x10] sm:$0xff]
      %v1474 = vld [vmem:[%s1470 + $0x18] sm:$0xff]
      %v1475 = vld [vmem:[%s1470 + $0x20] sm:$0xff]
      %v1476 = vld [vmem:[%s1470 + $0x28] sm:$0xff]
      %v1477 = vld [vmem:[%s1470 + $0x30] sm:$0xff]
      %v1478 = vld [vmem:[%s1470 + $0x38] sm:$0xff]
      %v1479 = vld [vmem:[%s1470 + $0x40] sm:$0xff]
      %v1480 = vld [vmem:[%s1470 + $0x48] sm:$0xff]
      %v1481 = vld [vmem:[%s1470 + $0x50] sm:$0xff]
      %v1482 = vld [vmem:[%s1470 + $0x58] sm:$0xff]
      %v1483 = vld [vmem:[%s1470 + $0x60] sm:$0xff]
      %v1484 = vld [vmem:[%s1470 + $0x68] sm:$0xff]
      %v1485 = vld [vmem:[%s1470 + $0x70] sm:$0xff]
      %v1486 = vld [vmem:[%s1470 + $0x78] sm:$0xff]
      %1487 = vmatpush.msra.mxu0 %v1486
      %1488 = vmatpush.msra.mxu0 %v1485
      %1489 = vmatpush.msra.mxu0 %v1484
      %1490 = vmatpush.msra.mxu0 %v1483
      %1491 = vmatpush.msra.mxu0 %v1482
      %1492 = vmatpush.msra.mxu0 %v1481
      %1493 = vmatpush.msra.mxu0 %v1480
      %1494 = vmatpush.msra.mxu0 %v1479
      %1495 = vmatpush.msra.mxu0 %v1478
      %1496 = vmatpush.msra.mxu0 %v1477
      %1497 = vmatpush.msra.mxu0 %v1476
      %1498 = vmatpush.msra.mxu0 %v1475
      %1499 = vmatpush.msra.mxu0 %v1474
      %1500 = vmatpush.msra.mxu0 %v1473
      %1501 = vmatpush.msra.mxu0 %v1472
      %1502 = vmatpush.msra.mxu0 %v1471
      %1503 = vmatmul.f32.gmra.mxu0 %v583
      %v1504 = vpop.f32.mrf.mxu0
      %v1505 = vadd.f32 0.0, %v1504
      %1506 = vmatmul.f32.gmra.mxu0 %v584
      %v1507 = vpop.f32.mrf.mxu0
      %v1508 = vadd.f32 0.0, %v1507
      %1509 = vmatmul.f32.gmra.mxu0 %v585
      %v1510 = vpop.f32.mrf.mxu0
      %v1511 = vadd.f32 0.0, %v1510
      %1512 = vmatmul.f32.gmra.mxu0 %v586
      %v1513 = vpop.f32.mrf.mxu0
      %v1514 = vadd.f32 0.0, %v1513
      %1515 = vmatmul.f32.gmra.mxu0 %v587
      %v1516 = vpop.f32.mrf.mxu0
      %v1517 = vadd.f32 0.0, %v1516
      %1518 = vmatmul.f32.gmra.mxu0 %v588
      %v1519 = vpop.f32.mrf.mxu0
      %v1520 = vadd.f32 0.0, %v1519
      %1521 = vmatmul.f32.gmra.mxu0 %v589
      %v1522 = vpop.f32.mrf.mxu0
      %v1523 = vadd.f32 0.0, %v1522
      %1524 = vmatmul.f32.gmra.mxu0 %v590
      %v1525 = vpop.f32.mrf.mxu0
      %v1526 = vadd.f32 0.0, %v1525
      %1527 = vmatmul.f32.gmra.mxu0 %v591
      %v1528 = vpop.f32.mrf.mxu0
      %v1529 = vadd.f32 0.0, %v1528
      %1530 = vmatmul.f32.gmra.mxu0 %v592
      %v1531 = vpop.f32.mrf.mxu0
      %v1532 = vadd.f32 0.0, %v1531
      %1533 = vmatmul.f32.gmra.mxu0 %v593
      %v1534 = vpop.f32.mrf.mxu0
      %v1535 = vadd.f32 0.0, %v1534
      %1536 = vmatmul.f32.gmra.mxu0 %v594
      %v1537 = vpop.f32.mrf.mxu0
      %v1538 = vadd.f32 0.0, %v1537
      %1539 = vmatmul.f32.gmra.mxu0 %v595
      %v1540 = vpop.f32.mrf.mxu0
      %v1541 = vadd.f32 0.0, %v1540
      %1542 = vmatmul.f32.gmra.mxu0 %v596
      %v1543 = vpop.f32.mrf.mxu0
      %v1544 = vadd.f32 0.0, %v1543
      %1545 = vmatmul.f32.gmra.mxu0 %v597
      %v1546 = vpop.f32.mrf.mxu0
      %v1547 = vadd.f32 0.0, %v1546
      %1548 = vmatmul.f32.gmra.mxu0 %v598
      %v1549 = vpop.f32.mrf.mxu0
      %v1550 = vadd.f32 0.0, %v1549
      %1551 = vmatmul.f32.gmra.mxu0 %v599
      %v1552 = vpop.f32.mrf.mxu0
      %v1553 = vadd.f32 0.0, %v1552
      %1554 = vmatmul.f32.gmra.mxu0 %v600
      %v1555 = vpop.f32.mrf.mxu0
      %v1556 = vadd.f32 0.0, %v1555
      %1557 = vmatmul.f32.gmra.mxu0 %v601
      %v1558 = vpop.f32.mrf.mxu0
      %v1559 = vadd.f32 0.0, %v1558
      %1560 = vmatmul.f32.gmra.mxu0 %v602
      %v1561 = vpop.f32.mrf.mxu0
      %v1562 = vadd.f32 0.0, %v1561
      %1563 = vmatmul.f32.gmra.mxu0 %v603
      %v1564 = vpop.f32.mrf.mxu0
      %v1565 = vadd.f32 0.0, %v1564
      %1566 = vmatmul.f32.gmra.mxu0 %v604
      %v1567 = vpop.f32.mrf.mxu0
      %v1568 = vadd.f32 0.0, %v1567
      %1569 = vmatmul.f32.gmra.mxu0 %v605
      %v1570 = vpop.f32.mrf.mxu0
      %v1571 = vadd.f32 0.0, %v1570
      %1572 = vmatmul.f32.gmra.mxu0 %v606
      %v1573 = vpop.f32.mrf.mxu0
      %v1574 = vadd.f32 0.0, %v1573
      %1575 = vmatmul.f32.gmra.mxu0 %v607
      %v1576 = vpop.f32.mrf.mxu0
      %v1577 = vadd.f32 0.0, %v1576
      %1578 = vmatmul.f32.gmra.mxu0 %v608
      %v1579 = vpop.f32.mrf.mxu0
      %v1580 = vadd.f32 0.0, %v1579
      %1581 = vmatmul.f32.gmra.mxu0 %v609
      %v1582 = vpop.f32.mrf.mxu0
      %v1583 = vadd.f32 0.0, %v1582
      %1584 = vmatmul.f32.gmra.mxu0 %v610
      %v1585 = vpop.f32.mrf.mxu0
      %v1586 = vadd.f32 0.0, %v1585
      %1587 = vmatmul.f32.gmra.mxu0 %v611
      %v1588 = vpop.f32.mrf.mxu0
      %v1589 = vadd.f32 0.0, %v1588
      %1590 = vmatmul.f32.gmra.mxu0 %v612
      %v1591 = vpop.f32.mrf.mxu0
      %v1592 = vadd.f32 0.0, %v1591
      %1593 = vmatmul.f32.gmra.mxu0 %v613
      %v1594 = vpop.f32.mrf.mxu0
      %v1595 = vadd.f32 0.0, %v1594
      %1596 = vmatmul.f32.gmra.mxu0 %v614
      %v1597 = vpop.f32.mrf.mxu0
      %v1598 = vadd.f32 0.0, %v1597
      %1599 = vdwg.mxu0
      %1600 = vmatpush.msra.mxu0 %v1469
      %1601 = vmatpush.msra.mxu0 %v1468
      %1602 = vmatpush.msra.mxu0 %v1467
      %1603 = vmatpush.msra.mxu0 %v1466
      %1604 = vmatpush.msra.mxu0 %v1465
      %1605 = vmatpush.msra.mxu0 %v1464
      %1606 = vmatpush.msra.mxu0 %v1463
      %1607 = vmatpush.msra.mxu0 %v1462
      %1608 = vmatpush.msra.mxu0 %v1461
      %1609 = vmatpush.msra.mxu0 %v1460
      %1610 = vmatpush.msra.mxu0 %v1459
      %1611 = vmatpush.msra.mxu0 %v1458
      %1612 = vmatpush.msra.mxu0 %v1457
      %1613 = vmatpush.msra.mxu0 %v1456
      %1614 = vmatpush.msra.mxu0 %v1455
      %1615 = vmatpush.msra.mxu0 %v1454
      %1616 = vmatmul.f32.gmra.mxu0 %v471
      %v1617 = vpop.f32.mrf.mxu0
      %v1618 = vadd.f32 %v1505, %v1617
      %1619 = vmatmul.f32.gmra.mxu0 %v472
      %v1620 = vpop.f32.mrf.mxu0
      %v1621 = vadd.f32 %v1508, %v1620
      %1622 = vmatmul.f32.gmra.mxu0 %v583
      %v1623 = vpop.f32.mrf.mxu0
      %v1624 = vadd.f32 %v1511, %v1623
      %1625 = vmatmul.f32.gmra.mxu0 %v584
      %v1626 = vpop.f32.mrf.mxu0
      %v1627 = vadd.f32 %v1514, %v1626
      %1628 = vmatmul.f32.gmra.mxu0 %v585
      %v1629 = vpop.f32.mrf.mxu0
      %v1630 = vadd.f32 %v1517, %v1629
      %1631 = vmatmul.f32.gmra.mxu0 %v586
      %v1632 = vpop.f32.mrf.mxu0
      %v1633 = vadd.f32 %v1520, %v1632
      %1634 = vmatmul.f32.gmra.mxu0 %v587
      %v1635 = vpop.f32.mrf.mxu0
      %v1636 = vadd.f32 %v1523, %v1635
      %1637 = vmatmul.f32.gmra.mxu0 %v588
      %v1638 = vpop.f32.mrf.mxu0
      %v1639 = vadd.f32 %v1526, %v1638
      %1640 = vmatmul.f32.gmra.mxu0 %v589
      %v1641 = vpop.f32.mrf.mxu0
      %v1642 = vadd.f32 %v1529, %v1641
      %1643 = vmatmul.f32.gmra.mxu0 %v590
      %v1644 = vpop.f32.mrf.mxu0
      %v1645 = vadd.f32 %v1532, %v1644
      %1646 = vmatmul.f32.gmra.mxu0 %v591
      %v1647 = vpop.f32.mrf.mxu0
      %v1648 = vadd.f32 %v1535, %v1647
      %1649 = vmatmul.f32.gmra.mxu0 %v592
      %v1650 = vpop.f32.mrf.mxu0
      %v1651 = vadd.f32 %v1538, %v1650
      %1652 = vmatmul.f32.gmra.mxu0 %v593
      %v1653 = vpop.f32.mrf.mxu0
      %v1654 = vadd.f32 %v1541, %v1653
      %1655 = vmatmul.f32.gmra.mxu0 %v594
      %v1656 = vpop.f32.mrf.mxu0
      %v1657 = vadd.f32 %v1544, %v1656
      %1658 = vmatmul.f32.gmra.mxu0 %v595
      %v1659 = vpop.f32.mrf.mxu0
      %v1660 = vadd.f32 %v1547, %v1659
      %1661 = vmatmul.f32.gmra.mxu0 %v596
      %v1662 = vpop.f32.mrf.mxu0
      %v1663 = vadd.f32 %v1550, %v1662
      %1664 = vmatmul.f32.gmra.mxu0 %v597
      %v1665 = vpop.f32.mrf.mxu0
      %v1666 = vadd.f32 %v1553, %v1665
      %1667 = vmatmul.f32.gmra.mxu0 %v598
      %v1668 = vpop.f32.mrf.mxu0
      %v1669 = vadd.f32 %v1556, %v1668
      %1670 = vmatmul.f32.gmra.mxu0 %v599
      %v1671 = vpop.f32.mrf.mxu0
      %v1672 = vadd.f32 %v1559, %v1671
      %1673 = vmatmul.f32.gmra.mxu0 %v600
      %v1674 = vpop.f32.mrf.mxu0
      %v1675 = vadd.f32 %v1562, %v1674
      %1676 = vmatmul.f32.gmra.mxu0 %v601
      %v1677 = vpop.f32.mrf.mxu0
      %v1678 = vadd.f32 %v1565, %v1677
      %1679 = vmatmul.f32.gmra.mxu0 %v602
      %v1680 = vpop.f32.mrf.mxu0
      %v1681 = vadd.f32 %v1568, %v1680
      %1682 = vmatmul.f32.gmra.mxu0 %v603
      %v1683 = vpop.f32.mrf.mxu0
      %v1684 = vadd.f32 %v1571, %v1683
      %1685 = vmatmul.f32.gmra.mxu0 %v604
      %v1686 = vpop.f32.mrf.mxu0
      %v1687 = vadd.f32 %v1574, %v1686
      %1688 = vmatmul.f32.gmra.mxu0 %v605
      %v1689 = vpop.f32.mrf.mxu0
      %v1690 = vadd.f32 %v1577, %v1689
      %1691 = vmatmul.f32.gmra.mxu0 %v606
      %v1692 = vpop.f32.mrf.mxu0
      %v1693 = vadd.f32 %v1580, %v1692
      %1694 = vmatmul.f32.gmra.mxu0 %v607
      %v1695 = vpop.f32.mrf.mxu0
      %v1696 = vadd.f32 %v1583, %v1695
      %1697 = vmatmul.f32.gmra.mxu0 %v608
      %v1698 = vpop.f32.mrf.mxu0
      %v1699 = vadd.f32 %v1586, %v1698
      %1700 = vmatmul.f32.gmra.mxu0 %v609
      %v1701 = vpop.f32.mrf.mxu0
      %v1702 = vadd.f32 %v1589, %v1701
      %1703 = vmatmul.f32.gmra.mxu0 %v610
      %v1704 = vpop.f32.mrf.mxu0
      %v1705 = vadd.f32 %v1592, %v1704
      %1706 = vmatmul.f32.gmra.mxu0 %v611
      %v1707 = vpop.f32.mrf.mxu0
      %v1708 = vadd.f32 %v1595, %v1707
      %1709 = vmatmul.f32.gmra.mxu0 %v612
      %v1710 = vpop.f32.mrf.mxu0
      %v1711 = vadd.f32 %v1598, %v1710
      %1712 = vdwg.mxu0
      %s1713 = scalar_lea.vmem %s5, 768
      %v1714 = vld [vmem:[%s1713] sm:$0xff]
      %v1715 = vld [vmem:[%s1713 + $0x8] sm:$0xff]
      %v1716 = vld [vmem:[%s1713 + $0x10] sm:$0xff]
      %v1717 = vld [vmem:[%s1713 + $0x18] sm:$0xff]
      %v1718 = vld [vmem:[%s1713 + $0x20] sm:$0xff]
      %v1719 = vld [vmem:[%s1713 + $0x28] sm:$0xff]
      %v1720 = vld [vmem:[%s1713 + $0x30] sm:$0xff]
      %v1721 = vld [vmem:[%s1713 + $0x38] sm:$0xff]
      %v1722 = vld [vmem:[%s1713 + $0x40] sm:$0xff]
      %v1723 = vld [vmem:[%s1713 + $0x48] sm:$0xff]
      %v1724 = vld [vmem:[%s1713 + $0x50] sm:$0xff]
      %v1725 = vld [vmem:[%s1713 + $0x58] sm:$0xff]
      %v1726 = vld [vmem:[%s1713 + $0x60] sm:$0xff]
      %v1727 = vld [vmem:[%s1713 + $0x68] sm:$0xff]
      %v1728 = vld [vmem:[%s1713 + $0x70] sm:$0xff]
      %v1729 = vld [vmem:[%s1713 + $0x78] sm:$0xff]
      %1730 = vmatpush.msra.mxu0 %v1729
      %1731 = vmatpush.msra.mxu0 %v1728
      %1732 = vmatpush.msra.mxu0 %v1727
      %1733 = vmatpush.msra.mxu0 %v1726
      %1734 = vmatpush.msra.mxu0 %v1725
      %1735 = vmatpush.msra.mxu0 %v1724
      %1736 = vmatpush.msra.mxu0 %v1723
      %1737 = vmatpush.msra.mxu0 %v1722
      %1738 = vmatpush.msra.mxu0 %v1721
      %1739 = vmatpush.msra.mxu0 %v1720
      %1740 = vmatpush.msra.mxu0 %v1719
      %1741 = vmatpush.msra.mxu0 %v1718
      %1742 = vmatpush.msra.mxu0 %v1717
      %1743 = vmatpush.msra.mxu0 %v1716
      %1744 = vmatpush.msra.mxu0 %v1715
      %1745 = vmatpush.msra.mxu0 %v1714
      %1746 = vmatmul.f32.gmra.mxu0 %v585
      %v1747 = vpop.f32.mrf.mxu0
      %v1748 = vadd.f32 0.0, %v1747
      %1749 = vmatmul.f32.gmra.mxu0 %v586
      %v1750 = vpop.f32.mrf.mxu0
      %v1751 = vadd.f32 0.0, %v1750
      %1752 = vmatmul.f32.gmra.mxu0 %v587
      %v1753 = vpop.f32.mrf.mxu0
      %v1754 = vadd.f32 0.0, %v1753
      %1755 = vmatmul.f32.gmra.mxu0 %v588
      %v1756 = vpop.f32.mrf.mxu0
      %v1757 = vadd.f32 0.0, %v1756
      %1758 = vmatmul.f32.gmra.mxu0 %v589
      %v1759 = vpop.f32.mrf.mxu0
      %v1760 = vadd.f32 0.0, %v1759
      %1761 = vmatmul.f32.gmra.mxu0 %v590
      %v1762 = vpop.f32.mrf.mxu0
      %v1763 = vadd.f32 0.0, %v1762
      %1764 = vmatmul.f32.gmra.mxu0 %v591
      %v1765 = vpop.f32.mrf.mxu0
      %v1766 = vadd.f32 0.0, %v1765
      %1767 = vmatmul.f32.gmra.mxu0 %v592
      %v1768 = vpop.f32.mrf.mxu0
      %v1769 = vadd.f32 0.0, %v1768
      %1770 = vmatmul.f32.gmra.mxu0 %v593
      %v1771 = vpop.f32.mrf.mxu0
      %v1772 = vadd.f32 0.0, %v1771
      %1773 = vmatmul.f32.gmra.mxu0 %v594
      %v1774 = vpop.f32.mrf.mxu0
      %v1775 = vadd.f32 0.0, %v1774
      %1776 = vmatmul.f32.gmra.mxu0 %v595
      %v1777 = vpop.f32.mrf.mxu0
      %v1778 = vadd.f32 0.0, %v1777
      %1779 = vmatmul.f32.gmra.mxu0 %v596
      %v1780 = vpop.f32.mrf.mxu0
      %v1781 = vadd.f32 0.0, %v1780
      %1782 = vmatmul.f32.gmra.mxu0 %v597
      %v1783 = vpop.f32.mrf.mxu0
      %v1784 = vadd.f32 0.0, %v1783
      %1785 = vmatmul.f32.gmra.mxu0 %v598
      %v1786 = vpop.f32.mrf.mxu0
      %v1787 = vadd.f32 0.0, %v1786
      %1788 = vmatmul.f32.gmra.mxu0 %v599
      %v1789 = vpop.f32.mrf.mxu0
      %v1790 = vadd.f32 0.0, %v1789
      %1791 = vmatmul.f32.gmra.mxu0 %v600
      %v1792 = vpop.f32.mrf.mxu0
      %v1793 = vadd.f32 0.0, %v1792
      %1794 = vmatmul.f32.gmra.mxu0 %v601
      %v1795 = vpop.f32.mrf.mxu0
      %v1796 = vadd.f32 0.0, %v1795
      %1797 = vmatmul.f32.gmra.mxu0 %v602
      %v1798 = vpop.f32.mrf.mxu0
      %v1799 = vadd.f32 0.0, %v1798
      %1800 = vmatmul.f32.gmra.mxu0 %v603
      %v1801 = vpop.f32.mrf.mxu0
      %v1802 = vadd.f32 0.0, %v1801
      %1803 = vmatmul.f32.gmra.mxu0 %v604
      %v1804 = vpop.f32.mrf.mxu0
      %v1805 = vadd.f32 0.0, %v1804
      %1806 = vmatmul.f32.gmra.mxu0 %v605
      %v1807 = vpop.f32.mrf.mxu0
      %v1808 = vadd.f32 0.0, %v1807
      %1809 = vmatmul.f32.gmra.mxu0 %v606
      %v1810 = vpop.f32.mrf.mxu0
      %v1811 = vadd.f32 0.0, %v1810
      %1812 = vmatmul.f32.gmra.mxu0 %v607
      %v1813 = vpop.f32.mrf.mxu0
      %v1814 = vadd.f32 0.0, %v1813
      %1815 = vmatmul.f32.gmra.mxu0 %v608
      %v1816 = vpop.f32.mrf.mxu0
      %v1817 = vadd.f32 0.0, %v1816
      %1818 = vmatmul.f32.gmra.mxu0 %v609
      %v1819 = vpop.f32.mrf.mxu0
      %v1820 = vadd.f32 0.0, %v1819
      %1821 = vmatmul.f32.gmra.mxu0 %v610
      %v1822 = vpop.f32.mrf.mxu0
      %v1823 = vadd.f32 0.0, %v1822
      %1824 = vmatmul.f32.gmra.mxu0 %v611
      %v1825 = vpop.f32.mrf.mxu0
      %v1826 = vadd.f32 0.0, %v1825
      %1827 = vmatmul.f32.gmra.mxu0 %v612
      %v1828 = vpop.f32.mrf.mxu0
      %v1829 = vadd.f32 0.0, %v1828
      %1830 = vmatmul.f32.gmra.mxu0 %v613
      %v1831 = vpop.f32.mrf.mxu0
      %v1832 = vadd.f32 0.0, %v1831
      %1833 = vmatmul.f32.gmra.mxu0 %v614
      %v1834 = vpop.f32.mrf.mxu0
      %v1835 = vadd.f32 0.0, %v1834
      %1836 = vmatmul.f32.gmra.mxu0 %v485
      %v1837 = vpop.f32.mrf.mxu0
      %v1838 = vadd.f32 0.0, %v1837
      %1839 = vmatmul.f32.gmra.mxu0 %v486
      %v1840 = vpop.f32.mrf.mxu0
      %v1841 = vadd.f32 0.0, %v1840
      %1842 = vdwg.mxu0
      %v1843 = vadd.f32 %v1618, %v1748
      %v1844 = vadd.f32 %v1621, %v1751
      %v1845 = vadd.f32 %v1624, %v1754
      %v1846 = vadd.f32 %v1627, %v1757
      %v1847 = vadd.f32 %v1630, %v1760
      %v1848 = vadd.f32 %v1633, %v1763
      %v1849 = vadd.f32 %v1636, %v1766
      %v1850 = vadd.f32 %v1639, %v1769
      %v1851 = vadd.f32 %v1642, %v1772
      %v1852 = vadd.f32 %v1645, %v1775
      %v1853 = vadd.f32 %v1648, %v1778
      %v1854 = vadd.f32 %v1651, %v1781
      %v1855 = vadd.f32 %v1654, %v1784
      %v1856 = vadd.f32 %v1657, %v1787
      %v1857 = vadd.f32 %v1660, %v1790
      %v1858 = vadd.f32 %v1663, %v1793
      %v1859 = vadd.f32 %v1666, %v1796
      %v1860 = vadd.f32 %v1669, %v1799
      %v1861 = vadd.f32 %v1672, %v1802
      %v1862 = vadd.f32 %v1675, %v1805
      %v1863 = vadd.f32 %v1678, %v1808
      %v1864 = vadd.f32 %v1681, %v1811
      %v1865 = vadd.f32 %v1684, %v1814
      %v1866 = vadd.f32 %v1687, %v1817
      %v1867 = vadd.f32 %v1690, %v1820
      %v1868 = vadd.f32 %v1693, %v1823
      %v1869 = vadd.f32 %v1696, %v1826
      %v1870 = vadd.f32 %v1699, %v1829
      %v1871 = vadd.f32 %v1702, %v1832
      %v1872 = vadd.f32 %v1705, %v1835
      %v1873 = vadd.f32 %v1708, %v1838
      %v1874 = vadd.f32 %v1711, %v1841
      %vm1907 = vcmask 1040384
      %v1908 = vrot.slane %v1843, 7
      %v1909 = vrot.slane %v1844, 7
      %v1910 = vsel %vm1907, %v1908, %v1909
      %v1911 = vrot.slane %v1845, 7
      %v1912 = vsel %vm1907, %v1909, %v1911
      %v1913 = vrot.slane %v1846, 7
      %v1914 = vsel %vm1907, %v1911, %v1913
      %v1915 = vrot.slane %v1847, 7
      %v1916 = vsel %vm1907, %v1913, %v1915
      %v1917 = vrot.slane %v1848, 7
      %v1918 = vsel %vm1907, %v1915, %v1917
      %v1919 = vrot.slane %v1849, 7
      %v1920 = vsel %vm1907, %v1917, %v1919
      %v1921 = vrot.slane %v1850, 7
      %v1922 = vsel %vm1907, %v1919, %v1921
      %v1923 = vrot.slane %v1851, 7
      %v1924 = vsel %vm1907, %v1921, %v1923
      %v1925 = vrot.slane %v1852, 7
      %v1926 = vsel %vm1907, %v1923, %v1925
      %v1927 = vrot.slane %v1853, 7
      %v1928 = vsel %vm1907, %v1925, %v1927
      %v1929 = vrot.slane %v1854, 7
      %v1930 = vsel %vm1907, %v1927, %v1929
      %v1931 = vrot.slane %v1855, 7
      %v1932 = vsel %vm1907, %v1929, %v1931
      %v1933 = vrot.slane %v1856, 7
      %v1934 = vsel %vm1907, %v1931, %v1933
      %v1935 = vrot.slane %v1857, 7
      %v1936 = vsel %vm1907, %v1933, %v1935
      %v1937 = vrot.slane %v1858, 7
      %v1938 = vsel %vm1907, %v1935, %v1937
      %v1939 = vrot.slane %v1859, 7
      %v1940 = vsel %vm1907, %v1937, %v1939
      %v1941 = vrot.slane %v1860, 7
      %v1942 = vsel %vm1907, %v1939, %v1941
      %v1943 = vrot.slane %v1861, 7
      %v1944 = vsel %vm1907, %v1941, %v1943
      %v1945 = vrot.slane %v1862, 7
      %v1946 = vsel %vm1907, %v1943, %v1945
      %v1947 = vrot.slane %v1863, 7
      %v1948 = vsel %vm1907, %v1945, %v1947
      %v1949 = vrot.slane %v1864, 7
      %v1950 = vsel %vm1907, %v1947, %v1949
      %v1951 = vrot.slane %v1865, 7
      %v1952 = vsel %vm1907, %v1949, %v1951
      %v1953 = vrot.slane %v1866, 7
      %v1954 = vsel %vm1907, %v1951, %v1953
      %v1955 = vrot.slane %v1867, 7
      %v1956 = vsel %vm1907, %v1953, %v1955
      %v1957 = vrot.slane %v1868, 7
      %v1958 = vsel %vm1907, %v1955, %v1957
      %v1959 = vrot.slane %v1869, 7
      %v1960 = vsel %vm1907, %v1957, %v1959
      %v1961 = vrot.slane %v1870, 7
      %v1962 = vsel %vm1907, %v1959, %v1961
      %v1963 = vrot.slane %v1871, 7
      %v1964 = vsel %vm1907, %v1961, %v1963
      %v1965 = vrot.slane %v1872, 7
      %v1966 = vsel %vm1907, %v1963, %v1965
      %v1967 = vrot.slane %v1873, 7
      %v1968 = vsel %vm1907, %v1965, %v1967
      %v1969 = vrot.slane %v1874, 7
      %v1970 = vsel %vm1907, %v1967, %v1969
      %v2003 = vsel %vm1907, 0.0, %v1908
      %vm2004 = vcmp.ne.s32.totalorder %v1000, 0
      %vm2005 = vcmp.ne.s32.totalorder %v1001, 0
      %vm2006 = vcmp.ne.s32.totalorder %v1002, 0
      %vm2007 = vcmp.ne.s32.totalorder %v1003, 0
      %vm2008 = vcmp.ne.s32.totalorder %v1004, 0
      %vm2009 = vcmp.ne.s32.totalorder %v1005, 0
      %vm2010 = vcmp.ne.s32.totalorder %v1006, 0
      %vm2011 = vcmp.ne.s32.totalorder %v1007, 0
      %vm2012 = vcmp.ne.s32.totalorder %v1008, 0
      %vm2013 = vcmp.ne.s32.totalorder %v1009, 0
      %vm2014 = vcmp.ne.s32.totalorder %v1010, 0
      %vm2015 = vcmp.ne.s32.totalorder %v1011, 0
      %vm2016 = vcmp.ne.s32.totalorder %v1012, 0
      %vm2017 = vcmp.ne.s32.totalorder %v1013, 0
      %vm2018 = vcmp.ne.s32.totalorder %v1014, 0
      %vm2019 = vcmp.ne.s32.totalorder %v1015, 0
      %vm2020 = vcmp.ne.s32.totalorder %v1016, 0
      %vm2021 = vcmp.ne.s32.totalorder %v1017, 0
      %vm2022 = vcmp.ne.s32.totalorder %v1018, 0
      %vm2023 = vcmp.ne.s32.totalorder %v1019, 0
      %vm2024 = vcmp.ne.s32.totalorder %v1020, 0
      %vm2025 = vcmp.ne.s32.totalorder %v1021, 0
      %vm2026 = vcmp.ne.s32.totalorder %v1022, 0
      %vm2027 = vcmp.ne.s32.totalorder %v1023, 0
      %vm2028 = vcmp.ne.s32.totalorder %v1024, 0
      %vm2029 = vcmp.ne.s32.totalorder %v1025, 0
      %vm2030 = vcmp.ne.s32.totalorder %v1026, 0
      %vm2031 = vcmp.ne.s32.totalorder %v1027, 0
      %vm2032 = vcmp.ne.s32.totalorder %v1028, 0
      %vm2033 = vcmp.ne.s32.totalorder %v1029, 0
      %vm2034 = vcmp.ne.s32.totalorder %v1030, 0
      %vm2035 = vcmp.ne.s32.totalorder %v1031, 0
      %v2036 = vsel %vm2004, 1, 0
      %v2037 = vsel %vm2005, 1, 0
      %v2038 = vsel %vm2006, 1, 0
      %v2039 = vsel %vm2007, 1, 0
      %v2040 = vsel %vm2008, 1, 0
      %v2041 = vsel %vm2009, 1, 0
      %v2042 = vsel %vm2010, 1, 0
      %v2043 = vsel %vm2011, 1, 0
      %v2044 = vsel %vm2012, 1, 0
      %v2045 = vsel %vm2013, 1, 0
      %v2046 = vsel %vm2014, 1, 0
      %v2047 = vsel %vm2015, 1, 0
      %v2048 = vsel %vm2016, 1, 0
      %v2049 = vsel %vm2017, 1, 0
      %v2050 = vsel %vm2018, 1, 0
      %v2051 = vsel %vm2019, 1, 0
      %v2052 = vsel %vm2020, 1, 0
      %v2053 = vsel %vm2021, 1, 0
      %v2054 = vsel %vm2022, 1, 0
      %v2055 = vsel %vm2023, 1, 0
      %v2056 = vsel %vm2024, 1, 0
      %v2057 = vsel %vm2025, 1, 0
      %v2058 = vsel %vm2026, 1, 0
      %v2059 = vsel %vm2027, 1, 0
      %v2060 = vsel %vm2028, 1, 0
      %v2061 = vsel %vm2029, 1, 0
      %v2062 = vsel %vm2030, 1, 0
      %v2063 = vsel %vm2031, 1, 0
      %v2064 = vsel %vm2032, 1, 0
      %v2065 = vsel %vm2033, 1, 0
      %v2066 = vsel %vm2034, 1, 0
      %v2067 = vsel %vm2035, 1, 0
      %vm2068 = vcmp.eq.s32.totalorder %v2036, 1
      %vm2069 = vcmp.eq.s32.totalorder %v2037, 1
      %vm2070 = vcmp.eq.s32.totalorder %v2038, 1
      %vm2071 = vcmp.eq.s32.totalorder %v2039, 1
      %vm2072 = vcmp.eq.s32.totalorder %v2040, 1
      %vm2073 = vcmp.eq.s32.totalorder %v2041, 1
      %vm2074 = vcmp.eq.s32.totalorder %v2042, 1
      %vm2075 = vcmp.eq.s32.totalorder %v2043, 1
      %vm2076 = vcmp.eq.s32.totalorder %v2044, 1
      %vm2077 = vcmp.eq.s32.totalorder %v2045, 1
      %vm2078 = vcmp.eq.s32.totalorder %v2046, 1
      %vm2079 = vcmp.eq.s32.totalorder %v2047, 1
      %vm2080 = vcmp.eq.s32.totalorder %v2048, 1
      %vm2081 = vcmp.eq.s32.totalorder %v2049, 1
      %vm2082 = vcmp.eq.s32.totalorder %v2050, 1
      %vm2083 = vcmp.eq.s32.totalorder %v2051, 1
      %vm2084 = vcmp.eq.s32.totalorder %v2052, 1
      %vm2085 = vcmp.eq.s32.totalorder %v2053, 1
      %vm2086 = vcmp.eq.s32.totalorder %v2054, 1
      %vm2087 = vcmp.eq.s32.totalorder %v2055, 1
      %vm2088 = vcmp.eq.s32.totalorder %v2056, 1
      %vm2089 = vcmp.eq.s32.totalorder %v2057, 1
      %vm2090 = vcmp.eq.s32.totalorder %v2058, 1
      %vm2091 = vcmp.eq.s32.totalorder %v2059, 1
      %vm2092 = vcmp.eq.s32.totalorder %v2060, 1
      %vm2093 = vcmp.eq.s32.totalorder %v2061, 1
      %vm2094 = vcmp.eq.s32.totalorder %v2062, 1
      %vm2095 = vcmp.eq.s32.totalorder %v2063, 1
      %vm2096 = vcmp.eq.s32.totalorder %v2064, 1
      %vm2097 = vcmp.eq.s32.totalorder %v2065, 1
      %vm2098 = vcmp.eq.s32.totalorder %v2066, 1
      %vm2099 = vcmp.eq.s32.totalorder %v2067, 1
      %v2100 = vsel %vm2068, %v2003, 0.0
      %v2101 = vsel %vm2069, %v1910, 0.0
      %v2102 = vsel %vm2070, %v1912, 0.0
      %v2103 = vsel %vm2071, %v1914, 0.0
      %v2104 = vsel %vm2072, %v1916, 0.0
      %v2105 = vsel %vm2073, %v1918, 0.0
      %v2106 = vsel %vm2074, %v1920, 0.0
      %v2107 = vsel %vm2075, %v1922, 0.0
      %v2108 = vsel %vm2076, %v1924, 0.0
      %v2109 = vsel %vm2077, %v1926, 0.0
      %v2110 = vsel %vm2078, %v1928, 0.0
      %v2111 = vsel %vm2079, %v1930, 0.0
      %v2112 = vsel %vm2080, %v1932, 0.0
      %v2113 = vsel %vm2081, %v1934, 0.0
      %v2114 = vsel %vm2082, %v1936, 0.0
      %v2115 = vsel %vm2083, %v1938, 0.0
      %v2116 = vsel %vm2084, %v1940, 0.0
      %v2117 = vsel %vm2085, %v1942, 0.0
      %v2118 = vsel %vm2086, %v1944, 0.0
      %v2119 = vsel %vm2087, %v1946, 0.0
      %v2120 = vsel %vm2088, %v1948, 0.0
      %v2121 = vsel %vm2089, %v1950, 0.0
      %v2122 = vsel %vm2090, %v1952, 0.0
      %v2123 = vsel %vm2091, %v1954, 0.0
      %v2124 = vsel %vm2092, %v1956, 0.0
      %v2125 = vsel %vm2093, %v1958, 0.0
      %v2126 = vsel %vm2094, %v1960, 0.0
      %v2127 = vsel %vm2095, %v1962, 0.0
      %v2128 = vsel %vm2096, %v1964, 0.0
      %v2129 = vsel %vm2097, %v1966, 0.0
      %v2130 = vsel %vm2098, %v1968, 0.0
      %v2131 = vsel %vm2099, %v1970, 0.0
      %v2132 = vadd.f32 %v1422, %v2100
      %v2133 = vadd.f32 %v1423, %v2101
      %v2134 = vadd.f32 %v1424, %v2102
      %v2135 = vadd.f32 %v1425, %v2103
      %v2136 = vadd.f32 %v1426, %v2104
      %v2137 = vadd.f32 %v1427, %v2105
      %v2138 = vadd.f32 %v1428, %v2106
      %v2139 = vadd.f32 %v1429, %v2107
      %v2140 = vadd.f32 %v1430, %v2108
      %v2141 = vadd.f32 %v1431, %v2109
      %v2142 = vadd.f32 %v1432, %v2110
      %v2143 = vadd.f32 %v1433, %v2111
      %v2144 = vadd.f32 %v1434, %v2112
      %v2145 = vadd.f32 %v1435, %v2113
      %v2146 = vadd.f32 %v1436, %v2114
      %v2147 = vadd.f32 %v1437, %v2115
      %v2148 = vadd.f32 %v1438, %v2116
      %v2149 = vadd.f32 %v1439, %v2117
      %v2150 = vadd.f32 %v1440, %v2118
      %v2151 = vadd.f32 %v1441, %v2119
      %v2152 = vadd.f32 %v1442, %v2120
      %v2153 = vadd.f32 %v1443, %v2121
      %v2154 = vadd.f32 %v1444, %v2122
      %v2155 = vadd.f32 %v1445, %v2123
      %v2156 = vadd.f32 %v1446, %v2124
      %v2157 = vadd.f32 %v1447, %v2125
      %v2158 = vadd.f32 %v1448, %v2126
      %v2159 = vadd.f32 %v1449, %v2127
      %v2160 = vadd.f32 %v1450, %v2128
      %v2161 = vadd.f32 %v1451, %v2129
      %v2162 = vadd.f32 %v1452, %v2130
      %v2163 = vadd.f32 %v1453, %v2131
      %s2164 = scalar_lea.vmem %s5, 256
      %v2165 = vld [vmem:[%s2164] sm:$0xff]
      %v2166 = vld [vmem:[%s2164 + $0x8] sm:$0xff]
      %v2167 = vld [vmem:[%s2164 + $0x10] sm:$0xff]
      %v2168 = vld [vmem:[%s2164 + $0x18] sm:$0xff]
      %v2169 = vld [vmem:[%s2164 + $0x20] sm:$0xff]
      %v2170 = vld [vmem:[%s2164 + $0x28] sm:$0xff]
      %v2171 = vld [vmem:[%s2164 + $0x30] sm:$0xff]
      %v2172 = vld [vmem:[%s2164 + $0x38] sm:$0xff]
      %v2173 = vld [vmem:[%s2164 + $0x40] sm:$0xff]
      %v2174 = vld [vmem:[%s2164 + $0x48] sm:$0xff]
      %v2175 = vld [vmem:[%s2164 + $0x50] sm:$0xff]
      %v2176 = vld [vmem:[%s2164 + $0x58] sm:$0xff]
      %v2177 = vld [vmem:[%s2164 + $0x60] sm:$0xff]
      %v2178 = vld [vmem:[%s2164 + $0x68] sm:$0xff]
      %v2179 = vld [vmem:[%s2164 + $0x70] sm:$0xff]
      %v2180 = vld [vmem:[%s2164 + $0x78] sm:$0xff]
      %s2181 = scalar_lea.vmem %s5, 640
      %v2182 = vld [vmem:[%s2181] sm:$0xff]
      %v2183 = vld [vmem:[%s2181 + $0x8] sm:$0xff]
      %v2184 = vld [vmem:[%s2181 + $0x10] sm:$0xff]
      %v2185 = vld [vmem:[%s2181 + $0x18] sm:$0xff]
      %v2186 = vld [vmem:[%s2181 + $0x20] sm:$0xff]
      %v2187 = vld [vmem:[%s2181 + $0x28] sm:$0xff]
      %v2188 = vld [vmem:[%s2181 + $0x30] sm:$0xff]
      %v2189 = vld [vmem:[%s2181 + $0x38] sm:$0xff]
      %v2190 = vld [vmem:[%s2181 + $0x40] sm:$0xff]
      %v2191 = vld [vmem:[%s2181 + $0x48] sm:$0xff]
      %v2192 = vld [vmem:[%s2181 + $0x50] sm:$0xff]
      %v2193 = vld [vmem:[%s2181 + $0x58] sm:$0xff]
      %v2194 = vld [vmem:[%s2181 + $0x60] sm:$0xff]
      %v2195 = vld [vmem:[%s2181 + $0x68] sm:$0xff]
      %v2196 = vld [vmem:[%s2181 + $0x70] sm:$0xff]
      %v2197 = vld [vmem:[%s2181 + $0x78] sm:$0xff]
      %2198 = vmatpush.msra.mxu0 %v2197
      %2199 = vmatpush.msra.mxu0 %v2196
      %2200 = vmatpush.msra.mxu0 %v2195
      %2201 = vmatpush.msra.mxu0 %v2194
      %2202 = vmatpush.msra.mxu0 %v2193
      %2203 = vmatpush.msra.mxu0 %v2192
      %2204 = vmatpush.msra.mxu0 %v2191
      %2205 = vmatpush.msra.mxu0 %v2190
      %2206 = vmatpush.msra.mxu0 %v2189
      %2207 = vmatpush.msra.mxu0 %v2188
      %2208 = vmatpush.msra.mxu0 %v2187
      %2209 = vmatpush.msra.mxu0 %v2186
      %2210 = vmatpush.msra.mxu0 %v2185
      %2211 = vmatpush.msra.mxu0 %v2184
      %2212 = vmatpush.msra.mxu0 %v2183
      %2213 = vmatpush.msra.mxu0 %v2182
      %2214 = vmatmul.f32.gmra.mxu0 %v583
      %v2215 = vpop.f32.mrf.mxu0
      %v2216 = vadd.f32 0.0, %v2215
      %2217 = vmatmul.f32.gmra.mxu0 %v584
      %v2218 = vpop.f32.mrf.mxu0
      %v2219 = vadd.f32 0.0, %v2218
      %2220 = vmatmul.f32.gmra.mxu0 %v585
      %v2221 = vpop.f32.mrf.mxu0
      %v2222 = vadd.f32 0.0, %v2221
      %2223 = vmatmul.f32.gmra.mxu0 %v586
      %v2224 = vpop.f32.mrf.mxu0
      %v2225 = vadd.f32 0.0, %v2224
      %2226 = vmatmul.f32.gmra.mxu0 %v587
      %v2227 = vpop.f32.mrf.mxu0
      %v2228 = vadd.f32 0.0, %v2227
      %2229 = vmatmul.f32.gmra.mxu0 %v588
      %v2230 = vpop.f32.mrf.mxu0
      %v2231 = vadd.f32 0.0, %v2230
      %2232 = vmatmul.f32.gmra.mxu0 %v589
      %v2233 = vpop.f32.mrf.mxu0
      %v2234 = vadd.f32 0.0, %v2233
      %2235 = vmatmul.f32.gmra.mxu0 %v590
      %v2236 = vpop.f32.mrf.mxu0
      %v2237 = vadd.f32 0.0, %v2236
      %2238 = vmatmul.f32.gmra.mxu0 %v591
      %v2239 = vpop.f32.mrf.mxu0
      %v2240 = vadd.f32 0.0, %v2239
      %2241 = vmatmul.f32.gmra.mxu0 %v592
      %v2242 = vpop.f32.mrf.mxu0
      %v2243 = vadd.f32 0.0, %v2242
      %2244 = vmatmul.f32.gmra.mxu0 %v593
      %v2245 = vpop.f32.mrf.mxu0
      %v2246 = vadd.f32 0.0, %v2245
      %2247 = vmatmul.f32.gmra.mxu0 %v594
      %v2248 = vpop.f32.mrf.mxu0
      %v2249 = vadd.f32 0.0, %v2248
      %2250 = vmatmul.f32.gmra.mxu0 %v595
      %v2251 = vpop.f32.mrf.mxu0
      %v2252 = vadd.f32 0.0, %v2251
      %2253 = vmatmul.f32.gmra.mxu0 %v596
      %v2254 = vpop.f32.mrf.mxu0
      %v2255 = vadd.f32 0.0, %v2254
      %2256 = vmatmul.f32.gmra.mxu0 %v597
      %v2257 = vpop.f32.mrf.mxu0
      %v2258 = vadd.f32 0.0, %v2257
      %2259 = vmatmul.f32.gmra.mxu0 %v598
      %v2260 = vpop.f32.mrf.mxu0
      %v2261 = vadd.f32 0.0, %v2260
      %2262 = vmatmul.f32.gmra.mxu0 %v599
      %v2263 = vpop.f32.mrf.mxu0
      %v2264 = vadd.f32 0.0, %v2263
      %2265 = vmatmul.f32.gmra.mxu0 %v600
      %v2266 = vpop.f32.mrf.mxu0
      %v2267 = vadd.f32 0.0, %v2266
      %2268 = vmatmul.f32.gmra.mxu0 %v601
      %v2269 = vpop.f32.mrf.mxu0
      %v2270 = vadd.f32 0.0, %v2269
      %2271 = vmatmul.f32.gmra.mxu0 %v602
      %v2272 = vpop.f32.mrf.mxu0
      %v2273 = vadd.f32 0.0, %v2272
      %2274 = vmatmul.f32.gmra.mxu0 %v603
      %v2275 = vpop.f32.mrf.mxu0
      %v2276 = vadd.f32 0.0, %v2275
      %2277 = vmatmul.f32.gmra.mxu0 %v604
      %v2278 = vpop.f32.mrf.mxu0
      %v2279 = vadd.f32 0.0, %v2278
      %2280 = vmatmul.f32.gmra.mxu0 %v605
      %v2281 = vpop.f32.mrf.mxu0
      %v2282 = vadd.f32 0.0, %v2281
      %2283 = vmatmul.f32.gmra.mxu0 %v606
      %v2284 = vpop.f32.mrf.mxu0
      %v2285 = vadd.f32 0.0, %v2284
      %2286 = vmatmul.f32.gmra.mxu0 %v607
      %v2287 = vpop.f32.mrf.mxu0
      %v2288 = vadd.f32 0.0, %v2287
      %2289 = vmatmul.f32.gmra.mxu0 %v608
      %v2290 = vpop.f32.mrf.mxu0
      %v2291 = vadd.f32 0.0, %v2290
      %2292 = vmatmul.f32.gmra.mxu0 %v609
      %v2293 = vpop.f32.mrf.mxu0
      %v2294 = vadd.f32 0.0, %v2293
      %2295 = vmatmul.f32.gmra.mxu0 %v610
      %v2296 = vpop.f32.mrf.mxu0
      %v2297 = vadd.f32 0.0, %v2296
      %2298 = vmatmul.f32.gmra.mxu0 %v611
      %v2299 = vpop.f32.mrf.mxu0
      %v2300 = vadd.f32 0.0, %v2299
      %2301 = vmatmul.f32.gmra.mxu0 %v612
      %v2302 = vpop.f32.mrf.mxu0
      %v2303 = vadd.f32 0.0, %v2302
      %2304 = vmatmul.f32.gmra.mxu0 %v613
      %v2305 = vpop.f32.mrf.mxu0
      %v2306 = vadd.f32 0.0, %v2305
      %2307 = vmatmul.f32.gmra.mxu0 %v614
      %v2308 = vpop.f32.mrf.mxu0
      %v2309 = vadd.f32 0.0, %v2308
      %2310 = vdwg.mxu0
      %2311 = vmatpush.msra.mxu0 %v2180
      %2312 = vmatpush.msra.mxu0 %v2179
      %2313 = vmatpush.msra.mxu0 %v2178
      %2314 = vmatpush.msra.mxu0 %v2177
      %2315 = vmatpush.msra.mxu0 %v2176
      %2316 = vmatpush.msra.mxu0 %v2175
      %2317 = vmatpush.msra.mxu0 %v2174
      %2318 = vmatpush.msra.mxu0 %v2173
      %2319 = vmatpush.msra.mxu0 %v2172
      %2320 = vmatpush.msra.mxu0 %v2171
      %2321 = vmatpush.msra.mxu0 %v2170
      %2322 = vmatpush.msra.mxu0 %v2169
      %2323 = vmatpush.msra.mxu0 %v2168
      %2324 = vmatpush.msra.mxu0 %v2167
      %2325 = vmatpush.msra.mxu0 %v2166
      %2326 = vmatpush.msra.mxu0 %v2165
      %2327 = vmatmul.f32.gmra.mxu0 %v471
      %v2328 = vpop.f32.mrf.mxu0
      %v2329 = vadd.f32 %v2216, %v2328
      %2330 = vmatmul.f32.gmra.mxu0 %v472
      %v2331 = vpop.f32.mrf.mxu0
      %v2332 = vadd.f32 %v2219, %v2331
      %2333 = vmatmul.f32.gmra.mxu0 %v583
      %v2334 = vpop.f32.mrf.mxu0
      %v2335 = vadd.f32 %v2222, %v2334
      %2336 = vmatmul.f32.gmra.mxu0 %v584
      %v2337 = vpop.f32.mrf.mxu0
      %v2338 = vadd.f32 %v2225, %v2337
      %2339 = vmatmul.f32.gmra.mxu0 %v585
      %v2340 = vpop.f32.mrf.mxu0
      %v2341 = vadd.f32 %v2228, %v2340
      %2342 = vmatmul.f32.gmra.mxu0 %v586
      %v2343 = vpop.f32.mrf.mxu0
      %v2344 = vadd.f32 %v2231, %v2343
      %2345 = vmatmul.f32.gmra.mxu0 %v587
      %v2346 = vpop.f32.mrf.mxu0
      %v2347 = vadd.f32 %v2234, %v2346
      %2348 = vmatmul.f32.gmra.mxu0 %v588
      %v2349 = vpop.f32.mrf.mxu0
      %v2350 = vadd.f32 %v2237, %v2349
      %2351 = vmatmul.f32.gmra.mxu0 %v589
      %v2352 = vpop.f32.mrf.mxu0
      %v2353 = vadd.f32 %v2240, %v2352
      %2354 = vmatmul.f32.gmra.mxu0 %v590
      %v2355 = vpop.f32.mrf.mxu0
      %v2356 = vadd.f32 %v2243, %v2355
      %2357 = vmatmul.f32.gmra.mxu0 %v591
      %v2358 = vpop.f32.mrf.mxu0
      %v2359 = vadd.f32 %v2246, %v2358
      %2360 = vmatmul.f32.gmra.mxu0 %v592
      %v2361 = vpop.f32.mrf.mxu0
      %v2362 = vadd.f32 %v2249, %v2361
      %2363 = vmatmul.f32.gmra.mxu0 %v593
      %v2364 = vpop.f32.mrf.mxu0
      %v2365 = vadd.f32 %v2252, %v2364
      %2366 = vmatmul.f32.gmra.mxu0 %v594
      %v2367 = vpop.f32.mrf.mxu0
      %v2368 = vadd.f32 %v2255, %v2367
      %2369 = vmatmul.f32.gmra.mxu0 %v595
      %v2370 = vpop.f32.mrf.mxu0
      %v2371 = vadd.f32 %v2258, %v2370
      %2372 = vmatmul.f32.gmra.mxu0 %v596
      %v2373 = vpop.f32.mrf.mxu0
      %v2374 = vadd.f32 %v2261, %v2373
      %2375 = vmatmul.f32.gmra.mxu0 %v597
      %v2376 = vpop.f32.mrf.mxu0
      %v2377 = vadd.f32 %v2264, %v2376
      %2378 = vmatmul.f32.gmra.mxu0 %v598
      %v2379 = vpop.f32.mrf.mxu0
      %v2380 = vadd.f32 %v2267, %v2379
      %2381 = vmatmul.f32.gmra.mxu0 %v599
      %v2382 = vpop.f32.mrf.mxu0
      %v2383 = vadd.f32 %v2270, %v2382
      %2384 = vmatmul.f32.gmra.mxu0 %v600
      %v2385 = vpop.f32.mrf.mxu0
      %v2386 = vadd.f32 %v2273, %v2385
      %2387 = vmatmul.f32.gmra.mxu0 %v601
      %v2388 = vpop.f32.mrf.mxu0
      %v2389 = vadd.f32 %v2276, %v2388
      %2390 = vmatmul.f32.gmra.mxu0 %v602
      %v2391 = vpop.f32.mrf.mxu0
      %v2392 = vadd.f32 %v2279, %v2391
      %2393 = vmatmul.f32.gmra.mxu0 %v603
      %v2394 = vpop.f32.mrf.mxu0
      %v2395 = vadd.f32 %v2282, %v2394
      %2396 = vmatmul.f32.gmra.mxu0 %v604
      %v2397 = vpop.f32.mrf.mxu0
      %v2398 = vadd.f32 %v2285, %v2397
      %2399 = vmatmul.f32.gmra.mxu0 %v605
      %v2400 = vpop.f32.mrf.mxu0
      %v2401 = vadd.f32 %v2288, %v2400
      %2402 = vmatmul.f32.gmra.mxu0 %v606
      %v2403 = vpop.f32.mrf.mxu0
      %v2404 = vadd.f32 %v2291, %v2403
      %2405 = vmatmul.f32.gmra.mxu0 %v607
      %v2406 = vpop.f32.mrf.mxu0
      %v2407 = vadd.f32 %v2294, %v2406
      %2408 = vmatmul.f32.gmra.mxu0 %v608
      %v2409 = vpop.f32.mrf.mxu0
      %v2410 = vadd.f32 %v2297, %v2409
      %2411 = vmatmul.f32.gmra.mxu0 %v609
      %v2412 = vpop.f32.mrf.mxu0
      %v2413 = vadd.f32 %v2300, %v2412
      %2414 = vmatmul.f32.gmra.mxu0 %v610
      %v2415 = vpop.f32.mrf.mxu0
      %v2416 = vadd.f32 %v2303, %v2415
      %2417 = vmatmul.f32.gmra.mxu0 %v611
      %v2418 = vpop.f32.mrf.mxu0
      %v2419 = vadd.f32 %v2306, %v2418
      %2420 = vmatmul.f32.gmra.mxu0 %v612
      %v2421 = vpop.f32.mrf.mxu0
      %v2422 = vadd.f32 %v2309, %v2421
      %2423 = vdwg.mxu0
      %s2424 = scalar_lea.vmem %s5, 1024
      %v2425 = vld [vmem:[%s2424] sm:$0xff]
      %v2426 = vld [vmem:[%s2424 + $0x8] sm:$0xff]
      %v2427 = vld [vmem:[%s2424 + $0x10] sm:$0xff]
      %v2428 = vld [vmem:[%s2424 + $0x18] sm:$0xff]
      %v2429 = vld [vmem:[%s2424 + $0x20] sm:$0xff]
      %v2430 = vld [vmem:[%s2424 + $0x28] sm:$0xff]
      %v2431 = vld [vmem:[%s2424 + $0x30] sm:$0xff]
      %v2432 = vld [vmem:[%s2424 + $0x38] sm:$0xff]
      %v2433 = vld [vmem:[%s2424 + $0x40] sm:$0xff]
      %v2434 = vld [vmem:[%s2424 + $0x48] sm:$0xff]
      %v2435 = vld [vmem:[%s2424 + $0x50] sm:$0xff]
      %v2436 = vld [vmem:[%s2424 + $0x58] sm:$0xff]
      %v2437 = vld [vmem:[%s2424 + $0x60] sm:$0xff]
      %v2438 = vld [vmem:[%s2424 + $0x68] sm:$0xff]
      %v2439 = vld [vmem:[%s2424 + $0x70] sm:$0xff]
      %v2440 = vld [vmem:[%s2424 + $0x78] sm:$0xff]
      %2441 = vmatpush.msra.mxu0 %v2440
      %2442 = vmatpush.msra.mxu0 %v2439
      %2443 = vmatpush.msra.mxu0 %v2438
      %2444 = vmatpush.msra.mxu0 %v2437
      %2445 = vmatpush.msra.mxu0 %v2436
      %2446 = vmatpush.msra.mxu0 %v2435
      %2447 = vmatpush.msra.mxu0 %v2434
      %2448 = vmatpush.msra.mxu0 %v2433
      %2449 = vmatpush.msra.mxu0 %v2432
      %2450 = vmatpush.msra.mxu0 %v2431
      %2451 = vmatpush.msra.mxu0 %v2430
      %2452 = vmatpush.msra.mxu0 %v2429
      %2453 = vmatpush.msra.mxu0 %v2428
      %2454 = vmatpush.msra.mxu0 %v2427
      %2455 = vmatpush.msra.mxu0 %v2426
      %2456 = vmatpush.msra.mxu0 %v2425
      %2457 = vmatmul.f32.gmra.mxu0 %v585
      %v2458 = vpop.f32.mrf.mxu0
      %v2459 = vadd.f32 0.0, %v2458
      %2460 = vmatmul.f32.gmra.mxu0 %v586
      %v2461 = vpop.f32.mrf.mxu0
      %v2462 = vadd.f32 0.0, %v2461
      %2463 = vmatmul.f32.gmra.mxu0 %v587
      %v2464 = vpop.f32.mrf.mxu0
      %v2465 = vadd.f32 0.0, %v2464
      %2466 = vmatmul.f32.gmra.mxu0 %v588
      %v2467 = vpop.f32.mrf.mxu0
      %v2468 = vadd.f32 0.0, %v2467
      %2469 = vmatmul.f32.gmra.mxu0 %v589
      %v2470 = vpop.f32.mrf.mxu0
      %v2471 = vadd.f32 0.0, %v2470
      %2472 = vmatmul.f32.gmra.mxu0 %v590
      %v2473 = vpop.f32.mrf.mxu0
      %v2474 = vadd.f32 0.0, %v2473
      %2475 = vmatmul.f32.gmra.mxu0 %v591
      %v2476 = vpop.f32.mrf.mxu0
      %v2477 = vadd.f32 0.0, %v2476
      %2478 = vmatmul.f32.gmra.mxu0 %v592
      %v2479 = vpop.f32.mrf.mxu0
      %v2480 = vadd.f32 0.0, %v2479
      %2481 = vmatmul.f32.gmra.mxu0 %v593
      %v2482 = vpop.f32.mrf.mxu0
      %v2483 = vadd.f32 0.0, %v2482
      %2484 = vmatmul.f32.gmra.mxu0 %v594
      %v2485 = vpop.f32.mrf.mxu0
      %v2486 = vadd.f32 0.0, %v2485
      %2487 = vmatmul.f32.gmra.mxu0 %v595
      %v2488 = vpop.f32.mrf.mxu0
      %v2489 = vadd.f32 0.0, %v2488
      %2490 = vmatmul.f32.gmra.mxu0 %v596
      %v2491 = vpop.f32.mrf.mxu0
      %v2492 = vadd.f32 0.0, %v2491
      %2493 = vmatmul.f32.gmra.mxu0 %v597
      %v2494 = vpop.f32.mrf.mxu0
      %v2495 = vadd.f32 0.0, %v2494
      %2496 = vmatmul.f32.gmra.mxu0 %v598
      %v2497 = vpop.f32.mrf.mxu0
      %v2498 = vadd.f32 0.0, %v2497
      %2499 = vmatmul.f32.gmra.mxu0 %v599
      %v2500 = vpop.f32.mrf.mxu0
      %v2501 = vadd.f32 0.0, %v2500
      %2502 = vmatmul.f32.gmra.mxu0 %v600
      %v2503 = vpop.f32.mrf.mxu0
      %v2504 = vadd.f32 0.0, %v2503
      %2505 = vmatmul.f32.gmra.mxu0 %v601
      %v2506 = vpop.f32.mrf.mxu0
      %v2507 = vadd.f32 0.0, %v2506
      %2508 = vmatmul.f32.gmra.mxu0 %v602
      %v2509 = vpop.f32.mrf.mxu0
      %v2510 = vadd.f32 0.0, %v2509
      %2511 = vmatmul.f32.gmra.mxu0 %v603
      %v2512 = vpop.f32.mrf.mxu0
      %v2513 = vadd.f32 0.0, %v2512
      %2514 = vmatmul.f32.gmra.mxu0 %v604
      %v2515 = vpop.f32.mrf.mxu0
      %v2516 = vadd.f32 0.0, %v2515
      %2517 = vmatmul.f32.gmra.mxu0 %v605
      %v2518 = vpop.f32.mrf.mxu0
      %v2519 = vadd.f32 0.0, %v2518
      %2520 = vmatmul.f32.gmra.mxu0 %v606
      %v2521 = vpop.f32.mrf.mxu0
      %v2522 = vadd.f32 0.0, %v2521
      %2523 = vmatmul.f32.gmra.mxu0 %v607
      %v2524 = vpop.f32.mrf.mxu0
      %v2525 = vadd.f32 0.0, %v2524
      %2526 = vmatmul.f32.gmra.mxu0 %v608
      %v2527 = vpop.f32.mrf.mxu0
      %v2528 = vadd.f32 0.0, %v2527
      %2529 = vmatmul.f32.gmra.mxu0 %v609
      %v2530 = vpop.f32.mrf.mxu0
      %v2531 = vadd.f32 0.0, %v2530
      %2532 = vmatmul.f32.gmra.mxu0 %v610
      %v2533 = vpop.f32.mrf.mxu0
      %v2534 = vadd.f32 0.0, %v2533
      %2535 = vmatmul.f32.gmra.mxu0 %v611
      %v2536 = vpop.f32.mrf.mxu0
      %v2537 = vadd.f32 0.0, %v2536
      %2538 = vmatmul.f32.gmra.mxu0 %v612
      %v2539 = vpop.f32.mrf.mxu0
      %v2540 = vadd.f32 0.0, %v2539
      %2541 = vmatmul.f32.gmra.mxu0 %v613
      %v2542 = vpop.f32.mrf.mxu0
      %v2543 = vadd.f32 0.0, %v2542
      %2544 = vmatmul.f32.gmra.mxu0 %v614
      %v2545 = vpop.f32.mrf.mxu0
      %v2546 = vadd.f32 0.0, %v2545
      %2547 = vmatmul.f32.gmra.mxu0 %v485
      %v2548 = vpop.f32.mrf.mxu0
      %v2549 = vadd.f32 0.0, %v2548
      %2550 = vmatmul.f32.gmra.mxu0 %v486
      %v2551 = vpop.f32.mrf.mxu0
      %v2552 = vadd.f32 0.0, %v2551
      %2553 = vdwg.mxu0
      %v2554 = vadd.f32 %v2329, %v2459
      %v2555 = vadd.f32 %v2332, %v2462
      %v2556 = vadd.f32 %v2335, %v2465
      %v2557 = vadd.f32 %v2338, %v2468
      %v2558 = vadd.f32 %v2341, %v2471
      %v2559 = vadd.f32 %v2344, %v2474
      %v2560 = vadd.f32 %v2347, %v2477
      %v2561 = vadd.f32 %v2350, %v2480
      %v2562 = vadd.f32 %v2353, %v2483
      %v2563 = vadd.f32 %v2356, %v2486
      %v2564 = vadd.f32 %v2359, %v2489
      %v2565 = vadd.f32 %v2362, %v2492
      %v2566 = vadd.f32 %v2365, %v2495
      %v2567 = vadd.f32 %v2368, %v2498
      %v2568 = vadd.f32 %v2371, %v2501
      %v2569 = vadd.f32 %v2374, %v2504
      %v2570 = vadd.f32 %v2377, %v2507
      %v2571 = vadd.f32 %v2380, %v2510
      %v2572 = vadd.f32 %v2383, %v2513
      %v2573 = vadd.f32 %v2386, %v2516
      %v2574 = vadd.f32 %v2389, %v2519
      %v2575 = vadd.f32 %v2392, %v2522
      %v2576 = vadd.f32 %v2395, %v2525
      %v2577 = vadd.f32 %v2398, %v2528
      %v2578 = vadd.f32 %v2401, %v2531
      %v2579 = vadd.f32 %v2404, %v2534
      %v2580 = vadd.f32 %v2407, %v2537
      %v2581 = vadd.f32 %v2410, %v2540
      %v2582 = vadd.f32 %v2413, %v2543
      %v2583 = vadd.f32 %v2416, %v2546
      %v2584 = vadd.f32 %v2419, %v2549
      %v2585 = vadd.f32 %v2422, %v2552
      %vm2618 = vcmask 1046528
      %v2619 = vrot.slane %v2554, 1
      %v2620 = vrot.slane %v2555, 1
      %v2621 = vsel %vm2618, %v2619, %v2620
      %v2622 = vrot.slane %v2556, 1
      %v2623 = vsel %vm2618, %v2620, %v2622
      %v2624 = vrot.slane %v2557, 1
      %v2625 = vsel %vm2618, %v2622, %v2624
      %v2626 = vrot.slane %v2558, 1
      %v2627 = vsel %vm2618, %v2624, %v2626
      %v2628 = vrot.slane %v2559, 1
      %v2629 = vsel %vm2618, %v2626, %v2628
      %v2630 = vrot.slane %v2560, 1
      %v2631 = vsel %vm2618, %v2628, %v2630
      %v2632 = vrot.slane %v2561, 1
      %v2633 = vsel %vm2618, %v2630, %v2632
      %v2634 = vrot.slane %v2562, 1
      %v2635 = vsel %vm2618, %v2632, %v2634
      %v2636 = vrot.slane %v2563, 1
      %v2637 = vsel %vm2618, %v2634, %v2636
      %v2638 = vrot.slane %v2564, 1
      %v2639 = vsel %vm2618, %v2636, %v2638
      %v2640 = vrot.slane %v2565, 1
      %v2641 = vsel %vm2618, %v2638, %v2640
      %v2642 = vrot.slane %v2566, 1
      %v2643 = vsel %vm2618, %v2640, %v2642
      %v2644 = vrot.slane %v2567, 1
      %v2645 = vsel %vm2618, %v2642, %v2644
      %v2646 = vrot.slane %v2568, 1
      %v2647 = vsel %vm2618, %v2644, %v2646
      %v2648 = vrot.slane %v2569, 1
      %v2649 = vsel %vm2618, %v2646, %v2648
      %v2650 = vrot.slane %v2570, 1
      %v2651 = vsel %vm2618, %v2648, %v2650
      %v2652 = vrot.slane %v2571, 1
      %v2653 = vsel %vm2618, %v2650, %v2652
      %v2654 = vrot.slane %v2572, 1
      %v2655 = vsel %vm2618, %v2652, %v2654
      %v2656 = vrot.slane %v2573, 1
      %v2657 = vsel %vm2618, %v2654, %v2656
      %v2658 = vrot.slane %v2574, 1
      %v2659 = vsel %vm2618, %v2656, %v2658
      %v2660 = vrot.slane %v2575, 1
      %v2661 = vsel %vm2618, %v2658, %v2660
      %v2662 = vrot.slane %v2576, 1
      %v2663 = vsel %vm2618, %v2660, %v2662
      %v2664 = vrot.slane %v2577, 1
      %v2665 = vsel %vm2618, %v2662, %v2664
      %v2666 = vrot.slane %v2578, 1
      %v2667 = vsel %vm2618, %v2664, %v2666
      %v2668 = vrot.slane %v2579, 1
      %v2669 = vsel %vm2618, %v2666, %v2668
      %v2670 = vrot.slane %v2580, 1
      %v2671 = vsel %vm2618, %v2668, %v2670
      %v2672 = vrot.slane %v2581, 1
      %v2673 = vsel %vm2618, %v2670, %v2672
      %v2674 = vrot.slane %v2582, 1
      %v2675 = vsel %vm2618, %v2672, %v2674
      %v2676 = vrot.slane %v2583, 1
      %v2677 = vsel %vm2618, %v2674, %v2676
      %v2678 = vrot.slane %v2584, 1
      %v2679 = vsel %vm2618, %v2676, %v2678
      %v2680 = vrot.slane %v2585, 1
      %v2681 = vsel %vm2618, %v2678, %v2680
      %v2714 = vsel %vm2618, %v2680, 0.0
      %vm2715 = vcmp.ne.s32.totalorder %v1000, 15
      %vm2716 = vcmp.ne.s32.totalorder %v1001, 15
      %vm2717 = vcmp.ne.s32.totalorder %v1002, 15
      %vm2718 = vcmp.ne.s32.totalorder %v1003, 15
      %vm2719 = vcmp.ne.s32.totalorder %v1004, 15
      %vm2720 = vcmp.ne.s32.totalorder %v1005, 15
      %vm2721 = vcmp.ne.s32.totalorder %v1006, 15
      %vm2722 = vcmp.ne.s32.totalorder %v1007, 15
      %vm2723 = vcmp.ne.s32.totalorder %v1008, 15
      %vm2724 = vcmp.ne.s32.totalorder %v1009, 15
      %vm2725 = vcmp.ne.s32.totalorder %v1010, 15
      %vm2726 = vcmp.ne.s32.totalorder %v1011, 15
      %vm2727 = vcmp.ne.s32.totalorder %v1012, 15
      %vm2728 = vcmp.ne.s32.totalorder %v1013, 15
      %vm2729 = vcmp.ne.s32.totalorder %v1014, 15
      %vm2730 = vcmp.ne.s32.totalorder %v1015, 15
      %vm2731 = vcmp.ne.s32.totalorder %v1016, 15
      %vm2732 = vcmp.ne.s32.totalorder %v1017, 15
      %vm2733 = vcmp.ne.s32.totalorder %v1018, 15
      %vm2734 = vcmp.ne.s32.totalorder %v1019, 15
      %vm2735 = vcmp.ne.s32.totalorder %v1020, 15
      %vm2736 = vcmp.ne.s32.totalorder %v1021, 15
      %vm2737 = vcmp.ne.s32.totalorder %v1022, 15
      %vm2738 = vcmp.ne.s32.totalorder %v1023, 15
      %vm2739 = vcmp.ne.s32.totalorder %v1024, 15
      %vm2740 = vcmp.ne.s32.totalorder %v1025, 15
      %vm2741 = vcmp.ne.s32.totalorder %v1026, 15
      %vm2742 = vcmp.ne.s32.totalorder %v1027, 15
      %vm2743 = vcmp.ne.s32.totalorder %v1028, 15
      %vm2744 = vcmp.ne.s32.totalorder %v1029, 15
      %vm2745 = vcmp.ne.s32.totalorder %v1030, 15
      %vm2746 = vcmp.ne.s32.totalorder %v1031, 15
      %v2747 = vsel %vm2715, 1, 0
      %v2748 = vsel %vm2716, 1, 0
      %v2749 = vsel %vm2717, 1, 0
      %v2750 = vsel %vm2718, 1, 0
      %v2751 = vsel %vm2719, 1, 0
      %v2752 = vsel %vm2720, 1, 0
      %v2753 = vsel %vm2721, 1, 0
      %v2754 = vsel %vm2722, 1, 0
      %v2755 = vsel %vm2723, 1, 0
      %v2756 = vsel %vm2724, 1, 0
      %v2757 = vsel %vm2725, 1, 0
      %v2758 = vsel %vm2726, 1, 0
      %v2759 = vsel %vm2727, 1, 0
      %v2760 = vsel %vm2728, 1, 0
      %v2761 = vsel %vm2729, 1, 0
      %v2762 = vsel %vm2730, 1, 0
      %v2763 = vsel %vm2731, 1, 0
      %v2764 = vsel %vm2732, 1, 0
      %v2765 = vsel %vm2733, 1, 0
      %v2766 = vsel %vm2734, 1, 0
      %v2767 = vsel %vm2735, 1, 0
      %v2768 = vsel %vm2736, 1, 0
      %v2769 = vsel %vm2737, 1, 0
      %v2770 = vsel %vm2738, 1, 0
      %v2771 = vsel %vm2739, 1, 0
      %v2772 = vsel %vm2740, 1, 0
      %v2773 = vsel %vm2741, 1, 0
      %v2774 = vsel %vm2742, 1, 0
      %v2775 = vsel %vm2743, 1, 0
      %v2776 = vsel %vm2744, 1, 0
      %v2777 = vsel %vm2745, 1, 0
      %v2778 = vsel %vm2746, 1, 0
      %vm2779 = vcmp.eq.s32.totalorder %v2747, 1
      %vm2780 = vcmp.eq.s32.totalorder %v2748, 1
      %vm2781 = vcmp.eq.s32.totalorder %v2749, 1
      %vm2782 = vcmp.eq.s32.totalorder %v2750, 1
      %vm2783 = vcmp.eq.s32.totalorder %v2751, 1
      %vm2784 = vcmp.eq.s32.totalorder %v2752, 1
      %vm2785 = vcmp.eq.s32.totalorder %v2753, 1
      %vm2786 = vcmp.eq.s32.totalorder %v2754, 1
      %vm2787 = vcmp.eq.s32.totalorder %v2755, 1
      %vm2788 = vcmp.eq.s32.totalorder %v2756, 1
      %vm2789 = vcmp.eq.s32.totalorder %v2757, 1
      %vm2790 = vcmp.eq.s32.totalorder %v2758, 1
      %vm2791 = vcmp.eq.s32.totalorder %v2759, 1
      %vm2792 = vcmp.eq.s32.totalorder %v2760, 1
      %vm2793 = vcmp.eq.s32.totalorder %v2761, 1
      %vm2794 = vcmp.eq.s32.totalorder %v2762, 1
      %vm2795 = vcmp.eq.s32.totalorder %v2763, 1
      %vm2796 = vcmp.eq.s32.totalorder %v2764, 1
      %vm2797 = vcmp.eq.s32.totalorder %v2765, 1
      %vm2798 = vcmp.eq.s32.totalorder %v2766, 1
      %vm2799 = vcmp.eq.s32.totalorder %v2767, 1
      %vm2800 = vcmp.eq.s32.totalorder %v2768, 1
      %vm2801 = vcmp.eq.s32.totalorder %v2769, 1
      %vm2802 = vcmp.eq.s32.totalorder %v2770, 1
      %vm2803 = vcmp.eq.s32.totalorder %v2771, 1
      %vm2804 = vcmp.eq.s32.totalorder %v2772, 1
      %vm2805 = vcmp.eq.s32.totalorder %v2773, 1
      %vm2806 = vcmp.eq.s32.totalorder %v2774, 1
      %vm2807 = vcmp.eq.s32.totalorder %v2775, 1
      %vm2808 = vcmp.eq.s32.totalorder %v2776, 1
      %vm2809 = vcmp.eq.s32.totalorder %v2777, 1
      %vm2810 = vcmp.eq.s32.totalorder %v2778, 1
      %v2811 = vsel %vm2779, %v2621, 0.0
      %v2812 = vsel %vm2780, %v2623, 0.0
      %v2813 = vsel %vm2781, %v2625, 0.0
      %v2814 = vsel %vm2782, %v2627, 0.0
      %v2815 = vsel %vm2783, %v2629, 0.0
      %v2816 = vsel %vm2784, %v2631, 0.0
      %v2817 = vsel %vm2785, %v2633, 0.0
      %v2818 = vsel %vm2786, %v2635, 0.0
      %v2819 = vsel %vm2787, %v2637, 0.0
      %v2820 = vsel %vm2788, %v2639, 0.0
      %v2821 = vsel %vm2789, %v2641, 0.0
      %v2822 = vsel %vm2790, %v2643, 0.0
      %v2823 = vsel %vm2791, %v2645, 0.0
      %v2824 = vsel %vm2792, %v2647, 0.0
      %v2825 = vsel %vm2793, %v2649, 0.0
      %v2826 = vsel %vm2794, %v2651, 0.0
      %v2827 = vsel %vm2795, %v2653, 0.0
      %v2828 = vsel %vm2796, %v2655, 0.0
      %v2829 = vsel %vm2797, %v2657, 0.0
      %v2830 = vsel %vm2798, %v2659, 0.0
      %v2831 = vsel %vm2799, %v2661, 0.0
      %v2832 = vsel %vm2800, %v2663, 0.0
      %v2833 = vsel %vm2801, %v2665, 0.0
      %v2834 = vsel %vm2802, %v2667, 0.0
      %v2835 = vsel %vm2803, %v2669, 0.0
      %v2836 = vsel %vm2804, %v2671, 0.0
      %v2837 = vsel %vm2805, %v2673, 0.0
      %v2838 = vsel %vm2806, %v2675, 0.0
      %v2839 = vsel %vm2807, %v2677, 0.0
      %v2840 = vsel %vm2808, %v2679, 0.0
      %v2841 = vsel %vm2809, %v2681, 0.0
      %v2842 = vsel %vm2810, %v2714, 0.0
      %v2843 = vadd.f32 %v2132, %v2811
      %v2844 = vadd.f32 %v2133, %v2812
      %v2845 = vadd.f32 %v2134, %v2813
      %v2846 = vadd.f32 %v2135, %v2814
      %v2847 = vadd.f32 %v2136, %v2815
      %v2848 = vadd.f32 %v2137, %v2816
      %v2849 = vadd.f32 %v2138, %v2817
      %v2850 = vadd.f32 %v2139, %v2818
      %v2851 = vadd.f32 %v2140, %v2819
      %v2852 = vadd.f32 %v2141, %v2820
      %v2853 = vadd.f32 %v2142, %v2821
      %v2854 = vadd.f32 %v2143, %v2822
      %v2855 = vadd.f32 %v2144, %v2823
      %v2856 = vadd.f32 %v2145, %v2824
      %v2857 = vadd.f32 %v2146, %v2825
      %v2858 = vadd.f32 %v2147, %v2826
      %v2859 = vadd.f32 %v2148, %v2827
      %v2860 = vadd.f32 %v2149, %v2828
      %v2861 = vadd.f32 %v2150, %v2829
      %v2862 = vadd.f32 %v2151, %v2830
      %v2863 = vadd.f32 %v2152, %v2831
      %v2864 = vadd.f32 %v2153, %v2832
      %v2865 = vadd.f32 %v2154, %v2833
      %v2866 = vadd.f32 %v2155, %v2834
      %v2867 = vadd.f32 %v2156, %v2835
      %v2868 = vadd.f32 %v2157, %v2836
      %v2869 = vadd.f32 %v2158, %v2837
      %v2870 = vadd.f32 %v2159, %v2838
      %v2871 = vadd.f32 %v2160, %v2839
      %v2872 = vadd.f32 %v2161, %v2840
      %v2873 = vadd.f32 %v2162, %v2841
      %v2874 = vadd.f32 %v2163, %v2842
      %2875 = vst [vmem:[%s442] sm:$0xff] %v2843
      %2876 = vst [vmem:[%s442 + $0x8] sm:$0xff] %v2844
      %2877 = vst [vmem:[%s442 + $0x10] sm:$0xff] %v2845
      %2878 = vst [vmem:[%s442 + $0x18] sm:$0xff] %v2846
      %2879 = vst [vmem:[%s442 + $0x20] sm:$0xff] %v2847
      %2880 = vst [vmem:[%s442 + $0x28] sm:$0xff] %v2848
      %2881 = vst [vmem:[%s442 + $0x30] sm:$0xff] %v2849
      %2882 = vst [vmem:[%s442 + $0x38] sm:$0xff] %v2850
      %2883 = vst [vmem:[%s442 + $0x40] sm:$0xff] %v2851
      %2884 = vst [vmem:[%s442 + $0x48] sm:$0xff] %v2852
      %2885 = vst [vmem:[%s442 + $0x50] sm:$0xff] %v2853
      %2886 = vst [vmem:[%s442 + $0x58] sm:$0xff] %v2854
      %2887 = vst [vmem:[%s442 + $0x60] sm:$0xff] %v2855
      %2888 = vst [vmem:[%s442 + $0x68] sm:$0xff] %v2856
      %2889 = vst [vmem:[%s442 + $0x70] sm:$0xff] %v2857
      %2890 = vst [vmem:[%s442 + $0x78] sm:$0xff] %v2858
      %2891 = vst [vmem:[%s442 + $0x80] sm:$0xff] %v2859
      %2892 = vst [vmem:[%s442 + $0x88] sm:$0xff] %v2860
      %2893 = vst [vmem:[%s442 + $0x90] sm:$0xff] %v2861
      %2894 = vst [vmem:[%s442 + $0x98] sm:$0xff] %v2862
      %2895 = vst [vmem:[%s442 + $0xa0] sm:$0xff] %v2863
      %2896 = vst [vmem:[%s442 + $0xa8] sm:$0xff] %v2864
      %2897 = vst [vmem:[%s442 + $0xb0] sm:$0xff] %v2865
      %2898 = vst [vmem:[%s442 + $0xb8] sm:$0xff] %v2866
      %2899 = vst [vmem:[%s442 + $0xc0] sm:$0xff] %v2867
      %2900 = vst [vmem:[%s442 + $0xc8] sm:$0xff] %v2868
      %2901 = vst [vmem:[%s442 + $0xd0] sm:$0xff] %v2869
      %2902 = vst [vmem:[%s442 + $0xd8] sm:$0xff] %v2870
      %2903 = vst [vmem:[%s442 + $0xe0] sm:$0xff] %v2871
      %2904 = vst [vmem:[%s442 + $0xe8] sm:$0xff] %v2872
      %2905 = vst [vmem:[%s442 + $0xf0] sm:$0xff] %v2873
      %2906 = vst [vmem:[%s442 + $0xf8] sm:$0xff] %v2874
      %v2907 = vadd.f32 %v2843, %v2844
      %v2908 = vadd.f32 %v2907, %v2845
      %v2909 = vadd.f32 %v2908, %v2846
      %v2910 = vadd.f32 %v2909, %v2847
      %v2911 = vadd.f32 %v2910, %v2848
      %v2912 = vadd.f32 %v2911, %v2849
      %v2913 = vadd.f32 %v2912, %v2850
      %v2914 = vadd.f32 %v2913, %v2851
      %v2915 = vadd.f32 %v2914, %v2852
      %v2916 = vadd.f32 %v2915, %v2853
      %v2917 = vadd.f32 %v2916, %v2854
      %v2918 = vadd.f32 %v2917, %v2855
      %v2919 = vadd.f32 %v2918, %v2856
      %v2920 = vadd.f32 %v2919, %v2857
      %v2921 = vadd.f32 %v2920, %v2858
      %v2922 = vadd.f32 %v2921, %v2859
      %v2923 = vadd.f32 %v2922, %v2860
      %v2924 = vadd.f32 %v2923, %v2861
      %v2925 = vadd.f32 %v2924, %v2862
      %v2926 = vadd.f32 %v2925, %v2863
      %v2927 = vadd.f32 %v2926, %v2864
      %v2928 = vadd.f32 %v2927, %v2865
      %v2929 = vadd.f32 %v2928, %v2866
      %v2930 = vadd.f32 %v2929, %v2867
      %v2931 = vadd.f32 %v2930, %v2868
      %v2932 = vadd.f32 %v2931, %v2869
      %v2933 = vadd.f32 %v2932, %v2870
      %v2934 = vadd.f32 %v2933, %v2871
      %v2935 = vadd.f32 %v2934, %v2872
      %v2936 = vadd.f32 %v2935, %v2873
      %v2937 = vadd.f32 %v2936, %v2874
      %v2938 = vrot.slane %v2937, 4
      %v2939 = vadd.f32 %v2937, %v2938
      %v2940 = vrot.slane %v2939, 2
      %v2941 = vadd.f32 %v2939, %v2940
      %v2942 = vrot.slane %v2941, 1
      %v2943 = vadd.f32 %v2941, %v2942
      %v2944 = vmul.f32 %v2843, %v2843
      %v2945 = vmul.f32 %v2844, %v2844
      %v2946 = vmul.f32 %v2845, %v2845
      %v2947 = vmul.f32 %v2846, %v2846
      %v2948 = vmul.f32 %v2847, %v2847
      %v2949 = vmul.f32 %v2848, %v2848
      %v2950 = vmul.f32 %v2849, %v2849
      %v2951 = vmul.f32 %v2850, %v2850
      %v2952 = vmul.f32 %v2851, %v2851
      %v2953 = vmul.f32 %v2852, %v2852
      %v2954 = vmul.f32 %v2853, %v2853
      %v2955 = vmul.f32 %v2854, %v2854
      %v2956 = vmul.f32 %v2855, %v2855
      %v2957 = vmul.f32 %v2856, %v2856
      %v2958 = vmul.f32 %v2857, %v2857
      %v2959 = vmul.f32 %v2858, %v2858
      %v2960 = vmul.f32 %v2859, %v2859
      %v2961 = vmul.f32 %v2860, %v2860
      %v2962 = vmul.f32 %v2861, %v2861
      %v2963 = vmul.f32 %v2862, %v2862
      %v2964 = vmul.f32 %v2863, %v2863
      %v2965 = vmul.f32 %v2864, %v2864
      %v2966 = vmul.f32 %v2865, %v2865
      %v2967 = vmul.f32 %v2866, %v2866
      %v2968 = vmul.f32 %v2867, %v2867
      %v2969 = vmul.f32 %v2868, %v2868
      %v2970 = vmul.f32 %v2869, %v2869
      %v2971 = vmul.f32 %v2870, %v2870
      %v2972 = vmul.f32 %v2871, %v2871
      %v2973 = vmul.f32 %v2872, %v2872
      %v2974 = vmul.f32 %v2873, %v2873
      %v2975 = vmul.f32 %v2874, %v2874
      %v2976 = vadd.f32 %v2944, %v2945
      %v2977 = vadd.f32 %v2976, %v2946
      %v2978 = vadd.f32 %v2977, %v2947
      %v2979 = vadd.f32 %v2978, %v2948
      %v2980 = vadd.f32 %v2979, %v2949
      %v2981 = vadd.f32 %v2980, %v2950
      %v2982 = vadd.f32 %v2981, %v2951
      %v2983 = vadd.f32 %v2982, %v2952
      %v2984 = vadd.f32 %v2983, %v2953
      %v2985 = vadd.f32 %v2984, %v2954
      %v2986 = vadd.f32 %v2985, %v2955
      %v2987 = vadd.f32 %v2986, %v2956
      %v2988 = vadd.f32 %v2987, %v2957
      %v2989 = vadd.f32 %v2988, %v2958
      %v2990 = vadd.f32 %v2989, %v2959
      %v2991 = vadd.f32 %v2990, %v2960
      %v2992 = vadd.f32 %v2991, %v2961
      %v2993 = vadd.f32 %v2992, %v2962
      %v2994 = vadd.f32 %v2993, %v2963
      %v2995 = vadd.f32 %v2994, %v2964
      %v2996 = vadd.f32 %v2995, %v2965
      %v2997 = vadd.f32 %v2996, %v2966
      %v2998 = vadd.f32 %v2997, %v2967
      %v2999 = vadd.f32 %v2998, %v2968
      %v3000 = vadd.f32 %v2999, %v2969
      %v3001 = vadd.f32 %v3000, %v2970
      %v3002 = vadd.f32 %v3001, %v2971
      %v3003 = vadd.f32 %v3002, %v2972
      %v3004 = vadd.f32 %v3003, %v2973
      %v3005 = vadd.f32 %v3004, %v2974
      %v3006 = vadd.f32 %v3005, %v2975
      %v3007 = vrot.slane %v3006, 4
      %v3008 = vadd.f32 %v3006, %v3007
      %v3009 = vrot.slane %v3008, 2
      %v3010 = vadd.f32 %v3008, %v3009
      %v3011 = vrot.slane %v3010, 1
      %v3012 = vadd.f32 %v3010, %v3011
      %v3013 = vsel %vm1907, %v2943, %v3012
      %3014 = vst [vmem:[%s449] sm:$0x3] %v3013
      %s3015 = sadd.s32 %s23, %s24
      %s3016 = smul.u32 16, %s3015
      %p3017 = scmp.lt.s32.totalorder %s3016, 31
      %s3018 = scalar_select %p3017, %s3016, 31
      %s3019 = smul.addr %s3018, 2
      %s3020 = smul.addr %s3019, 8
      %s3021 = scalar_lea.vmem %s6, %s3020
      %s3022 = sadd.s32 %s23, %s24
      %p3023 = scmp.lt.s32.totalorder %s3022, 1
      %s3024 = scalar_select %p3023, %s3022, 1
      %s3025 = smul.addr %s3024, 2
      %s3026 = scalar_lea.vmem %s7, %s3025
      // Predicated region
      $region45: #{bottleneck_forward.5} parent=43 // pred_check
        %p3027 = pneg %p218
      $region46: #{bottleneck_forward.5} parent=43 // pred_check_branch
        %3029 = sbr.rel (%p3027) target = $region48
      $region47: #{bottleneck_forward.5} parent=43 // pred_region
        %s3030 = sadd.s32 %s23, %s24
        %s3031 = smul.u32 16, %s3030
      $region48: #{bottleneck_forward.5} parent=43 // pred_fallthru
        _
      // Predicated region
      $region49: #{bottleneck_forward.5} parent=43 // pred_check
        %p3032 = pneg %p246
      $region50: #{bottleneck_forward.5} parent=43 // pred_check_branch
        %3034 = sbr.rel (%p3032) target = $region52
      $region51: #{bottleneck_forward.5} parent=43 // pred_region
        %s3035 = sadd.s32 %s23, %s24
      $region52: #{bottleneck_forward.5} parent=43 // pred_fallthru
        _
    $region44: #{bottleneck_forward.5} parent=5 // pred_fallthru
      _
    %p3036 = scmp.le.s32.totalorder 2, %s14
    // Predicated region
    $region53: #{bottleneck_forward.5} parent=5 // pred_check
      %p3037 = pneg %p3036
    $region54: #{bottleneck_forward.5} parent=5 // pred_check_branch
      %3039 = sbr.rel (%p3037) target = $region56
    $region55: #{bottleneck_forward.5} parent=5 // pred_region
      %s3040 = ssub.s32 %s14, 2
      // Predicated region
      $region57: #{bottleneck_forward.5} parent=55 // pred_check
        %p3041 = pneg %p224
      $region58: #{bottleneck_forward.5} parent=55 // pred_check_branch
        %3043 = sbr.rel (%p3041) target = $region60
      $region59: #{bottleneck_forward.5} parent=55 // pred_region
        %s3044 = sadd.s32 %s25, %s26
        %s3045 = smul.u32 16, %s3044
        %p3046 = scmp.lt.s32.totalorder %s3045, 31
        %s3047 = scalar_select %p3046, %s3045, 31
        %s3048 = smul.addr %s3047, 2
        %s3049 = smul.addr %s3048, 8
        %s3050 = scalar_lea.vmem %s6, %s3049
      $region60: #{bottleneck_forward.5} parent=55 // pred_fallthru
        _
      // Predicated region
      $region61: #{bottleneck_forward.5} parent=55 // pred_check
        %p3051 = pneg %p252
      $region62: #{bottleneck_forward.5} parent=55 // pred_check_branch
        %3053 = sbr.rel (%p3051) target = $region64
      $region63: #{bottleneck_forward.5} parent=55 // pred_region
        %s3054 = sadd.s32 %s25, %s26
        %p3055 = scmp.lt.s32.totalorder %s3054, 1
        %s3056 = scalar_select %p3055, %s3054, 1
        %s3057 = smul.addr %s3056, 2
        %s3058 = scalar_lea.vmem %s7, %s3057
      $region64: #{bottleneck_forward.5} parent=55 // pred_fallthru
        _
    $region56: #{bottleneck_forward.5} parent=5 // pred_fallthru
      _
  $region6: #{bottleneck_forward.5} parent=0 // loop_footer
    %s18 = sadd.s32 1, %s14
  $region7: #{bottleneck_forward.5} parent=0 // loop_footer_branch
    %13 = sbr.rel target = $region3
  $region8: #{bottleneck_forward.5} parent=0 // loop_exit
    _

</llo_original>
